<compile_context>
chip_gen: v7x
topology: tpu7x:2x2x1
jax: 0.10.0
libtpu: 0.0.40
codegen_flags: <defaults>
</compile_context>

<pallas_src>
import functools
import math

import numpy as np
import jax
import jax.numpy as jnp
from jax.experimental import pallas as pl
from jax.experimental.pallas import tpu as pltpu

A_CUBIC = -0.75  # PyTorch bicubic coefficient
SCALE = 7
KSIZE = 3


def _cubic1(t):
    return ((A_CUBIC + 2.0) * t - (A_CUBIC + 3.0)) * t * t + 1.0


def _cubic2(t):
    return ((A_CUBIC * t - 5.0 * A_CUBIC) * t + 8.0 * A_CUBIC) * t - 4.0 * A_CUBIC


def bicubic_matrix(in_size: int, scale: int) -> np.ndarray:
    """Dense (out, in) matrix reproducing nn.Upsample(scale_factor=scale,
    mode='bicubic', align_corners=False) along one axis (clamped borders)."""
    out_size = in_size * scale
    inv_scale = in_size / out_size
    m = np.zeros((out_size, in_size), dtype=np.float32)
    for i in range(out_size):
        src = (i + 0.5) * inv_scale - 0.5
        f = math.floor(src)
        t = src - f
        coeffs = (_cubic2(t + 1.0), _cubic1(t), _cubic1(1.0 - t), _cubic2(2.0 - t))
        for k in range(4):
            idx = min(max(f - 1 + k, 0), in_size - 1)
            m[i, idx] += coeffs[k]
    return m


def padded_interp_matrices(h: int, w: int, scale: int):
    """Interp matrices with built-in zero padding rows/cols so the upsampled
    plane comes out already zero-padded (for the 3x3 pad=1 conv)."""
    hu, wu = h * scale, w * scale
    mh = bicubic_matrix(h, scale)                       # (Hu, H)
    mw = bicubic_matrix(w, scale)                       # (Wu, W)
    mh_pad = np.zeros((hu + 2, h), dtype=np.float32)
    mh_pad[1:hu + 1, :] = mh                            # zero top/bottom border rows
    mwt_pad = np.zeros((w, wu + 2), dtype=np.float32)
    mwt_pad[:, 1:wu + 1] = mw.T                         # zero left/right border cols
    return mh_pad, mwt_pad


# ------------------------------- fused kernel -------------------------------

def _fused_kernel(xt_ref, mht_ref, a_ref, bcol_ref, lmat_ref, blin_ref, o_ref,
                  *, block_b, cw):
    # xt_ref:   (block_b*C*W, H)   VMEM  x transposed to (..,W,H) and flattened
    # mht_ref:  (3, H, Hu)         VMEM  ky-shifted H-interp matrices (transposed)
    # a_ref:    (3, F*Wu, C*W)     VMEM  conv weights folded with kx-shifted W-interp
    # bcol_ref: (F*Wu, 1)          VMEM  conv bias repeated per output column w
    # lmat_ref: (2, F*Wu)          VMEM  linear head folded with 1/(Hu*Wu) pooling
    # blin_ref: (2, 1)             VMEM
    # o_ref:    (block_b, 2, 1)    VMEM  logits
    xt = xt_ref[...]

    # H-direction bicubic interpolation for the 3 ky taps (transposed layout):
    #   g[ky][(i,c,b), h] = sum_a x[i,c,a,b] * Mh_pad[ky + h, a]
    g = [jnp.dot(xt, mht_ref[ky], preferred_element_type=jnp.float32)
         for ky in range(KSIZE)]                        # each (block_b*C*W, Hu)

    for i in range(block_b):
        lo = i * cw
        # Conv3x3(pad=1) on the bicubic-upsampled image as 3 accumulated MXU
        # matmuls:  o2[(f,w), h] = sum_{ky,c,b} A[ky,(f,w),(c,b)] * g[ky][(c,b),h]
        o2 = jnp.dot(a_ref[0], g[0][lo:lo + cw, :],
                     preferred_element_type=jnp.float32)
        o2 = o2 + jnp.dot(a_ref[1], g[1][lo:lo + cw, :],
                          preferred_element_type=jnp.float32)
        o2 = o2 + jnp.dot(a_ref[2], g[2][lo:lo + cw, :],
                          preferred_element_type=jnp.float32)    # (F*Wu, Hu)

        act = jnp.maximum(o2 + bcol_ref[...], 0.0)               # bias + ReLU

        # Global average pool + Linear(F, 2), folded into one matmul + reduce.
        red = jnp.dot(lmat_ref[...], act,
                      preferred_element_type=jnp.float32)        # (2, Hu)
        logits = jnp.sum(red, axis=1, keepdims=True) + blin_ref[...]   # (2, 1)
        o_ref[i] = logits                                        # single store


# ------------------------------- forward pass -------------------------------

def _pick_block_b(b: int) -> int:
    """Largest divisor of b that keeps >=2 grid steps and <=8 images/step."""
    cap = max(1, min(8, b // 2))
    for cand in range(cap, 0, -1):
        if b % cand == 0:
            return cand
    return 1


def forward(x, params, *, block_b=None):
    b, c, h, w = x.shape
    f = params["conv_w"].shape[0]
    hu, wu = h * SCALE, w * SCALE
    cw = c * w

    mh_pad, mwt_pad = padded_interp_matrices(h, w, SCALE)
    # ky-shifted H-interp (transposed) and kx-shifted W-interp slices (host-side).
    mht = jnp.asarray(np.stack([mh_pad[ky:ky + hu, :].T for ky in range(KSIZE)]))  # (3,H,Hu)
    mws = jnp.asarray(np.stack([mwt_pad[:, kx:kx + wu] for kx in range(KSIZE)]))   # (3,W,Wu)

    # Parameter-only folds (tiny, once per call, outside the kernel): fold the
    # frozen conv weights with the kx-shifted W-interp so conv+upsample become
    # plain aligned MXU matmuls inside the kernel.
    a_mat = jnp.einsum("fcyx,xbw->yfwcb", params["conv_w"], mws)
    a_mat = a_mat.reshape(KSIZE, f * wu, cw)                            # (3, F*Wu, C*W)
    bcol = jnp.repeat(params["conv_b"], wu)[:, None]                    # (F*Wu, 1)
    lmat = jnp.repeat(params["lin_w"], wu, axis=1) * (1.0 / (hu * wu))  # (2, F*Wu)
    blin = params["lin_b"][:, None]                                     # (2, 1)

    # Lane-friendly input layout: (B, C, H, W) -> (B*C*W, H); every kernel load
    # is then a tile-aligned 2-D block with no in-kernel reshapes.
    xt = jnp.transpose(x, (0, 1, 3, 2)).reshape(b * cw, h)

    if block_b is None:
        block_b = _pick_block_b(b)
    assert b % block_b == 0
    steps = b // block_b

    flops = (KSIZE * 2 * b * cw * h * hu          # H-interp matmuls
             + KSIZE * 2 * b * f * wu * cw * hu   # folded conv matmuls
             + 2 * b * 2 * f * wu * hu)           # pooled linear head
    bytes_accessed = 4 * (xt.size + mht.size + a_mat.size + bcol.size
                          + lmat.size + blin.size + b * 2)

    kernel = functools.partial(_fused_kernel, block_b=block_b, cw=cw)

    out = pl.pallas_call(
        kernel,
        out_shape=jax.ShapeDtypeStruct((b, 2, 1), jnp.float32),
        grid_spec=pltpu.PrefetchScalarGridSpec(
            num_scalar_prefetch=0,
            grid=(steps,),
            in_specs=[
                pl.BlockSpec((block_b * cw, h), lambda s: (s, 0)),       # per-step images
                pl.BlockSpec((KSIZE, h, hu), lambda s: (0, 0, 0)),       # Mh^T (resident)
                pl.BlockSpec((KSIZE, f * wu, cw), lambda s: (0, 0, 0)),  # folded conv (resident)
                pl.BlockSpec((f * wu, 1), lambda s: (0, 0)),             # conv bias column
                pl.BlockSpec((2, f * wu), lambda s: (0, 0)),             # pooled linear head
                pl.BlockSpec((2, 1), lambda s: (0, 0)),                  # linear bias
            ],
            out_specs=pl.BlockSpec((block_b, 2, 1), lambda s: (s, 0, 0)),
        ),
        compiler_params=pltpu.CompilerParams(
            dimension_semantics=("parallel",)),
        cost_estimate=pl.CostEstimate(
            flops=int(flops),
            transcendentals=0,
            bytes_accessed=int(bytes_accessed)),
    )(xt, mht, a_mat, bcol, lmat, blin)

    return out.reshape(b, 2)                        # (B, 2) logits


# --------------------------- numpy reference (f64) --------------------------

def _reference_forward(x, params, h, w):
    mh_pad, mwt_pad = padded_interp_matrices(h, w, SCALE)
    xn = np.asarray(x, np.float64)
    wc = np.asarray(params["conv_w"], np.float64)
    bc = np.asarray(params["conv_b"], np.float64)
    wl = np.asarray(params["lin_w"], np.float64)
    bl = np.asarray(params["lin_b"], np.float64)
    mh = mh_pad.astype(np.float64)
    mw = mwt_pad.astype(np.float64)
    hu, wu = h * SCALE, w * SCALE
    # bicubic x7 upsample with the conv's zero padding already applied
    up = np.einsum("pa,icab,bq->icpq", mh, xn, mw)        # (B, C, Hu+2, Wu+2)
    fch = wc.shape[0]
    out = np.zeros((xn.shape[0], fch, hu, wu))
    for ky in range(KSIZE):
        for kx in range(KSIZE):
            out += np.einsum("fc,ichw->ifhw", wc[:, :, ky, kx],
                             up[:, :, ky:ky + hu, kx:kx + wu])
    act = np.maximum(out + bc[None, :, None, None], 0.0)
    pooled = act.mean(axis=(2, 3))                        # (B, F) frozen features
    return pooled @ wl.T + bl[None, :]


def init_params(key, c=3, f=8):
    k1, k2, k3, k4 = jax.random.split(key, 4)
    return {
        "conv_w": 0.1 * jax.random.normal(k1, (f, c, 3, 3), jnp.float32),
        "conv_b": 0.1 * jax.random.normal(k2, (f,), jnp.float32),
        "lin_w":  0.1 * jax.random.normal(k3, (2, f), jnp.float32),
        "lin_b":  0.1 * jax.random.normal(k4, (2,), jnp.float32),
    }


if __name__ == "__main__":
    key = jax.random.PRNGKey(0)
    kx_, kp = jax.random.split(key)
    x = jax.random.normal(kx_, (2, 3, 16, 16), jnp.float32)   # NCHW, like PyTorch
    params = init_params(kp)

    out = jax.jit(forward)(x, params)
    out = jax.block_until_ready(out)
    assert out.shape == (2, 2)
    assert bool(jnp.all(jnp.isfinite(out)))

    ref = _reference_forward(np.asarray(x),
                             jax.tree_util.tree_map(np.asarray, params), 16, 16)
    np.testing.assert_allclose(np.asarray(out), ref, rtol=2e-2, atol=5e-3)
    print("KERNEL_OK")
</pallas_src>

<mosaic_0001>
module attributes {stable_mosaic.version = 11 : i64} {
  func.func @_fused_kernel(%arg0: i32, %arg1: memref<48x16xf32, #tpu.memory_space<vmem>>, %arg2: memref<3x16x112xf32, #tpu.memory_space<vmem>>, %arg3: memref<3x896x48xf32, #tpu.memory_space<vmem>>, %arg4: memref<896x1xf32, #tpu.memory_space<vmem>>, %arg5: memref<2x896xf32, #tpu.memory_space<vmem>>, %arg6: memref<2x1xf32, #tpu.memory_space<vmem>>, %arg7: memref<1x2x1xf32, #tpu.memory_space<vmem>>) attributes {dimension_semantics = [#tpu.dimension_semantics<parallel>], iteration_bounds = array<i64: 2>, scalar_prefetch = 0 : i64, scratch_operands = 0 : i64, tpu.core_type = #tpu.core_type<tc>, window_params = [{transform_indices = @transform_0, window_bounds = array<i64: 48, 16>}, {pipeline_mode = #tpu.pipeline_mode<synchronous>, transform_indices = @transform_1, window_bounds = array<i64: 3, 16, 112>}, {pipeline_mode = #tpu.pipeline_mode<synchronous>, transform_indices = @transform_2, window_bounds = array<i64: 3, 896, 48>}, {pipeline_mode = #tpu.pipeline_mode<synchronous>, transform_indices = @transform_3, window_bounds = array<i64: 896, 1>}, {pipeline_mode = #tpu.pipeline_mode<synchronous>, transform_indices = @transform_4, window_bounds = array<i64: 2, 896>}, {pipeline_mode = #tpu.pipeline_mode<synchronous>, transform_indices = @transform_5, window_bounds = array<i64: 2, 1>}, {transform_indices = @transform_6, window_bounds = array<i64: 1, 2, 1>}]} {
    %c0 = arith.constant 0 : index
    %c0_0 = arith.constant 0 : index
    %0 = vector.load %arg1[%c0, %c0_0] : memref<48x16xf32, #tpu.memory_space<vmem>>, vector<48x16xf32>
    %c0_1 = arith.constant 0 : index
    %c0_2 = arith.constant 0 : index
    %c0_3 = arith.constant 0 : index
    %1 = vector.load %arg2[%c0_1, %c0_2, %c0_3] : memref<3x16x112xf32, #tpu.memory_space<vmem>>, vector<1x16x112xf32>
    %2 = vector.shape_cast %1 : vector<1x16x112xf32> to vector<16x112xf32>
    %cst = arith.constant dense<0.000000e+00> : vector<48x112xf32>
    %3 = tpu.matmul %0, %2, %cst {dimension_numbers = #tpu.dot_dimension_numbers<[1], [0], [0], [1], [0, 0, 1, 1], [], []>} : vector<48x16xf32>, vector<16x112xf32>, vector<48x112xf32> -> vector<48x112xf32>
    %c1 = arith.constant 1 : index
    %c0_4 = arith.constant 0 : index
    %c0_5 = arith.constant 0 : index
    %4 = vector.load %arg2[%c1, %c0_4, %c0_5] : memref<3x16x112xf32, #tpu.memory_space<vmem>>, vector<1x16x112xf32>
    %5 = vector.shape_cast %4 : vector<1x16x112xf32> to vector<16x112xf32>
    %cst_6 = arith.constant dense<0.000000e+00> : vector<48x112xf32>
    %6 = tpu.matmul %0, %5, %cst_6 {dimension_numbers = #tpu.dot_dimension_numbers<[1], [0], [0], [1], [0, 0, 1, 1], [], []>} : vector<48x16xf32>, vector<16x112xf32>, vector<48x112xf32> -> vector<48x112xf32>
    %c2 = arith.constant 2 : index
    %c0_7 = arith.constant 0 : index
    %c0_8 = arith.constant 0 : index
    %7 = vector.load %arg2[%c2, %c0_7, %c0_8] : memref<3x16x112xf32, #tpu.memory_space<vmem>>, vector<1x16x112xf32>
    %8 = vector.shape_cast %7 : vector<1x16x112xf32> to vector<16x112xf32>
    %cst_9 = arith.constant dense<0.000000e+00> : vector<48x112xf32>
    %9 = tpu.matmul %0, %8, %cst_9 {dimension_numbers = #tpu.dot_dimension_numbers<[1], [0], [0], [1], [0, 0, 1, 1], [], []>} : vector<48x16xf32>, vector<16x112xf32>, vector<48x112xf32> -> vector<48x112xf32>
    %c0_10 = arith.constant 0 : index
    %c0_11 = arith.constant 0 : index
    %c0_12 = arith.constant 0 : index
    %10 = vector.load %arg3[%c0_10, %c0_11, %c0_12] : memref<3x896x48xf32, #tpu.memory_space<vmem>>, vector<1x896x48xf32>
    %11 = vector.shape_cast %10 : vector<1x896x48xf32> to vector<896x48xf32>
    %cst_13 = arith.constant dense<0.000000e+00> : vector<896x112xf32>
    %12 = tpu.matmul %11, %3, %cst_13 {dimension_numbers = #tpu.dot_dimension_numbers<[1], [0], [0], [1], [0, 0, 1, 1], [], []>} : vector<896x48xf32>, vector<48x112xf32>, vector<896x112xf32> -> vector<896x112xf32>
    %c1_14 = arith.constant 1 : index
    %c0_15 = arith.constant 0 : index
    %c0_16 = arith.constant 0 : index
    %13 = vector.load %arg3[%c1_14, %c0_15, %c0_16] : memref<3x896x48xf32, #tpu.memory_space<vmem>>, vector<1x896x48xf32>
    %14 = vector.shape_cast %13 : vector<1x896x48xf32> to vector<896x48xf32>
    %cst_17 = arith.constant dense<0.000000e+00> : vector<896x112xf32>
    %15 = tpu.matmul %14, %6, %cst_17 {dimension_numbers = #tpu.dot_dimension_numbers<[1], [0], [0], [1], [0, 0, 1, 1], [], []>} : vector<896x48xf32>, vector<48x112xf32>, vector<896x112xf32> -> vector<896x112xf32>
    %16 = arith.addf %12, %15 : vector<896x112xf32>
    %c2_18 = arith.constant 2 : index
    %c0_19 = arith.constant 0 : index
    %c0_20 = arith.constant 0 : index
    %17 = vector.load %arg3[%c2_18, %c0_19, %c0_20] : memref<3x896x48xf32, #tpu.memory_space<vmem>>, vector<1x896x48xf32>
    %18 = vector.shape_cast %17 : vector<1x896x48xf32> to vector<896x48xf32>
    %cst_21 = arith.constant dense<0.000000e+00> : vector<896x112xf32>
    %19 = tpu.matmul %18, %9, %cst_21 {dimension_numbers = #tpu.dot_dimension_numbers<[1], [0], [0], [1], [0, 0, 1, 1], [], []>} : vector<896x48xf32>, vector<48x112xf32>, vector<896x112xf32> -> vector<896x112xf32>
    %20 = arith.addf %16, %19 : vector<896x112xf32>
    %c0_22 = arith.constant 0 : index
    %c0_23 = arith.constant 0 : index
    %21 = vector.load %arg4[%c0_22, %c0_23] : memref<896x1xf32, #tpu.memory_space<vmem>>, vector<896x1xf32>
    %22 = vector.broadcast %21 : vector<896x1xf32> to vector<896x112xf32>
    %23 = arith.addf %20, %22 : vector<896x112xf32>
    %cst_24 = arith.constant 0.000000e+00 : f32
    %24 = vector.broadcast %cst_24 : f32 to vector<896x112xf32>
    %25 = arith.maximumf %23, %24 : vector<896x112xf32>
    %c0_25 = arith.constant 0 : index
    %c0_26 = arith.constant 0 : index
    %26 = vector.load %arg5[%c0_25, %c0_26] : memref<2x896xf32, #tpu.memory_space<vmem>>, vector<2x896xf32>
    %cst_27 = arith.constant dense<0.000000e+00> : vector<2x112xf32>
    %27 = tpu.matmul %26, %25, %cst_27 {dimension_numbers = #tpu.dot_dimension_numbers<[1], [0], [0], [1], [0, 0, 1, 1], [], []>} : vector<2x896xf32>, vector<896x112xf32>, vector<2x112xf32> -> vector<2x112xf32>
    %cst_28 = arith.constant dense<0.000000e+00> : vector<2xf32>
    %28 = vector.multi_reduction <add>, %27, %cst_28 [1] : vector<2x112xf32> to vector<2xf32>
    %29 = vector.shape_cast %28 : vector<2xf32> to vector<2x1xf32>
    %c0_29 = arith.constant 0 : index
    %c0_30 = arith.constant 0 : index
    %30 = vector.load %arg6[%c0_29, %c0_30] : memref<2x1xf32, #tpu.memory_space<vmem>>, vector<2x1xf32>
    %31 = arith.addf %29, %30 : vector<2x1xf32>
    %c0_31 = arith.constant 0 : index
    %c0_32 = arith.constant 0 : index
    %c0_33 = arith.constant 0 : index
    %32 = vector.load %arg7[%c0_31, %c0_32, %c0_33] : memref<1x2x1xf32, #tpu.memory_space<vmem>>, vector<1x2x1xf32>
    %33 = vector.shape_cast %32 : vector<1x2x1xf32> to vector<2x1xf32>
    %34 = vector.shape_cast %31 : vector<2x1xf32> to vector<1x2x1xf32>
    tpu.vector_store %arg7[%c0_31, %c0_32, %c0_33], %34 {strides = array<i32>} : memref<1x2x1xf32, #tpu.memory_space<vmem>>, vector<1x2x1xf32>,
    return
  }
  func.func @transform_0(%arg0: i32) -> (i32, i32) {
    %c0_i32 = arith.constant 0 : i32
    %c0_i32_0 = arith.constant 0 : i32
    return %arg0, %c0_i32 : i32, i32
  }
  func.func @transform_1(%arg0: i32) -> (i32, i32, i32) {
    %c0_i32 = arith.constant 0 : i32
    %c0_i32_0 = arith.constant 0 : i32
    %c0_i32_1 = arith.constant 0 : i32
    %c0_i32_2 = arith.constant 0 : i32
    return %c0_i32, %c0_i32_0, %c0_i32_1 : i32, i32, i32
  }
  func.func @transform_2(%arg0: i32) -> (i32, i32, i32) {
    %c0_i32 = arith.constant 0 : i32
    %c0_i32_0 = arith.constant 0 : i32
    %c0_i32_1 = arith.constant 0 : i32
    %c0_i32_2 = arith.constant 0 : i32
    return %c0_i32, %c0_i32_0, %c0_i32_1 : i32, i32, i32
  }
  func.func @transform_3(%arg0: i32) -> (i32, i32) {
    %c0_i32 = arith.constant 0 : i32
    %c0_i32_0 = arith.constant 0 : i32
    %c0_i32_1 = arith.constant 0 : i32
    return %c0_i32, %c0_i32_0 : i32, i32
  }
  func.func @transform_4(%arg0: i32) -> (i32, i32) {
    %c0_i32 = arith.constant 0 : i32
    %c0_i32_0 = arith.constant 0 : i32
    %c0_i32_1 = arith.constant 0 : i32
    return %c0_i32, %c0_i32_0 : i32, i32
  }
  func.func @transform_5(%arg0: i32) -> (i32, i32) {
    %c0_i32 = arith.constant 0 : i32
    %c0_i32_0 = arith.constant 0 : i32
    %c0_i32_1 = arith.constant 0 : i32
    return %c0_i32, %c0_i32_0 : i32, i32
  }
  func.func @transform_6(%arg0: i32) -> (i32, i32, i32) {
    %c0_i32 = arith.constant 0 : i32
    %c0_i32_0 = arith.constant 0 : i32
    %c0_i32_1 = arith.constant 0 : i32
    return %arg0, %c0_i32, %c0_i32_0 : i32, i32, i32
  }
}

</mosaic_0001>

<llo_original>
// kernel: forward.1
$region0: #{forward.1}
  #allocation0 [shape = 'u32[]', space=smem, size = 0x4, offset = 0x4, fixed_abs, tag = 'smem constant byte address 0x4 - core index']
  #allocation1 [shape = 'u32[144,128]{1,0:T(1,128)}', space=vmem, size = 0x12000, scoped, tag = 'internal scratch']
  %s0 = inlined_call_operand.vmem [shape: f32[96,16], index: 0, kind: input, shape index: {}]
  %s1 = inlined_call_operand.vmem [shape: f32[3,16,112], index: 1, kind: input, shape index: {}]
  %s2 = inlined_call_operand.vmem [shape: f32[3,896,48], index: 2, kind: input, shape index: {}]
  %s3 = inlined_call_operand.vmem [shape: f32[896,1], index: 3, kind: input, shape index: {}]
  %s4 = inlined_call_operand.vmem [shape: f32[2,896], index: 4, kind: input, shape index: {}]
  %s5 = inlined_call_operand.vmem [shape: f32[2,1], index: 5, kind: input, shape index: {}]
  %s6 = inlined_call_operand.vmem [shape: f32[2,2,1], index: 6, kind: output, shape index: {}]
  %s7 = sld [smem:[#allocation0]]
  $region57: #{forward.1} parent=0
    _
  %s9 = ssub.s32 1, %s7
  %s10 = scalar_select 0, %s9, %s7
  loop: start=0, step=1, limit=4
  $region2: #{forward.1} parent=0 // loop_pre_header
    _
  $region3: #{forward.1} parent=0 // loop_header
    %s12 = sphi 0, %s16
    %p13 = scmp.ge.s32.totalorder %s12, 4
    %s22 = sphi 0, %s24
    %s25 = sphi 0, %s22
    %s26 = sphi 0, %s25
    %s42 = sphi 0, %s26
    %s46 = sphi 0, %s46
    %s48 = sphi 0, %s46
    %s49 = sphi 0, %s48
    %s63 = sphi 0, %s49
    %s67 = sphi 0, %s67
    %s69 = sphi 0, %s67
    %s70 = sphi 0, %s69
    %s84 = sphi 0, %s70
    %s88 = sphi 0, %s88
    %s90 = sphi 0, %s88
    %s91 = sphi 0, %s90
    %s105 = sphi 0, %s91
    %s109 = sphi 0, %s109
    %s111 = sphi 0, %s109
    %s112 = sphi 0, %s111
    %s126 = sphi 0, %s112
    %s130 = sphi 0, %s130
    %s132 = sphi 0, %s130
    %s133 = sphi 0, %s132
    %s147 = sphi 0, %s133
    %s153 = sphi 0, %s155
    %s156 = sphi 0, %s153
    %s157 = sphi 0, %s156
    %s173 = sphi 0, %s157
  $region4: #{forward.1} parent=0 // loop_header_branch
    %15 = sbr.rel (%p13) target = $region8
  $region5: #{forward.1} parent=0 // loop_body
    %s17 = ssub.s32 %s12, 1
    %s18 = ssub.s32 %s12, 2
    %s19 = sadd.s32 %s12, 1
    %s20 = ssub.s32 %s12, %s19
    %p21 = scmp.eq.s32.totalorder %s20, 0
    %s23 = sadd.s32 %s22, 1
    %s24 = scalar_select %p21, %s22, %s23
    %p27 = pneg %p21
    %p28 = scmp.eq.s32.totalorder %s12, 1
    %p29 = por %p27, %p28
    %p30 = scmp.ne.s32.totalorder %s22, %s25
    %p31 = scmp.eq.s32.totalorder %s12, 0
    %p32 = por %p30, %p31
    %p33 = scmp.ne.s32.totalorder %s22, %s25
    %p34 = scmp.eq.s32.totalorder %s17, 1
    %p35 = por %p33, %p34
    %p36 = scmp.ne.s32.totalorder %s25, %s26
    %p37 = scmp.eq.s32.totalorder %s17, 0
    %p38 = por %p36, %p37
    %p39 = scmp.ne.s32.totalorder %s25, %s26
    %p40 = scmp.eq.s32.totalorder %s18, 1
    %p41 = por %p39, %p40
    %p43 = scmp.ne.s32.totalorder %s26, %s42
    %p44 = scmp.eq.s32.totalorder %s18, 0
    %p45 = por %p43, %p44
    %s47 = sadd.s32 %s46, 1
    %p50 = scmp.eq.s32.totalorder %s12, 1
    %p51 = scmp.ne.s32.totalorder %s46, %s48
    %p52 = scmp.eq.s32.totalorder %s12, 0
    %p53 = por %p51, %p52
    %p54 = scmp.ne.s32.totalorder %s46, %s48
    %p55 = scmp.eq.s32.totalorder %s17, 1
    %p56 = por %p54, %p55
    %p57 = scmp.ne.s32.totalorder %s48, %s49
    %p58 = scmp.eq.s32.totalorder %s17, 0
    %p59 = por %p57, %p58
    %p60 = scmp.ne.s32.totalorder %s48, %s49
    %p61 = scmp.eq.s32.totalorder %s18, 1
    %p62 = por %p60, %p61
    %p64 = scmp.ne.s32.totalorder %s49, %s63
    %p65 = scmp.eq.s32.totalorder %s18, 0
    %p66 = por %p64, %p65
    %s68 = sadd.s32 %s67, 1
    %p71 = scmp.eq.s32.totalorder %s12, 1
    %p72 = scmp.ne.s32.totalorder %s67, %s69
    %p73 = scmp.eq.s32.totalorder %s12, 0
    %p74 = por %p72, %p73
    %p75 = scmp.ne.s32.totalorder %s67, %s69
    %p76 = scmp.eq.s32.totalorder %s17, 1
    %p77 = por %p75, %p76
    %p78 = scmp.ne.s32.totalorder %s69, %s70
    %p79 = scmp.eq.s32.totalorder %s17, 0
    %p80 = por %p78, %p79
    %p81 = scmp.ne.s32.totalorder %s69, %s70
    %p82 = scmp.eq.s32.totalorder %s18, 1
    %p83 = por %p81, %p82
    %p85 = scmp.ne.s32.totalorder %s70, %s84
    %p86 = scmp.eq.s32.totalorder %s18, 0
    %p87 = por %p85, %p86
    %s89 = sadd.s32 %s88, 1
    %p92 = scmp.eq.s32.totalorder %s12, 1
    %p93 = scmp.ne.s32.totalorder %s88, %s90
    %p94 = scmp.eq.s32.totalorder %s12, 0
    %p95 = por %p93, %p94
    %p96 = scmp.ne.s32.totalorder %s88, %s90
    %p97 = scmp.eq.s32.totalorder %s17, 1
    %p98 = por %p96, %p97
    %p99 = scmp.ne.s32.totalorder %s90, %s91
    %p100 = scmp.eq.s32.totalorder %s17, 0
    %p101 = por %p99, %p100
    %p102 = scmp.ne.s32.totalorder %s90, %s91
    %p103 = scmp.eq.s32.totalorder %s18, 1
    %p104 = por %p102, %p103
    %p106 = scmp.ne.s32.totalorder %s91, %s105
    %p107 = scmp.eq.s32.totalorder %s18, 0
    %p108 = por %p106, %p107
    %s110 = sadd.s32 %s109, 1
    %p113 = scmp.eq.s32.totalorder %s12, 1
    %p114 = scmp.ne.s32.totalorder %s109, %s111
    %p115 = scmp.eq.s32.totalorder %s12, 0
    %p116 = por %p114, %p115
    %p117 = scmp.ne.s32.totalorder %s109, %s111
    %p118 = scmp.eq.s32.totalorder %s17, 1
    %p119 = por %p117, %p118
    %p120 = scmp.ne.s32.totalorder %s111, %s112
    %p121 = scmp.eq.s32.totalorder %s17, 0
    %p122 = por %p120, %p121
    %p123 = scmp.ne.s32.totalorder %s111, %s112
    %p124 = scmp.eq.s32.totalorder %s18, 1
    %p125 = por %p123, %p124
    %p127 = scmp.ne.s32.totalorder %s112, %s126
    %p128 = scmp.eq.s32.totalorder %s18, 0
    %p129 = por %p127, %p128
    %s131 = sadd.s32 %s130, 1
    %p134 = scmp.eq.s32.totalorder %s12, 1
    %p135 = scmp.ne.s32.totalorder %s130, %s132
    %p136 = scmp.eq.s32.totalorder %s12, 0
    %p137 = por %p135, %p136
    %p138 = scmp.ne.s32.totalorder %s130, %s132
    %p139 = scmp.eq.s32.totalorder %s17, 1
    %p140 = por %p138, %p139
    %p141 = scmp.ne.s32.totalorder %s132, %s133
    %p142 = scmp.eq.s32.totalorder %s17, 0
    %p143 = por %p141, %p142
    %p144 = scmp.ne.s32.totalorder %s132, %s133
    %p145 = scmp.eq.s32.totalorder %s18, 1
    %p146 = por %p144, %p145
    %p148 = scmp.ne.s32.totalorder %s133, %s147
    %p149 = scmp.eq.s32.totalorder %s18, 0
    %p150 = por %p148, %p149
    %s151 = ssub.s32 %s12, %s19
    %p152 = scmp.eq.s32.totalorder %s151, 0
    %s154 = sadd.s32 %s153, 1
    %s155 = scalar_select %p152, %s153, %s154
    %p158 = pneg %p152
    %p159 = scmp.eq.s32.totalorder %s12, 1
    %p160 = por %p158, %p159
    %p161 = scmp.ne.s32.totalorder %s153, %s156
    %p162 = scmp.eq.s32.totalorder %s12, 0
    %p163 = por %p161, %p162
    %p164 = scmp.ne.s32.totalorder %s153, %s156
    %p165 = scmp.eq.s32.totalorder %s17, 1
    %p166 = por %p164, %p165
    %p167 = scmp.ne.s32.totalorder %s156, %s157
    %p168 = scmp.eq.s32.totalorder %s17, 0
    %p169 = por %p167, %p168
    %p170 = scmp.ne.s32.totalorder %s156, %s157
    %p171 = scmp.eq.s32.totalorder %s18, 1
    %p172 = por %p170, %p171
    %p174 = scmp.ne.s32.totalorder %s157, %s173
    %p175 = scmp.eq.s32.totalorder %s18, 0
    %p176 = por %p174, %p175
    %p177 = scmp.le.s32.totalorder 1, %s12
    %p178 = scmp.lt.s32.totalorder %s12, 3
    %p179 = pnand %p177, %p178
    %p180 = pneg %p179
    // Predicated region
    $region9: #{forward.1} parent=5 // pred_check
      _
    $region10: #{forward.1} parent=5 // pred_check_branch
      %182 = sbr.rel (%p179) target = $region12
    $region11: #{forward.1} parent=5 // pred_region
      %s183 = ssub.s32 %s12, 1
      // Predicated region
      $region13: #{forward.1} parent=11 // pred_check
        %p184 = pneg %p59
      $region14: #{forward.1} parent=11 // pred_check_branch
        %186 = sbr.rel (%p184) target = $region16
      $region15: #{forward.1} parent=11 // pred_region
        _
      $region16: #{forward.1} parent=11 // pred_fallthru
        _
      // Predicated region
      $region17: #{forward.1} parent=11 // pred_check
        %p187 = pneg %p80
      $region18: #{forward.1} parent=11 // pred_check_branch
        %189 = sbr.rel (%p187) target = $region20
      $region19: #{forward.1} parent=11 // pred_region
        _
      $region20: #{forward.1} parent=11 // pred_fallthru
        _
      // Predicated region
      $region21: #{forward.1} parent=11 // pred_check
        %p190 = pneg %p101
      $region22: #{forward.1} parent=11 // pred_check_branch
        %192 = sbr.rel (%p190) target = $region24
      $region23: #{forward.1} parent=11 // pred_region
        _
      $region24: #{forward.1} parent=11 // pred_fallthru
        _
      // Predicated region
      $region25: #{forward.1} parent=11 // pred_check
        %p193 = pneg %p122
      $region26: #{forward.1} parent=11 // pred_check_branch
        %195 = sbr.rel (%p193) target = $region28
      $region27: #{forward.1} parent=11 // pred_region
        _
      $region28: #{forward.1} parent=11 // pred_fallthru
        _
      // Predicated region
      $region29: #{forward.1} parent=11 // pred_check
        %p196 = pneg %p143
      $region30: #{forward.1} parent=11 // pred_check_branch
        %198 = sbr.rel (%p196) target = $region32
      $region31: #{forward.1} parent=11 // pred_region
        _
      $region32: #{forward.1} parent=11 // pred_fallthru
        _
    $region12: #{forward.1} parent=5 // pred_fallthru
      _
    %p199 = scmp.lt.s32.totalorder %s12, 2
    // Predicated region
    $region33: #{forward.1} parent=5 // pred_check
      %p200 = pneg %p199
    $region34: #{forward.1} parent=5 // pred_check_branch
      %202 = sbr.rel (%p200) target = $region36
    $region35: #{forward.1} parent=5 // pred_region
      // Predicated region
      $region37: #{forward.1} parent=35 // pred_check
        %p203 = pneg %p32
      $region38: #{forward.1} parent=35 // pred_check_branch
        %205 = sbr.rel (%p203) target = $region40
      $region39: #{forward.1} parent=35 // pred_region
        %s206 = smul.u32 6, %s12
        %p207 = scmp.lt.s32.totalorder %s206, 11
        %s208 = scalar_select %p207, %s206, 11
        %s209 = smul.addr %s208, 8
        %s210 = scalar_lea.vmem %s0, %s209
        %s211 = smul.u32 6, %s12
      $region40: #{forward.1} parent=35 // pred_fallthru
        _
    $region36: #{forward.1} parent=5 // pred_fallthru
      _
    %p212 = scmp.le.s32.totalorder 1, %s12
    %p213 = scmp.lt.s32.totalorder %s12, 3
    %p214 = pnand %p212, %p213
    %p215 = pneg %p214
    // Predicated region
    $region41: #{forward.1} parent=5 // pred_check
      _
    $region42: #{forward.1} parent=5 // pred_check_branch
      %217 = sbr.rel (%p214) target = $region44
    $region43: #{forward.1} parent=5 // pred_region
      %s218 = ssub.s32 %s12, 1
      %s219 = smul.u32 6, %s17
      %p220 = scmp.lt.s32.totalorder %s219, 11
      %s221 = scalar_select %p220, %s219, 11
      %s222 = smul.addr %s221, 8
      %s223 = scalar_lea.vmem %s0, %s222
      %p224 = pneg %p38
      %p225 = pneg %p35
      %p226 = pneg %p59
      %p227 = pneg %p56
      %p228 = pneg %p80
      %p229 = pneg %p77
      %p230 = pneg %p101
      %p231 = pneg %p98
      %p232 = pneg %p122
      %p233 = pneg %p119
      %p234 = pneg %p143
      %p235 = pneg %p140
      %p236 = pneg %p169
      %p237 = pneg %p166
      %p238 = scmp.lt.s32.totalorder %s17, 1
      %s239 = scalar_select %p238, %s17, 1
      %s240 = smul.addr %s239, 2
      %s241 = scalar_lea.vmem %s6, %s240
      %s242 = smul.u32 6, %s17
      %p243 = scmp.lt.s32.totalorder %s242, 11
      %s244 = scalar_select %p243, %s242, 11
      %s245 = smul.addr %s244, 8
      %s246 = scalar_lea.vmem %s0, %s245
      %s247 = smul.u32 6, %s17
      %p248 = scmp.lt.s32.totalorder %s17, 1
      %s249 = scalar_select %p248, %s17, 1
      %s250 = smul.addr %s249, 2
      %s251 = scalar_lea.vmem %s6, %s250
      %v252 = vld [vmem:[%s246] sm:$0xff]
      %v253 = vld [vmem:[%s246 + $0x8] sm:$0xff]
      %v254 = vld [vmem:[%s246 + $0x10] sm:$0xff]
      %v255 = vld [vmem:[%s246 + $0x18] sm:$0xff]
      %v256 = vld [vmem:[%s246 + $0x20] sm:$0xff]
      %v257 = vld [vmem:[%s246 + $0x28] sm:$0xff]
      %v258 = vld [vmem:[%s1] sm:$0xff]
      %v259 = vld [vmem:[%s1 + $0x8] sm:$0xff]
      %vm260 = vcmask 130048
      %v262 = vsel %vm260, %v252, 0
      %v265 = vsel %vm260, %v253, 0
      %v268 = vsel %vm260, %v254, 0
      %v271 = vsel %vm260, %v255, 0
      %v274 = vsel %vm260, %v256, 0
      %v277 = vsel %vm260, %v257, 0
      %279 = vmatprep.subr.mxu0 0.0
      %280 = vmatpush1.msra.mxu0 %v258
      %281 = vmatprep.subr.mxu0 0.0
      %282 = vmatpush1.msra.mxu0 %v259
      %283 = vmatprep.subr.mxu0 0.0
      %284 = vmatpush1.msra.mxu0 0.0
      %285 = vmatprep.subr.mxu0 0.0
      %286 = vmatpush1.msra.mxu0 0.0
      %287 = vmatprep.subr.mxu0 0.0
      %288 = vmatpush1.msra.mxu0 0.0
      %289 = vmatprep.subr.mxu0 0.0
      %290 = vmatpush1.msra.mxu0 0.0
      %291 = vmatprep.subr.mxu0 0.0
      %292 = vmatpush1.msra.mxu0 0.0
      %293 = vmatprep.subr.mxu0 0.0
      %294 = vmatpush1.msra.mxu0 0.0
      %295 = vmatprep.subr.mxu0 0.0
      %296 = vmatpush1.msra.mxu0 0.0
      %297 = vmatprep.subr.mxu0 0.0
      %298 = vmatpush1.msra.mxu0 0.0
      %299 = vmatprep.subr.mxu0 0.0
      %300 = vmatpush1.msra.mxu0 0.0
      %301 = vmatprep.subr.mxu0 0.0
      %302 = vmatpush1.msra.mxu0 0.0
      %303 = vmatprep.subr.mxu0 0.0
      %304 = vmatpush1.msra.mxu0 0.0
      %305 = vmatprep.subr.mxu0 0.0
      %306 = vmatpush1.msra.mxu0 0.0
      %307 = vmatprep.subr.mxu0 0.0
      %308 = vmatpush1.msra.mxu0 0.0
      %309 = vmatprep.subr.mxu0 0.0
      %310 = vmatpush1.msra.mxu0 0.0
      %311 = vmatprep.subr.mxu0 0.0
      %312 = vmatpush1.msra.mxu0 0.0
      %313 = vmatprep.subr.mxu0 0.0
      %314 = vmatpush1.msra.mxu0 0.0
      %315 = vmatprep.subr.mxu0 0.0
      %316 = vmatpush1.msra.mxu0 0.0
      %317 = vmatprep.subr.mxu0 0.0
      %318 = vmatpush1.msra.mxu0 0.0
      %319 = vmatprep.subr.mxu0 0.0
      %320 = vmatpush1.msra.mxu0 0.0
      %321 = vmatprep.subr.mxu0 0.0
      %322 = vmatpush1.msra.mxu0 0.0
      %323 = vmatprep.subr.mxu0 0.0
      %324 = vmatpush1.msra.mxu0 0.0
      %325 = vmatprep.subr.mxu0 0.0
      %326 = vmatpush1.msra.mxu0 0.0
      %327 = vmatprep.subr.mxu0 0.0
      %328 = vmatpush1.msra.mxu0 0.0
      %329 = vmatprep.subr.mxu0 0.0
      %330 = vmatpush1.msra.mxu0 0.0
      %331 = vmatprep.subr.mxu0 0.0
      %332 = vmatpush1.msra.mxu0 0.0
      %333 = vmatprep.subr.mxu0 0.0
      %334 = vmatpush1.msra.mxu0 0.0
      %335 = vmatprep.subr.mxu0 0.0
      %336 = vmatpush1.msra.mxu0 0.0
      %337 = vmatprep.subr.mxu0 0.0
      %338 = vmatpush1.msra.mxu0 0.0
      %339 = vmatprep.subr.mxu0 0.0
      %340 = vmatpush1.msra.mxu0 0.0
      %341 = vmatprep.subr.mxu0 0.0
      %342 = vmatpush1.msra.mxu0 0.0
      %343 = vmatprep.mubr.f32.mxu0 0.0
      %344 = vmatmul.mubr.f32.gmra.mrb[0].mxu0 %v262
      %v345 = vpop.f32.mrb[0].mxu0
      %v346 = vadd.f32 0.0, %v345
      %v347 = vpop.f32.mrb[0].mxu0
      %348 = vmatprep.mubr.f32.mxu0 0.0
      %349 = vmatmul.mubr.f32.gmra.mrb[0].mxu0 %v265
      %v350 = vpop.f32.mrb[0].mxu0
      %v351 = vadd.f32 0.0, %v350
      %v352 = vpop.f32.mrb[0].mxu0
      %353 = vmatprep.mubr.f32.mxu0 0.0
      %354 = vmatmul.mubr.f32.gmra.mrb[0].mxu0 %v268
      %v355 = vpop.f32.mrb[0].mxu0
      %v356 = vadd.f32 0.0, %v355
      %v357 = vpop.f32.mrb[0].mxu0
      %358 = vmatprep.mubr.f32.mxu0 0.0
      %359 = vmatmul.mubr.f32.gmra.mrb[0].mxu0 %v271
      %v360 = vpop.f32.mrb[0].mxu0
      %v361 = vadd.f32 0.0, %v360
      %v362 = vpop.f32.mrb[0].mxu0
      %363 = vmatprep.mubr.f32.mxu0 0.0
      %364 = vmatmul.mubr.f32.gmra.mrb[0].mxu0 %v274
      %v365 = vpop.f32.mrb[0].mxu0
      %v366 = vadd.f32 0.0, %v365
      %v367 = vpop.f32.mrb[0].mxu0
      %368 = vmatprep.mubr.f32.mxu0 0.0
      %369 = vmatmul.mubr.f32.gmra.mrb[0].mxu0 %v277
      %v370 = vpop.f32.mrb[0].mxu0
      %v371 = vadd.f32 0.0, %v370
      %v372 = vpop.f32.mrb[0].mxu0
      %373 = vdwg.mxu0
      %s374 = scalar_lea.vmem %s1, 16
      %v375 = vld [vmem:[%s374] sm:$0xff]
      %v376 = vld [vmem:[%s374 + $0x8] sm:$0xff]
      %377 = vmatprep.subr.mxu0 0.0
      %378 = vmatpush1.msra.mxu0 %v375
      %379 = vmatprep.subr.mxu0 0.0
      %380 = vmatpush1.msra.mxu0 %v376
      %381 = vmatprep.subr.mxu0 0.0
      %382 = vmatpush1.msra.mxu0 0.0
      %383 = vmatprep.subr.mxu0 0.0
      %384 = vmatpush1.msra.mxu0 0.0
      %385 = vmatprep.subr.mxu0 0.0
      %386 = vmatpush1.msra.mxu0 0.0
      %387 = vmatprep.subr.mxu0 0.0
      %388 = vmatpush1.msra.mxu0 0.0
      %389 = vmatprep.subr.mxu0 0.0
      %390 = vmatpush1.msra.mxu0 0.0
      %391 = vmatprep.subr.mxu0 0.0
      %392 = vmatpush1.msra.mxu0 0.0
      %393 = vmatprep.subr.mxu0 0.0
      %394 = vmatpush1.msra.mxu0 0.0
      %395 = vmatprep.subr.mxu0 0.0
      %396 = vmatpush1.msra.mxu0 0.0
      %397 = vmatprep.subr.mxu0 0.0
      %398 = vmatpush1.msra.mxu0 0.0
      %399 = vmatprep.subr.mxu0 0.0
      %400 = vmatpush1.msra.mxu0 0.0
      %401 = vmatprep.subr.mxu0 0.0
      %402 = vmatpush1.msra.mxu0 0.0
      %403 = vmatprep.subr.mxu0 0.0
      %404 = vmatpush1.msra.mxu0 0.0
      %405 = vmatprep.subr.mxu0 0.0
      %406 = vmatpush1.msra.mxu0 0.0
      %407 = vmatprep.subr.mxu0 0.0
      %408 = vmatpush1.msra.mxu0 0.0
      %409 = vmatprep.subr.mxu0 0.0
      %410 = vmatpush1.msra.mxu0 0.0
      %411 = vmatprep.subr.mxu0 0.0
      %412 = vmatpush1.msra.mxu0 0.0
      %413 = vmatprep.subr.mxu0 0.0
      %414 = vmatpush1.msra.mxu0 0.0
      %415 = vmatprep.subr.mxu0 0.0
      %416 = vmatpush1.msra.mxu0 0.0
      %417 = vmatprep.subr.mxu0 0.0
      %418 = vmatpush1.msra.mxu0 0.0
      %419 = vmatprep.subr.mxu0 0.0
      %420 = vmatpush1.msra.mxu0 0.0
      %421 = vmatprep.subr.mxu0 0.0
      %422 = vmatpush1.msra.mxu0 0.0
      %423 = vmatprep.subr.mxu0 0.0
      %424 = vmatpush1.msra.mxu0 0.0
      %425 = vmatprep.subr.mxu0 0.0
      %426 = vmatpush1.msra.mxu0 0.0
      %427 = vmatprep.subr.mxu0 0.0
      %428 = vmatpush1.msra.mxu0 0.0
      %429 = vmatprep.subr.mxu0 0.0
      %430 = vmatpush1.msra.mxu0 0.0
      %431 = vmatprep.subr.mxu0 0.0
      %432 = vmatpush1.msra.mxu0 0.0
      %433 = vmatprep.subr.mxu0 0.0
      %434 = vmatpush1.msra.mxu0 0.0
      %435 = vmatprep.subr.mxu0 0.0
      %436 = vmatpush1.msra.mxu0 0.0
      %437 = vmatprep.subr.mxu0 0.0
      %438 = vmatpush1.msra.mxu0 0.0
      %439 = vmatprep.subr.mxu0 0.0
      %440 = vmatpush1.msra.mxu0 0.0
      %441 = vmatprep.mubr.f32.mxu0 0.0
      %442 = vmatmul.mubr.f32.gmra.mrb[0].mxu0 %v262
      %v443 = vpop.f32.mrb[0].mxu0
      %v444 = vadd.f32 0.0, %v443
      %v445 = vpop.f32.mrb[0].mxu0
      %446 = vmatprep.mubr.f32.mxu0 0.0
      %447 = vmatmul.mubr.f32.gmra.mrb[0].mxu0 %v265
      %v448 = vpop.f32.mrb[0].mxu0
      %v449 = vadd.f32 0.0, %v448
      %v450 = vpop.f32.mrb[0].mxu0
      %451 = vmatprep.mubr.f32.mxu0 0.0
      %452 = vmatmul.mubr.f32.gmra.mrb[0].mxu0 %v268
      %v453 = vpop.f32.mrb[0].mxu0
      %v454 = vadd.f32 0.0, %v453
      %v455 = vpop.f32.mrb[0].mxu0
      %456 = vmatprep.mubr.f32.mxu0 0.0
      %457 = vmatmul.mubr.f32.gmra.mrb[0].mxu0 %v271
      %v458 = vpop.f32.mrb[0].mxu0
      %v459 = vadd.f32 0.0, %v458
      %v460 = vpop.f32.mrb[0].mxu0
      %461 = vmatprep.mubr.f32.mxu0 0.0
      %462 = vmatmul.mubr.f32.gmra.mrb[0].mxu0 %v274
      %v463 = vpop.f32.mrb[0].mxu0
      %v464 = vadd.f32 0.0, %v463
      %v465 = vpop.f32.mrb[0].mxu0
      %466 = vmatprep.mubr.f32.mxu0 0.0
      %467 = vmatmul.mubr.f32.gmra.mrb[0].mxu0 %v277
      %v468 = vpop.f32.mrb[0].mxu0
      %v469 = vadd.f32 0.0, %v468
      %v470 = vpop.f32.mrb[0].mxu0
      %471 = vdwg.mxu0
      %s472 = scalar_lea.vmem %s1, 32
      %v473 = vld [vmem:[%s472] sm:$0xff]
      %v474 = vld [vmem:[%s472 + $0x8] sm:$0xff]
      %475 = vmatprep.subr.mxu0 0.0
      %476 = vmatpush1.msra.mxu0 %v473
      %477 = vmatprep.subr.mxu0 0.0
      %478 = vmatpush1.msra.mxu0 %v474
      %479 = vmatprep.subr.mxu0 0.0
      %480 = vmatpush1.msra.mxu0 0.0
      %481 = vmatprep.subr.mxu0 0.0
      %482 = vmatpush1.msra.mxu0 0.0
      %483 = vmatprep.subr.mxu0 0.0
      %484 = vmatpush1.msra.mxu0 0.0
      %485 = vmatprep.subr.mxu0 0.0
      %486 = vmatpush1.msra.mxu0 0.0
      %487 = vmatprep.subr.mxu0 0.0
      %488 = vmatpush1.msra.mxu0 0.0
      %489 = vmatprep.subr.mxu0 0.0
      %490 = vmatpush1.msra.mxu0 0.0
      %491 = vmatprep.subr.mxu0 0.0
      %492 = vmatpush1.msra.mxu0 0.0
      %493 = vmatprep.subr.mxu0 0.0
      %494 = vmatpush1.msra.mxu0 0.0
      %495 = vmatprep.subr.mxu0 0.0
      %496 = vmatpush1.msra.mxu0 0.0
      %497 = vmatprep.subr.mxu0 0.0
      %498 = vmatpush1.msra.mxu0 0.0
      %499 = vmatprep.subr.mxu0 0.0
      %500 = vmatpush1.msra.mxu0 0.0
      %501 = vmatprep.subr.mxu0 0.0
      %502 = vmatpush1.msra.mxu0 0.0
      %503 = vmatprep.subr.mxu0 0.0
      %504 = vmatpush1.msra.mxu0 0.0
      %505 = vmatprep.subr.mxu0 0.0
      %506 = vmatpush1.msra.mxu0 0.0
      %507 = vmatprep.subr.mxu0 0.0
      %508 = vmatpush1.msra.mxu0 0.0
      %509 = vmatprep.subr.mxu0 0.0
      %510 = vmatpush1.msra.mxu0 0.0
      %511 = vmatprep.subr.mxu0 0.0
      %512 = vmatpush1.msra.mxu0 0.0
      %513 = vmatprep.subr.mxu0 0.0
      %514 = vmatpush1.msra.mxu0 0.0
      %515 = vmatprep.subr.mxu0 0.0
      %516 = vmatpush1.msra.mxu0 0.0
      %517 = vmatprep.subr.mxu0 0.0
      %518 = vmatpush1.msra.mxu0 0.0
      %519 = vmatprep.subr.mxu0 0.0
      %520 = vmatpush1.msra.mxu0 0.0
      %521 = vmatprep.subr.mxu0 0.0
      %522 = vmatpush1.msra.mxu0 0.0
      %523 = vmatprep.subr.mxu0 0.0
      %524 = vmatpush1.msra.mxu0 0.0
      %525 = vmatprep.subr.mxu0 0.0
      %526 = vmatpush1.msra.mxu0 0.0
      %527 = vmatprep.subr.mxu0 0.0
      %528 = vmatpush1.msra.mxu0 0.0
      %529 = vmatprep.subr.mxu0 0.0
      %530 = vmatpush1.msra.mxu0 0.0
      %531 = vmatprep.subr.mxu0 0.0
      %532 = vmatpush1.msra.mxu0 0.0
      %533 = vmatprep.subr.mxu0 0.0
      %534 = vmatpush1.msra.mxu0 0.0
      %535 = vmatprep.subr.mxu0 0.0
      %536 = vmatpush1.msra.mxu0 0.0
      %537 = vmatprep.subr.mxu0 0.0
      %538 = vmatpush1.msra.mxu0 0.0
      %539 = vmatprep.mubr.f32.mxu0 0.0
      %540 = vmatmul.mubr.f32.gmra.mrb[0].mxu0 %v262
      %v541 = vpop.f32.mrb[0].mxu0
      %v542 = vadd.f32 0.0, %v541
      %v543 = vpop.f32.mrb[0].mxu0
      %544 = vmatprep.mubr.f32.mxu0 0.0
      %545 = vmatmul.mubr.f32.gmra.mrb[0].mxu0 %v265
      %v546 = vpop.f32.mrb[0].mxu0
      %v547 = vadd.f32 0.0, %v546
      %v548 = vpop.f32.mrb[0].mxu0
      %549 = vmatprep.mubr.f32.mxu0 0.0
      %550 = vmatmul.mubr.f32.gmra.mrb[0].mxu0 %v268
      %v551 = vpop.f32.mrb[0].mxu0
      %v552 = vadd.f32 0.0, %v551
      %v553 = vpop.f32.mrb[0].mxu0
      %554 = vmatprep.mubr.f32.mxu0 0.0
      %555 = vmatmul.mubr.f32.gmra.mrb[0].mxu0 %v271
      %v556 = vpop.f32.mrb[0].mxu0
      %v557 = vadd.f32 0.0, %v556
      %v558 = vpop.f32.mrb[0].mxu0
      %559 = vmatprep.mubr.f32.mxu0 0.0
      %560 = vmatmul.mubr.f32.gmra.mrb[0].mxu0 %v274
      %v561 = vpop.f32.mrb[0].mxu0
      %v562 = vadd.f32 0.0, %v561
      %v563 = vpop.f32.mrb[0].mxu0
      %564 = vmatprep.mubr.f32.mxu0 0.0
      %565 = vmatmul.mubr.f32.gmra.mrb[0].mxu0 %v277
      %v566 = vpop.f32.mrb[0].mxu0
      %v567 = vadd.f32 0.0, %v566
      %v568 = vpop.f32.mrb[0].mxu0
      %569 = vdwg.mxu0
      %v570 = vld [vmem:[%s2] sm:$0xff]
      %v571 = vld [vmem:[%s2 + $0x8] sm:$0xff]
      %v572 = vld [vmem:[%s2 + $0x10] sm:$0xff]
      %v573 = vld [vmem:[%s2 + $0x18] sm:$0xff]
      %v574 = vld [vmem:[%s2 + $0x20] sm:$0xff]
      %v575 = vld [vmem:[%s2 + $0x28] sm:$0xff]
      %v576 = vld [vmem:[%s2 + $0x30] sm:$0xff]
      %v577 = vld [vmem:[%s2 + $0x38] sm:$0xff]
      %v578 = vld [vmem:[%s2 + $0x40] sm:$0xff]
      %v579 = vld [vmem:[%s2 + $0x48] sm:$0xff]
      %v580 = vld [vmem:[%s2 + $0x50] sm:$0xff]
      %v581 = vld [vmem:[%s2 + $0x58] sm:$0xff]
      %v582 = vld [vmem:[%s2 + $0x60] sm:$0xff]
      %v583 = vld [vmem:[%s2 + $0x68] sm:$0xff]
      %v584 = vld [vmem:[%s2 + $0x70] sm:$0xff]
      %v585 = vld [vmem:[%s2 + $0x78] sm:$0xff]
      %v586 = vld [vmem:[%s2 + $0x80] sm:$0xff]
      %v587 = vld [vmem:[%s2 + $0x88] sm:$0xff]
      %v588 = vld [vmem:[%s2 + $0x90] sm:$0xff]
      %v589 = vld [vmem:[%s2 + $0x98] sm:$0xff]
      %v590 = vld [vmem:[%s2 + $0xa0] sm:$0xff]
      %v591 = vld [vmem:[%s2 + $0xa8] sm:$0xff]
      %v592 = vld [vmem:[%s2 + $0xb0] sm:$0xff]
      %v593 = vld [vmem:[%s2 + $0xb8] sm:$0xff]
      %v594 = vld [vmem:[%s2 + $0xc0] sm:$0xff]
      %v595 = vld [vmem:[%s2 + $0xc8] sm:$0xff]
      %v596 = vld [vmem:[%s2 + $0xd0] sm:$0xff]
      %v597 = vld [vmem:[%s2 + $0xd8] sm:$0xff]
      %v598 = vld [vmem:[%s2 + $0xe0] sm:$0xff]
      %v599 = vld [vmem:[%s2 + $0xe8] sm:$0xff]
      %v600 = vld [vmem:[%s2 + $0xf0] sm:$0xff]
      %v601 = vld [vmem:[%s2 + $0xf8] sm:$0xff]
      %v602 = vld [vmem:[%s2 + $0x100] sm:$0xff]
      %v603 = vld [vmem:[%s2 + $0x108] sm:$0xff]
      %v604 = vld [vmem:[%s2 + $0x110] sm:$0xff]
      %v605 = vld [vmem:[%s2 + $0x118] sm:$0xff]
      %v606 = vld [vmem:[%s2 + $0x120] sm:$0xff]
      %v607 = vld [vmem:[%s2 + $0x128] sm:$0xff]
      %v608 = vld [vmem:[%s2 + $0x130] sm:$0xff]
      %v609 = vld [vmem:[%s2 + $0x138] sm:$0xff]
      %v610 = vld [vmem:[%s2 + $0x140] sm:$0xff]
      %v611 = vld [vmem:[%s2 + $0x148] sm:$0xff]
      %v612 = vld [vmem:[%s2 + $0x150] sm:$0xff]
      %v613 = vld [vmem:[%s2 + $0x158] sm:$0xff]
      %v614 = vld [vmem:[%s2 + $0x160] sm:$0xff]
      %v615 = vld [vmem:[%s2 + $0x168] sm:$0xff]
      %v616 = vld [vmem:[%s2 + $0x170] sm:$0xff]
      %v617 = vld [vmem:[%s2 + $0x178] sm:$0xff]
      %v618 = vld [vmem:[%s2 + $0x180] sm:$0xff]
      %v619 = vld [vmem:[%s2 + $0x188] sm:$0xff]
      %v620 = vld [vmem:[%s2 + $0x190] sm:$0xff]
      %v621 = vld [vmem:[%s2 + $0x198] sm:$0xff]
      %v622 = vld [vmem:[%s2 + $0x1a0] sm:$0xff]
      %v623 = vld [vmem:[%s2 + $0x1a8] sm:$0xff]
      %v624 = vld [vmem:[%s2 + $0x1b0] sm:$0xff]
      %v625 = vld [vmem:[%s2 + $0x1b8] sm:$0xff]
      %v626 = vld [vmem:[%s2 + $0x1c0] sm:$0xff]
      %v627 = vld [vmem:[%s2 + $0x1c8] sm:$0xff]
      %v628 = vld [vmem:[%s2 + $0x1d0] sm:$0xff]
      %v629 = vld [vmem:[%s2 + $0x1d8] sm:$0xff]
      %v630 = vld [vmem:[%s2 + $0x1e0] sm:$0xff]
      %v631 = vld [vmem:[%s2 + $0x1e8] sm:$0xff]
      %v632 = vld [vmem:[%s2 + $0x1f0] sm:$0xff]
      %v633 = vld [vmem:[%s2 + $0x1f8] sm:$0xff]
      %v634 = vld [vmem:[%s2 + $0x200] sm:$0xff]
      %v635 = vld [vmem:[%s2 + $0x208] sm:$0xff]
      %v636 = vld [vmem:[%s2 + $0x210] sm:$0xff]
      %v637 = vld [vmem:[%s2 + $0x218] sm:$0xff]
      %v638 = vld [vmem:[%s2 + $0x220] sm:$0xff]
      %v639 = vld [vmem:[%s2 + $0x228] sm:$0xff]
      %v640 = vld [vmem:[%s2 + $0x230] sm:$0xff]
      %v641 = vld [vmem:[%s2 + $0x238] sm:$0xff]
      %v642 = vld [vmem:[%s2 + $0x240] sm:$0xff]
      %v643 = vld [vmem:[%s2 + $0x248] sm:$0xff]
      %v644 = vld [vmem:[%s2 + $0x250] sm:$0xff]
      %v645 = vld [vmem:[%s2 + $0x258] sm:$0xff]
      %v646 = vld [vmem:[%s2 + $0x260] sm:$0xff]
      %v647 = vld [vmem:[%s2 + $0x268] sm:$0xff]
      %v648 = vld [vmem:[%s2 + $0x270] sm:$0xff]
      %v649 = vld [vmem:[%s2 + $0x278] sm:$0xff]
      %v650 = vld [vmem:[%s2 + $0x280] sm:$0xff]
      %v651 = vld [vmem:[%s2 + $0x288] sm:$0xff]
      %v652 = vld [vmem:[%s2 + $0x290] sm:$0xff]
      %v653 = vld [vmem:[%s2 + $0x298] sm:$0xff]
      %v654 = vld [vmem:[%s2 + $0x2a0] sm:$0xff]
      %v655 = vld [vmem:[%s2 + $0x2a8] sm:$0xff]
      %v656 = vld [vmem:[%s2 + $0x2b0] sm:$0xff]
      %v657 = vld [vmem:[%s2 + $0x2b8] sm:$0xff]
      %v658 = vld [vmem:[%s2 + $0x2c0] sm:$0xff]
      %v659 = vld [vmem:[%s2 + $0x2c8] sm:$0xff]
      %v660 = vld [vmem:[%s2 + $0x2d0] sm:$0xff]
      %v661 = vld [vmem:[%s2 + $0x2d8] sm:$0xff]
      %v662 = vld [vmem:[%s2 + $0x2e0] sm:$0xff]
      %v663 = vld [vmem:[%s2 + $0x2e8] sm:$0xff]
      %v664 = vld [vmem:[%s2 + $0x2f0] sm:$0xff]
      %v665 = vld [vmem:[%s2 + $0x2f8] sm:$0xff]
      %v666 = vld [vmem:[%s2 + $0x300] sm:$0xff]
      %v667 = vld [vmem:[%s2 + $0x308] sm:$0xff]
      %v668 = vld [vmem:[%s2 + $0x310] sm:$0xff]
      %v669 = vld [vmem:[%s2 + $0x318] sm:$0xff]
      %v670 = vld [vmem:[%s2 + $0x320] sm:$0xff]
      %v671 = vld [vmem:[%s2 + $0x328] sm:$0xff]
      %v672 = vld [vmem:[%s2 + $0x330] sm:$0xff]
      %v673 = vld [vmem:[%s2 + $0x338] sm:$0xff]
      %v674 = vld [vmem:[%s2 + $0x340] sm:$0xff]
      %v675 = vld [vmem:[%s2 + $0x348] sm:$0xff]
      %v676 = vld [vmem:[%s2 + $0x350] sm:$0xff]
      %v677 = vld [vmem:[%s2 + $0x358] sm:$0xff]
      %v678 = vld [vmem:[%s2 + $0x360] sm:$0xff]
      %v679 = vld [vmem:[%s2 + $0x368] sm:$0xff]
      %v680 = vld [vmem:[%s2 + $0x370] sm:$0xff]
      %v681 = vld [vmem:[%s2 + $0x378] sm:$0xff]
      %s682 = scalar_lea.vmem %s2, 896
      %v683 = vld [vmem:[%s682] sm:$0xff]
      %v684 = vld [vmem:[%s682 + $0x8] sm:$0xff]
      %v685 = vld [vmem:[%s682 + $0x10] sm:$0xff]
      %v686 = vld [vmem:[%s682 + $0x18] sm:$0xff]
      %v687 = vld [vmem:[%s682 + $0x20] sm:$0xff]
      %v688 = vld [vmem:[%s682 + $0x28] sm:$0xff]
      %v689 = vld [vmem:[%s682 + $0x30] sm:$0xff]
      %v690 = vld [vmem:[%s682 + $0x38] sm:$0xff]
      %v691 = vld [vmem:[%s682 + $0x40] sm:$0xff]
      %v692 = vld [vmem:[%s682 + $0x48] sm:$0xff]
      %v693 = vld [vmem:[%s682 + $0x50] sm:$0xff]
      %v694 = vld [vmem:[%s682 + $0x58] sm:$0xff]
      %v695 = vld [vmem:[%s682 + $0x60] sm:$0xff]
      %v696 = vld [vmem:[%s682 + $0x68] sm:$0xff]
      %v697 = vld [vmem:[%s682 + $0x70] sm:$0xff]
      %v698 = vld [vmem:[%s682 + $0x78] sm:$0xff]
      %v699 = vld [vmem:[%s682 + $0x80] sm:$0xff]
      %v700 = vld [vmem:[%s682 + $0x88] sm:$0xff]
      %v701 = vld [vmem:[%s682 + $0x90] sm:$0xff]
      %v702 = vld [vmem:[%s682 + $0x98] sm:$0xff]
      %v703 = vld [vmem:[%s682 + $0xa0] sm:$0xff]
      %v704 = vld [vmem:[%s682 + $0xa8] sm:$0xff]
      %v705 = vld [vmem:[%s682 + $0xb0] sm:$0xff]
      %v706 = vld [vmem:[%s682 + $0xb8] sm:$0xff]
      %v707 = vld [vmem:[%s682 + $0xc0] sm:$0xff]
      %v708 = vld [vmem:[%s682 + $0xc8] sm:$0xff]
      %v709 = vld [vmem:[%s682 + $0xd0] sm:$0xff]
      %v710 = vld [vmem:[%s682 + $0xd8] sm:$0xff]
      %v711 = vld [vmem:[%s682 + $0xe0] sm:$0xff]
      %v712 = vld [vmem:[%s682 + $0xe8] sm:$0xff]
      %v713 = vld [vmem:[%s682 + $0xf0] sm:$0xff]
      %v714 = vld [vmem:[%s682 + $0xf8] sm:$0xff]
      %v715 = vld [vmem:[%s682 + $0x100] sm:$0xff]
      %v716 = vld [vmem:[%s682 + $0x108] sm:$0xff]
      %v717 = vld [vmem:[%s682 + $0x110] sm:$0xff]
      %v718 = vld [vmem:[%s682 + $0x118] sm:$0xff]
      %v719 = vld [vmem:[%s682 + $0x120] sm:$0xff]
      %v720 = vld [vmem:[%s682 + $0x128] sm:$0xff]
      %v721 = vld [vmem:[%s682 + $0x130] sm:$0xff]
      %v722 = vld [vmem:[%s682 + $0x138] sm:$0xff]
      %v723 = vld [vmem:[%s682 + $0x140] sm:$0xff]
      %v724 = vld [vmem:[%s682 + $0x148] sm:$0xff]
      %v725 = vld [vmem:[%s682 + $0x150] sm:$0xff]
      %v726 = vld [vmem:[%s682 + $0x158] sm:$0xff]
      %v727 = vld [vmem:[%s682 + $0x160] sm:$0xff]
      %v728 = vld [vmem:[%s682 + $0x168] sm:$0xff]
      %v729 = vld [vmem:[%s682 + $0x170] sm:$0xff]
      %v730 = vld [vmem:[%s682 + $0x178] sm:$0xff]
      %v731 = vld [vmem:[%s682 + $0x180] sm:$0xff]
      %v732 = vld [vmem:[%s682 + $0x188] sm:$0xff]
      %v733 = vld [vmem:[%s682 + $0x190] sm:$0xff]
      %v734 = vld [vmem:[%s682 + $0x198] sm:$0xff]
      %v735 = vld [vmem:[%s682 + $0x1a0] sm:$0xff]
      %v736 = vld [vmem:[%s682 + $0x1a8] sm:$0xff]
      %v737 = vld [vmem:[%s682 + $0x1b0] sm:$0xff]
      %v738 = vld [vmem:[%s682 + $0x1b8] sm:$0xff]
      %v739 = vld [vmem:[%s682 + $0x1c0] sm:$0xff]
      %v740 = vld [vmem:[%s682 + $0x1c8] sm:$0xff]
      %v741 = vld [vmem:[%s682 + $0x1d0] sm:$0xff]
      %v742 = vld [vmem:[%s682 + $0x1d8] sm:$0xff]
      %v743 = vld [vmem:[%s682 + $0x1e0] sm:$0xff]
      %v744 = vld [vmem:[%s682 + $0x1e8] sm:$0xff]
      %v745 = vld [vmem:[%s682 + $0x1f0] sm:$0xff]
      %v746 = vld [vmem:[%s682 + $0x1f8] sm:$0xff]
      %v747 = vld [vmem:[%s682 + $0x200] sm:$0xff]
      %v748 = vld [vmem:[%s682 + $0x208] sm:$0xff]
      %v749 = vld [vmem:[%s682 + $0x210] sm:$0xff]
      %v750 = vld [vmem:[%s682 + $0x218] sm:$0xff]
      %v751 = vld [vmem:[%s682 + $0x220] sm:$0xff]
      %v752 = vld [vmem:[%s682 + $0x228] sm:$0xff]
      %v753 = vld [vmem:[%s682 + $0x230] sm:$0xff]
      %v754 = vld [vmem:[%s682 + $0x238] sm:$0xff]
      %v755 = vld [vmem:[%s682 + $0x240] sm:$0xff]
      %v756 = vld [vmem:[%s682 + $0x248] sm:$0xff]
      %v757 = vld [vmem:[%s682 + $0x250] sm:$0xff]
      %v758 = vld [vmem:[%s682 + $0x258] sm:$0xff]
      %v759 = vld [vmem:[%s682 + $0x260] sm:$0xff]
      %v760 = vld [vmem:[%s682 + $0x268] sm:$0xff]
      %v761 = vld [vmem:[%s682 + $0x270] sm:$0xff]
      %v762 = vld [vmem:[%s682 + $0x278] sm:$0xff]
      %v763 = vld [vmem:[%s682 + $0x280] sm:$0xff]
      %v764 = vld [vmem:[%s682 + $0x288] sm:$0xff]
      %v765 = vld [vmem:[%s682 + $0x290] sm:$0xff]
      %v766 = vld [vmem:[%s682 + $0x298] sm:$0xff]
      %v767 = vld [vmem:[%s682 + $0x2a0] sm:$0xff]
      %v768 = vld [vmem:[%s682 + $0x2a8] sm:$0xff]
      %v769 = vld [vmem:[%s682 + $0x2b0] sm:$0xff]
      %v770 = vld [vmem:[%s682 + $0x2b8] sm:$0xff]
      %v771 = vld [vmem:[%s682 + $0x2c0] sm:$0xff]
      %v772 = vld [vmem:[%s682 + $0x2c8] sm:$0xff]
      %v773 = vld [vmem:[%s682 + $0x2d0] sm:$0xff]
      %v774 = vld [vmem:[%s682 + $0x2d8] sm:$0xff]
      %v775 = vld [vmem:[%s682 + $0x2e0] sm:$0xff]
      %v776 = vld [vmem:[%s682 + $0x2e8] sm:$0xff]
      %v777 = vld [vmem:[%s682 + $0x2f0] sm:$0xff]
      %v778 = vld [vmem:[%s682 + $0x2f8] sm:$0xff]
      %v779 = vld [vmem:[%s682 + $0x300] sm:$0xff]
      %v780 = vld [vmem:[%s682 + $0x308] sm:$0xff]
      %v781 = vld [vmem:[%s682 + $0x310] sm:$0xff]
      %v782 = vld [vmem:[%s682 + $0x318] sm:$0xff]
      %v783 = vld [vmem:[%s682 + $0x320] sm:$0xff]
      %v784 = vld [vmem:[%s682 + $0x328] sm:$0xff]
      %v785 = vld [vmem:[%s682 + $0x330] sm:$0xff]
      %v786 = vld [vmem:[%s682 + $0x338] sm:$0xff]
      %v787 = vld [vmem:[%s682 + $0x340] sm:$0xff]
      %v788 = vld [vmem:[%s682 + $0x348] sm:$0xff]
      %v789 = vld [vmem:[%s682 + $0x350] sm:$0xff]
      %v790 = vld [vmem:[%s682 + $0x358] sm:$0xff]
      %v791 = vld [vmem:[%s682 + $0x360] sm:$0xff]
      %v792 = vld [vmem:[%s682 + $0x368] sm:$0xff]
      %v793 = vld [vmem:[%s682 + $0x370] sm:$0xff]
      %v794 = vld [vmem:[%s682 + $0x378] sm:$0xff]
      %vm795 = vcmask 392192
      %v797 = vsel %vm795, %v683, 0
      %v800 = vsel %vm795, %v684, 0
      %v803 = vsel %vm795, %v685, 0
      %v806 = vsel %vm795, %v686, 0
      %v809 = vsel %vm795, %v687, 0
      %v812 = vsel %vm795, %v688, 0
      %v815 = vsel %vm795, %v689, 0
      %v818 = vsel %vm795, %v690, 0
      %v821 = vsel %vm795, %v691, 0
      %v824 = vsel %vm795, %v692, 0
      %v827 = vsel %vm795, %v693, 0
      %v830 = vsel %vm795, %v694, 0
      %v833 = vsel %vm795, %v695, 0
      %v836 = vsel %vm795, %v696, 0
      %v839 = vsel %vm795, %v697, 0
      %v842 = vsel %vm795, %v698, 0
      %v845 = vsel %vm795, %v699, 0
      %v848 = vsel %vm795, %v700, 0
      %v851 = vsel %vm795, %v701, 0
      %v854 = vsel %vm795, %v702, 0
      %v857 = vsel %vm795, %v703, 0
      %v860 = vsel %vm795, %v704, 0
      %v863 = vsel %vm795, %v705, 0
      %v866 = vsel %vm795, %v706, 0
      %v869 = vsel %vm795, %v707, 0
      %v872 = vsel %vm795, %v708, 0
      %v875 = vsel %vm795, %v709, 0
      %v878 = vsel %vm795, %v710, 0
      %v881 = vsel %vm795, %v711, 0
      %v884 = vsel %vm795, %v712, 0
      %v887 = vsel %vm795, %v713, 0
      %v890 = vsel %vm795, %v714, 0
      %v893 = vsel %vm795, %v715, 0
      %v896 = vsel %vm795, %v716, 0
      %v899 = vsel %vm795, %v717, 0
      %v902 = vsel %vm795, %v718, 0
      %v905 = vsel %vm795, %v719, 0
      %v908 = vsel %vm795, %v720, 0
      %v911 = vsel %vm795, %v721, 0
      %v914 = vsel %vm795, %v722, 0
      %v917 = vsel %vm795, %v723, 0
      %v920 = vsel %vm795, %v724, 0
      %v923 = vsel %vm795, %v725, 0
      %v926 = vsel %vm795, %v726, 0
      %v929 = vsel %vm795, %v727, 0
      %v932 = vsel %vm795, %v728, 0
      %v935 = vsel %vm795, %v729, 0
      %v938 = vsel %vm795, %v730, 0
      %v941 = vsel %vm795, %v731, 0
      %v944 = vsel %vm795, %v732, 0
      %v947 = vsel %vm795, %v733, 0
      %v950 = vsel %vm795, %v734, 0
      %v953 = vsel %vm795, %v735, 0
      %v956 = vsel %vm795, %v736, 0
      %v959 = vsel %vm795, %v737, 0
      %v962 = vsel %vm795, %v738, 0
      %v965 = vsel %vm795, %v739, 0
      %v968 = vsel %vm795, %v740, 0
      %v971 = vsel %vm795, %v741, 0
      %v974 = vsel %vm795, %v742, 0
      %v977 = vsel %vm795, %v743, 0
      %v980 = vsel %vm795, %v744, 0
      %v983 = vsel %vm795, %v745, 0
      %v986 = vsel %vm795, %v746, 0
      %v989 = vsel %vm795, %v747, 0
      %v992 = vsel %vm795, %v748, 0
      %v995 = vsel %vm795, %v749, 0
      %v998 = vsel %vm795, %v750, 0
      %v1001 = vsel %vm795, %v751, 0
      %v1004 = vsel %vm795, %v752, 0
      %v1007 = vsel %vm795, %v753, 0
      %v1010 = vsel %vm795, %v754, 0
      %v1013 = vsel %vm795, %v755, 0
      %v1016 = vsel %vm795, %v756, 0
      %v1019 = vsel %vm795, %v757, 0
      %v1022 = vsel %vm795, %v758, 0
      %v1025 = vsel %vm795, %v759, 0
      %v1028 = vsel %vm795, %v760, 0
      %v1031 = vsel %vm795, %v761, 0
      %v1034 = vsel %vm795, %v762, 0
      %v1037 = vsel %vm795, %v763, 0
      %v1040 = vsel %vm795, %v764, 0
      %v1043 = vsel %vm795, %v765, 0
      %v1046 = vsel %vm795, %v766, 0
      %v1049 = vsel %vm795, %v767, 0
      %v1052 = vsel %vm795, %v768, 0
      %v1055 = vsel %vm795, %v769, 0
      %v1058 = vsel %vm795, %v770, 0
      %v1061 = vsel %vm795, %v771, 0
      %v1064 = vsel %vm795, %v772, 0
      %v1067 = vsel %vm795, %v773, 0
      %v1070 = vsel %vm795, %v774, 0
      %v1073 = vsel %vm795, %v775, 0
      %v1076 = vsel %vm795, %v776, 0
      %v1079 = vsel %vm795, %v777, 0
      %v1082 = vsel %vm795, %v778, 0
      %v1085 = vsel %vm795, %v779, 0
      %v1088 = vsel %vm795, %v780, 0
      %v1091 = vsel %vm795, %v781, 0
      %v1094 = vsel %vm795, %v782, 0
      %v1097 = vsel %vm795, %v783, 0
      %v1100 = vsel %vm795, %v784, 0
      %v1103 = vsel %vm795, %v785, 0
      %v1106 = vsel %vm795, %v786, 0
      %v1109 = vsel %vm795, %v787, 0
      %v1112 = vsel %vm795, %v788, 0
      %v1115 = vsel %vm795, %v789, 0
      %v1118 = vsel %vm795, %v790, 0
      %v1121 = vsel %vm795, %v791, 0
      %v1124 = vsel %vm795, %v792, 0
      %v1127 = vsel %vm795, %v793, 0
      %v1130 = vsel %vm795, %v794, 0
      %1132 = vmatprep.subr.mxu0 0.0
      %1133 = vmatpush1.msra.mxu0 %v444
      %1134 = vmatprep.subr.mxu0 0.0
      %1135 = vmatpush1.msra.mxu0 %v449
      %1136 = vmatprep.subr.mxu0 0.0
      %1137 = vmatpush1.msra.mxu0 %v454
      %1138 = vmatprep.subr.mxu0 0.0
      %1139 = vmatpush1.msra.mxu0 %v459
      %1140 = vmatprep.subr.mxu0 0.0
      %1141 = vmatpush1.msra.mxu0 %v464
      %1142 = vmatprep.subr.mxu0 0.0
      %1143 = vmatpush1.msra.mxu0 %v469
      %1144 = vmatprep.subr.mxu0 0.0
      %1145 = vmatpush1.msra.mxu0 0.0
      %1146 = vmatprep.subr.mxu0 0.0
      %1147 = vmatpush1.msra.mxu0 0.0
      %1148 = vmatprep.subr.mxu0 0.0
      %1149 = vmatpush1.msra.mxu0 0.0
      %1150 = vmatprep.subr.mxu0 0.0
      %1151 = vmatpush1.msra.mxu0 0.0
      %1152 = vmatprep.subr.mxu0 0.0
      %1153 = vmatpush1.msra.mxu0 0.0
      %1154 = vmatprep.subr.mxu0 0.0
      %1155 = vmatpush1.msra.mxu0 0.0
      %1156 = vmatprep.subr.mxu0 0.0
      %1157 = vmatpush1.msra.mxu0 0.0
      %1158 = vmatprep.subr.mxu0 0.0
      %1159 = vmatpush1.msra.mxu0 0.0
      %1160 = vmatprep.subr.mxu0 0.0
      %1161 = vmatpush1.msra.mxu0 0.0
      %1162 = vmatprep.subr.mxu0 0.0
      %1163 = vmatpush1.msra.mxu0 0.0
      %1164 = vmatprep.subr.mxu0 0.0
      %1165 = vmatpush1.msra.mxu0 0.0
      %1166 = vmatprep.subr.mxu0 0.0
      %1167 = vmatpush1.msra.mxu0 0.0
      %1168 = vmatprep.subr.mxu0 0.0
      %1169 = vmatpush1.msra.mxu0 0.0
      %1170 = vmatprep.subr.mxu0 0.0
      %1171 = vmatpush1.msra.mxu0 0.0
      %1172 = vmatprep.subr.mxu0 0.0
      %1173 = vmatpush1.msra.mxu0 0.0
      %1174 = vmatprep.subr.mxu0 0.0
      %1175 = vmatpush1.msra.mxu0 0.0
      %1176 = vmatprep.subr.mxu0 0.0
      %1177 = vmatpush1.msra.mxu0 0.0
      %1178 = vmatprep.subr.mxu0 0.0
      %1179 = vmatpush1.msra.mxu0 0.0
      %1180 = vmatprep.subr.mxu0 0.0
      %1181 = vmatpush1.msra.mxu0 0.0
      %1182 = vmatprep.subr.mxu0 0.0
      %1183 = vmatpush1.msra.mxu0 0.0
      %1184 = vmatprep.subr.mxu0 0.0
      %1185 = vmatpush1.msra.mxu0 0.0
      %1186 = vmatprep.subr.mxu0 0.0
      %1187 = vmatpush1.msra.mxu0 0.0
      %1188 = vmatprep.subr.mxu0 0.0
      %1189 = vmatpush1.msra.mxu0 0.0
      %1190 = vmatprep.subr.mxu0 0.0
      %1191 = vmatpush1.msra.mxu0 0.0
      %1192 = vmatprep.subr.mxu0 0.0
      %1193 = vmatpush1.msra.mxu0 0.0
      %1194 = vmatprep.subr.mxu0 0.0
      %1195 = vmatpush1.msra.mxu0 0.0
      %1196 = vmatprep.mubr.f32.mxu0 0.0
      %1197 = vmatmul.mubr.f32.gmra.mrb[0].mxu0 %v797
      %v1198 = vpop.f32.mrb[0].mxu0
      %v1199 = vadd.f32 0.0, %v1198
      %v1200 = vpop.f32.mrb[0].mxu0
      %1201 = vmatprep.mubr.f32.mxu0 0.0
      %1202 = vmatmul.mubr.f32.gmra.mrb[0].mxu0 %v800
      %v1203 = vpop.f32.mrb[0].mxu0
      %v1204 = vadd.f32 0.0, %v1203
      %v1205 = vpop.f32.mrb[0].mxu0
      %1206 = vmatprep.mubr.f32.mxu0 0.0
      %1207 = vmatmul.mubr.f32.gmra.mrb[0].mxu0 %v803
      %v1208 = vpop.f32.mrb[0].mxu0
      %v1209 = vadd.f32 0.0, %v1208
      %v1210 = vpop.f32.mrb[0].mxu0
      %1211 = vmatprep.mubr.f32.mxu0 0.0
      %1212 = vmatmul.mubr.f32.gmra.mrb[0].mxu0 %v806
      %v1213 = vpop.f32.mrb[0].mxu0
      %v1214 = vadd.f32 0.0, %v1213
      %v1215 = vpop.f32.mrb[0].mxu0
      %1216 = vmatprep.mubr.f32.mxu0 0.0
      %1217 = vmatmul.mubr.f32.gmra.mrb[0].mxu0 %v809
      %v1218 = vpop.f32.mrb[0].mxu0
      %v1219 = vadd.f32 0.0, %v1218
      %v1220 = vpop.f32.mrb[0].mxu0
      %1221 = vmatprep.mubr.f32.mxu0 0.0
      %1222 = vmatmul.mubr.f32.gmra.mrb[0].mxu0 %v812
      %v1223 = vpop.f32.mrb[0].mxu0
      %v1224 = vadd.f32 0.0, %v1223
      %v1225 = vpop.f32.mrb[0].mxu0
      %1226 = vmatprep.mubr.f32.mxu0 0.0
      %1227 = vmatmul.mubr.f32.gmra.mrb[0].mxu0 %v815
      %v1228 = vpop.f32.mrb[0].mxu0
      %v1229 = vadd.f32 0.0, %v1228
      %v1230 = vpop.f32.mrb[0].mxu0
      %1231 = vmatprep.mubr.f32.mxu0 0.0
      %1232 = vmatmul.mubr.f32.gmra.mrb[0].mxu0 %v818
      %v1233 = vpop.f32.mrb[0].mxu0
      %v1234 = vadd.f32 0.0, %v1233
      %v1235 = vpop.f32.mrb[0].mxu0
      %1236 = vmatprep.mubr.f32.mxu0 0.0
      %1237 = vmatmul.mubr.f32.gmra.mrb[0].mxu0 %v821
      %v1238 = vpop.f32.mrb[0].mxu0
      %v1239 = vadd.f32 0.0, %v1238
      %v1240 = vpop.f32.mrb[0].mxu0
      %1241 = vmatprep.mubr.f32.mxu0 0.0
      %1242 = vmatmul.mubr.f32.gmra.mrb[0].mxu0 %v824
      %v1243 = vpop.f32.mrb[0].mxu0
      %v1244 = vadd.f32 0.0, %v1243
      %v1245 = vpop.f32.mrb[0].mxu0
      %1246 = vmatprep.mubr.f32.mxu0 0.0
      %1247 = vmatmul.mubr.f32.gmra.mrb[0].mxu0 %v827
      %v1248 = vpop.f32.mrb[0].mxu0
      %v1249 = vadd.f32 0.0, %v1248
      %v1250 = vpop.f32.mrb[0].mxu0
      %1251 = vmatprep.mubr.f32.mxu0 0.0
      %1252 = vmatmul.mubr.f32.gmra.mrb[0].mxu0 %v830
      %v1253 = vpop.f32.mrb[0].mxu0
      %v1254 = vadd.f32 0.0, %v1253
      %v1255 = vpop.f32.mrb[0].mxu0
      %1256 = vmatprep.mubr.f32.mxu0 0.0
      %1257 = vmatmul.mubr.f32.gmra.mrb[0].mxu0 %v833
      %v1258 = vpop.f32.mrb[0].mxu0
      %v1259 = vadd.f32 0.0, %v1258
      %v1260 = vpop.f32.mrb[0].mxu0
      %1261 = vmatprep.mubr.f32.mxu0 0.0
      %1262 = vmatmul.mubr.f32.gmra.mrb[0].mxu0 %v836
      %v1263 = vpop.f32.mrb[0].mxu0
      %v1264 = vadd.f32 0.0, %v1263
      %v1265 = vpop.f32.mrb[0].mxu0
      %1266 = vmatprep.mubr.f32.mxu0 0.0
      %1267 = vmatmul.mubr.f32.gmra.mrb[0].mxu0 %v839
      %v1268 = vpop.f32.mrb[0].mxu0
      %v1269 = vadd.f32 0.0, %v1268
      %v1270 = vpop.f32.mrb[0].mxu0
      %1271 = vmatprep.mubr.f32.mxu0 0.0
      %1272 = vmatmul.mubr.f32.gmra.mrb[0].mxu0 %v842
      %v1273 = vpop.f32.mrb[0].mxu0
      %v1274 = vadd.f32 0.0, %v1273
      %v1275 = vpop.f32.mrb[0].mxu0
      %1276 = vmatprep.mubr.f32.mxu0 0.0
      %1277 = vmatmul.mubr.f32.gmra.mrb[0].mxu0 %v845
      %v1278 = vpop.f32.mrb[0].mxu0
      %v1279 = vadd.f32 0.0, %v1278
      %v1280 = vpop.f32.mrb[0].mxu0
      %1281 = vmatprep.mubr.f32.mxu0 0.0
      %1282 = vmatmul.mubr.f32.gmra.mrb[0].mxu0 %v848
      %v1283 = vpop.f32.mrb[0].mxu0
      %v1284 = vadd.f32 0.0, %v1283
      %v1285 = vpop.f32.mrb[0].mxu0
      %1286 = vmatprep.mubr.f32.mxu0 0.0
      %1287 = vmatmul.mubr.f32.gmra.mrb[0].mxu0 %v851
      %v1288 = vpop.f32.mrb[0].mxu0
      %v1289 = vadd.f32 0.0, %v1288
      %v1290 = vpop.f32.mrb[0].mxu0
      %1291 = vmatprep.mubr.f32.mxu0 0.0
      %1292 = vmatmul.mubr.f32.gmra.mrb[0].mxu0 %v854
      %v1293 = vpop.f32.mrb[0].mxu0
      %v1294 = vadd.f32 0.0, %v1293
      %v1295 = vpop.f32.mrb[0].mxu0
      %1296 = vmatprep.mubr.f32.mxu0 0.0
      %1297 = vmatmul.mubr.f32.gmra.mrb[0].mxu0 %v857
      %v1298 = vpop.f32.mrb[0].mxu0
      %v1299 = vadd.f32 0.0, %v1298
      %v1300 = vpop.f32.mrb[0].mxu0
      %1301 = vmatprep.mubr.f32.mxu0 0.0
      %1302 = vmatmul.mubr.f32.gmra.mrb[0].mxu0 %v860
      %v1303 = vpop.f32.mrb[0].mxu0
      %v1304 = vadd.f32 0.0, %v1303
      %v1305 = vpop.f32.mrb[0].mxu0
      %1306 = vmatprep.mubr.f32.mxu0 0.0
      %1307 = vmatmul.mubr.f32.gmra.mrb[0].mxu0 %v863
      %v1308 = vpop.f32.mrb[0].mxu0
      %v1309 = vadd.f32 0.0, %v1308
      %v1310 = vpop.f32.mrb[0].mxu0
      %1311 = vmatprep.mubr.f32.mxu0 0.0
      %1312 = vmatmul.mubr.f32.gmra.mrb[0].mxu0 %v866
      %v1313 = vpop.f32.mrb[0].mxu0
      %v1314 = vadd.f32 0.0, %v1313
      %v1315 = vpop.f32.mrb[0].mxu0
      %1316 = vmatprep.mubr.f32.mxu0 0.0
      %1317 = vmatmul.mubr.f32.gmra.mrb[0].mxu0 %v869
      %v1318 = vpop.f32.mrb[0].mxu0
      %v1319 = vadd.f32 0.0, %v1318
      %v1320 = vpop.f32.mrb[0].mxu0
      %1321 = vmatprep.mubr.f32.mxu0 0.0
      %1322 = vmatmul.mubr.f32.gmra.mrb[0].mxu0 %v872
      %v1323 = vpop.f32.mrb[0].mxu0
      %v1324 = vadd.f32 0.0, %v1323
      %v1325 = vpop.f32.mrb[0].mxu0
      %1326 = vmatprep.mubr.f32.mxu0 0.0
      %1327 = vmatmul.mubr.f32.gmra.mrb[0].mxu0 %v875
      %v1328 = vpop.f32.mrb[0].mxu0
      %v1329 = vadd.f32 0.0, %v1328
      %v1330 = vpop.f32.mrb[0].mxu0
      %1331 = vmatprep.mubr.f32.mxu0 0.0
      %1332 = vmatmul.mubr.f32.gmra.mrb[0].mxu0 %v878
      %v1333 = vpop.f32.mrb[0].mxu0
      %v1334 = vadd.f32 0.0, %v1333
      %v1335 = vpop.f32.mrb[0].mxu0
      %1336 = vmatprep.mubr.f32.mxu0 0.0
      %1337 = vmatmul.mubr.f32.gmra.mrb[0].mxu0 %v881
      %v1338 = vpop.f32.mrb[0].mxu0
      %v1339 = vadd.f32 0.0, %v1338
      %v1340 = vpop.f32.mrb[0].mxu0
      %1341 = vmatprep.mubr.f32.mxu0 0.0
      %1342 = vmatmul.mubr.f32.gmra.mrb[0].mxu0 %v884
      %v1343 = vpop.f32.mrb[0].mxu0
      %v1344 = vadd.f32 0.0, %v1343
      %v1345 = vpop.f32.mrb[0].mxu0
      %1346 = vmatprep.mubr.f32.mxu0 0.0
      %1347 = vmatmul.mubr.f32.gmra.mrb[0].mxu0 %v887
      %v1348 = vpop.f32.mrb[0].mxu0
      %v1349 = vadd.f32 0.0, %v1348
      %v1350 = vpop.f32.mrb[0].mxu0
      %1351 = vmatprep.mubr.f32.mxu0 0.0
      %1352 = vmatmul.mubr.f32.gmra.mrb[0].mxu0 %v890
      %v1353 = vpop.f32.mrb[0].mxu0
      %v1354 = vadd.f32 0.0, %v1353
      %v1355 = vpop.f32.mrb[0].mxu0
      %1356 = vmatprep.mubr.f32.mxu0 0.0
      %1357 = vmatmul.mubr.f32.gmra.mrb[0].mxu0 %v893
      %v1358 = vpop.f32.mrb[0].mxu0
      %v1359 = vadd.f32 0.0, %v1358
      %v1360 = vpop.f32.mrb[0].mxu0
      %1361 = vmatprep.mubr.f32.mxu0 0.0
      %1362 = vmatmul.mubr.f32.gmra.mrb[0].mxu0 %v896
      %v1363 = vpop.f32.mrb[0].mxu0
      %v1364 = vadd.f32 0.0, %v1363
      %v1365 = vpop.f32.mrb[0].mxu0
      %1366 = vmatprep.mubr.f32.mxu0 0.0
      %1367 = vmatmul.mubr.f32.gmra.mrb[0].mxu0 %v899
      %v1368 = vpop.f32.mrb[0].mxu0
      %v1369 = vadd.f32 0.0, %v1368
      %v1370 = vpop.f32.mrb[0].mxu0
      %1371 = vmatprep.mubr.f32.mxu0 0.0
      %1372 = vmatmul.mubr.f32.gmra.mrb[0].mxu0 %v902
      %v1373 = vpop.f32.mrb[0].mxu0
      %v1374 = vadd.f32 0.0, %v1373
      %v1375 = vpop.f32.mrb[0].mxu0
      %1376 = vmatprep.mubr.f32.mxu0 0.0
      %1377 = vmatmul.mubr.f32.gmra.mrb[0].mxu0 %v905
      %v1378 = vpop.f32.mrb[0].mxu0
      %v1379 = vadd.f32 0.0, %v1378
      %v1380 = vpop.f32.mrb[0].mxu0
      %1381 = vmatprep.mubr.f32.mxu0 0.0
      %1382 = vmatmul.mubr.f32.gmra.mrb[0].mxu0 %v908
      %v1383 = vpop.f32.mrb[0].mxu0
      %v1384 = vadd.f32 0.0, %v1383
      %v1385 = vpop.f32.mrb[0].mxu0
      %1386 = vmatprep.mubr.f32.mxu0 0.0
      %1387 = vmatmul.mubr.f32.gmra.mrb[0].mxu0 %v911
      %v1388 = vpop.f32.mrb[0].mxu0
      %v1389 = vadd.f32 0.0, %v1388
      %v1390 = vpop.f32.mrb[0].mxu0
      %1391 = vmatprep.mubr.f32.mxu0 0.0
      %1392 = vmatmul.mubr.f32.gmra.mrb[0].mxu0 %v914
      %v1393 = vpop.f32.mrb[0].mxu0
      %v1394 = vadd.f32 0.0, %v1393
      %v1395 = vpop.f32.mrb[0].mxu0
      %1396 = vmatprep.mubr.f32.mxu0 0.0
      %1397 = vmatmul.mubr.f32.gmra.mrb[0].mxu0 %v917
      %v1398 = vpop.f32.mrb[0].mxu0
      %v1399 = vadd.f32 0.0, %v1398
      %v1400 = vpop.f32.mrb[0].mxu0
      %1401 = vmatprep.mubr.f32.mxu0 0.0
      %1402 = vmatmul.mubr.f32.gmra.mrb[0].mxu0 %v920
      %v1403 = vpop.f32.mrb[0].mxu0
      %v1404 = vadd.f32 0.0, %v1403
      %v1405 = vpop.f32.mrb[0].mxu0
      %1406 = vmatprep.mubr.f32.mxu0 0.0
      %1407 = vmatmul.mubr.f32.gmra.mrb[0].mxu0 %v923
      %v1408 = vpop.f32.mrb[0].mxu0
      %v1409 = vadd.f32 0.0, %v1408
      %v1410 = vpop.f32.mrb[0].mxu0
      %1411 = vmatprep.mubr.f32.mxu0 0.0
      %1412 = vmatmul.mubr.f32.gmra.mrb[0].mxu0 %v926
      %v1413 = vpop.f32.mrb[0].mxu0
      %v1414 = vadd.f32 0.0, %v1413
      %v1415 = vpop.f32.mrb[0].mxu0
      %1416 = vmatprep.mubr.f32.mxu0 0.0
      %1417 = vmatmul.mubr.f32.gmra.mrb[0].mxu0 %v929
      %v1418 = vpop.f32.mrb[0].mxu0
      %v1419 = vadd.f32 0.0, %v1418
      %v1420 = vpop.f32.mrb[0].mxu0
      %1421 = vmatprep.mubr.f32.mxu0 0.0
      %1422 = vmatmul.mubr.f32.gmra.mrb[0].mxu0 %v932
      %v1423 = vpop.f32.mrb[0].mxu0
      %v1424 = vadd.f32 0.0, %v1423
      %v1425 = vpop.f32.mrb[0].mxu0
      %1426 = vmatprep.mubr.f32.mxu0 0.0
      %1427 = vmatmul.mubr.f32.gmra.mrb[0].mxu0 %v935
      %v1428 = vpop.f32.mrb[0].mxu0
      %v1429 = vadd.f32 0.0, %v1428
      %v1430 = vpop.f32.mrb[0].mxu0
      %1431 = vmatprep.mubr.f32.mxu0 0.0
      %1432 = vmatmul.mubr.f32.gmra.mrb[0].mxu0 %v938
      %v1433 = vpop.f32.mrb[0].mxu0
      %v1434 = vadd.f32 0.0, %v1433
      %v1435 = vpop.f32.mrb[0].mxu0
      %1436 = vmatprep.mubr.f32.mxu0 0.0
      %1437 = vmatmul.mubr.f32.gmra.mrb[0].mxu0 %v941
      %v1438 = vpop.f32.mrb[0].mxu0
      %v1439 = vadd.f32 0.0, %v1438
      %v1440 = vpop.f32.mrb[0].mxu0
      %1441 = vmatprep.mubr.f32.mxu0 0.0
      %1442 = vmatmul.mubr.f32.gmra.mrb[0].mxu0 %v944
      %v1443 = vpop.f32.mrb[0].mxu0
      %v1444 = vadd.f32 0.0, %v1443
      %v1445 = vpop.f32.mrb[0].mxu0
      %1446 = vmatprep.mubr.f32.mxu0 0.0
      %1447 = vmatmul.mubr.f32.gmra.mrb[0].mxu0 %v947
      %v1448 = vpop.f32.mrb[0].mxu0
      %v1449 = vadd.f32 0.0, %v1448
      %v1450 = vpop.f32.mrb[0].mxu0
      %1451 = vmatprep.mubr.f32.mxu0 0.0
      %1452 = vmatmul.mubr.f32.gmra.mrb[0].mxu0 %v950
      %v1453 = vpop.f32.mrb[0].mxu0
      %v1454 = vadd.f32 0.0, %v1453
      %v1455 = vpop.f32.mrb[0].mxu0
      %1456 = vmatprep.mubr.f32.mxu0 0.0
      %1457 = vmatmul.mubr.f32.gmra.mrb[0].mxu0 %v953
      %v1458 = vpop.f32.mrb[0].mxu0
      %v1459 = vadd.f32 0.0, %v1458
      %v1460 = vpop.f32.mrb[0].mxu0
      %1461 = vmatprep.mubr.f32.mxu0 0.0
      %1462 = vmatmul.mubr.f32.gmra.mrb[0].mxu0 %v956
      %v1463 = vpop.f32.mrb[0].mxu0
      %v1464 = vadd.f32 0.0, %v1463
      %v1465 = vpop.f32.mrb[0].mxu0
      %1466 = vmatprep.mubr.f32.mxu0 0.0
      %1467 = vmatmul.mubr.f32.gmra.mrb[0].mxu0 %v959
      %v1468 = vpop.f32.mrb[0].mxu0
      %v1469 = vadd.f32 0.0, %v1468
      %v1470 = vpop.f32.mrb[0].mxu0
      %1471 = vmatprep.mubr.f32.mxu0 0.0
      %1472 = vmatmul.mubr.f32.gmra.mrb[0].mxu0 %v962
      %v1473 = vpop.f32.mrb[0].mxu0
      %v1474 = vadd.f32 0.0, %v1473
      %v1475 = vpop.f32.mrb[0].mxu0
      %1476 = vmatprep.mubr.f32.mxu0 0.0
      %1477 = vmatmul.mubr.f32.gmra.mrb[0].mxu0 %v965
      %v1478 = vpop.f32.mrb[0].mxu0
      %v1479 = vadd.f32 0.0, %v1478
      %v1480 = vpop.f32.mrb[0].mxu0
      %1481 = vmatprep.mubr.f32.mxu0 0.0
      %1482 = vmatmul.mubr.f32.gmra.mrb[0].mxu0 %v968
      %v1483 = vpop.f32.mrb[0].mxu0
      %v1484 = vadd.f32 0.0, %v1483
      %v1485 = vpop.f32.mrb[0].mxu0
      %1486 = vmatprep.mubr.f32.mxu0 0.0
      %1487 = vmatmul.mubr.f32.gmra.mrb[0].mxu0 %v971
      %v1488 = vpop.f32.mrb[0].mxu0
      %v1489 = vadd.f32 0.0, %v1488
      %v1490 = vpop.f32.mrb[0].mxu0
      %1491 = vmatprep.mubr.f32.mxu0 0.0
      %1492 = vmatmul.mubr.f32.gmra.mrb[0].mxu0 %v974
      %v1493 = vpop.f32.mrb[0].mxu0
      %v1494 = vadd.f32 0.0, %v1493
      %v1495 = vpop.f32.mrb[0].mxu0
      %1496 = vmatprep.mubr.f32.mxu0 0.0
      %1497 = vmatmul.mubr.f32.gmra.mrb[0].mxu0 %v977
      %v1498 = vpop.f32.mrb[0].mxu0
      %v1499 = vadd.f32 0.0, %v1498
      %v1500 = vpop.f32.mrb[0].mxu0
      %1501 = vmatprep.mubr.f32.mxu0 0.0
      %1502 = vmatmul.mubr.f32.gmra.mrb[0].mxu0 %v980
      %v1503 = vpop.f32.mrb[0].mxu0
      %v1504 = vadd.f32 0.0, %v1503
      %v1505 = vpop.f32.mrb[0].mxu0
      %1506 = vmatprep.mubr.f32.mxu0 0.0
      %1507 = vmatmul.mubr.f32.gmra.mrb[0].mxu0 %v983
      %v1508 = vpop.f32.mrb[0].mxu0
      %v1509 = vadd.f32 0.0, %v1508
      %v1510 = vpop.f32.mrb[0].mxu0
      %1511 = vmatprep.mubr.f32.mxu0 0.0
      %1512 = vmatmul.mubr.f32.gmra.mrb[0].mxu0 %v986
      %v1513 = vpop.f32.mrb[0].mxu0
      %v1514 = vadd.f32 0.0, %v1513
      %v1515 = vpop.f32.mrb[0].mxu0
      %1516 = vmatprep.mubr.f32.mxu0 0.0
      %1517 = vmatmul.mubr.f32.gmra.mrb[0].mxu0 %v989
      %v1518 = vpop.f32.mrb[0].mxu0
      %v1519 = vadd.f32 0.0, %v1518
      %v1520 = vpop.f32.mrb[0].mxu0
      %1521 = vmatprep.mubr.f32.mxu0 0.0
      %1522 = vmatmul.mubr.f32.gmra.mrb[0].mxu0 %v992
      %v1523 = vpop.f32.mrb[0].mxu0
      %v1524 = vadd.f32 0.0, %v1523
      %v1525 = vpop.f32.mrb[0].mxu0
      %1526 = vmatprep.mubr.f32.mxu0 0.0
      %1527 = vmatmul.mubr.f32.gmra.mrb[0].mxu0 %v995
      %v1528 = vpop.f32.mrb[0].mxu0
      %v1529 = vadd.f32 0.0, %v1528
      %v1530 = vpop.f32.mrb[0].mxu0
      %1531 = vmatprep.mubr.f32.mxu0 0.0
      %1532 = vmatmul.mubr.f32.gmra.mrb[0].mxu0 %v998
      %v1533 = vpop.f32.mrb[0].mxu0
      %v1534 = vadd.f32 0.0, %v1533
      %v1535 = vpop.f32.mrb[0].mxu0
      %1536 = vmatprep.mubr.f32.mxu0 0.0
      %1537 = vmatmul.mubr.f32.gmra.mrb[0].mxu0 %v1001
      %v1538 = vpop.f32.mrb[0].mxu0
      %v1539 = vadd.f32 0.0, %v1538
      %v1540 = vpop.f32.mrb[0].mxu0
      %1541 = vmatprep.mubr.f32.mxu0 0.0
      %1542 = vmatmul.mubr.f32.gmra.mrb[0].mxu0 %v1004
      %v1543 = vpop.f32.mrb[0].mxu0
      %v1544 = vadd.f32 0.0, %v1543
      %v1545 = vpop.f32.mrb[0].mxu0
      %1546 = vmatprep.mubr.f32.mxu0 0.0
      %1547 = vmatmul.mubr.f32.gmra.mrb[0].mxu0 %v1007
      %v1548 = vpop.f32.mrb[0].mxu0
      %v1549 = vadd.f32 0.0, %v1548
      %v1550 = vpop.f32.mrb[0].mxu0
      %1551 = vmatprep.mubr.f32.mxu0 0.0
      %1552 = vmatmul.mubr.f32.gmra.mrb[0].mxu0 %v1010
      %v1553 = vpop.f32.mrb[0].mxu0
      %v1554 = vadd.f32 0.0, %v1553
      %v1555 = vpop.f32.mrb[0].mxu0
      %1556 = vmatprep.mubr.f32.mxu0 0.0
      %1557 = vmatmul.mubr.f32.gmra.mrb[0].mxu0 %v1013
      %v1558 = vpop.f32.mrb[0].mxu0
      %v1559 = vadd.f32 0.0, %v1558
      %v1560 = vpop.f32.mrb[0].mxu0
      %1561 = vmatprep.mubr.f32.mxu0 0.0
      %1562 = vmatmul.mubr.f32.gmra.mrb[0].mxu0 %v1016
      %v1563 = vpop.f32.mrb[0].mxu0
      %v1564 = vadd.f32 0.0, %v1563
      %v1565 = vpop.f32.mrb[0].mxu0
      %1566 = vmatprep.mubr.f32.mxu0 0.0
      %1567 = vmatmul.mubr.f32.gmra.mrb[0].mxu0 %v1019
      %v1568 = vpop.f32.mrb[0].mxu0
      %v1569 = vadd.f32 0.0, %v1568
      %v1570 = vpop.f32.mrb[0].mxu0
      %1571 = vmatprep.mubr.f32.mxu0 0.0
      %1572 = vmatmul.mubr.f32.gmra.mrb[0].mxu0 %v1022
      %v1573 = vpop.f32.mrb[0].mxu0
      %v1574 = vadd.f32 0.0, %v1573
      %v1575 = vpop.f32.mrb[0].mxu0
      %1576 = vmatprep.mubr.f32.mxu0 0.0
      %1577 = vmatmul.mubr.f32.gmra.mrb[0].mxu0 %v1025
      %v1578 = vpop.f32.mrb[0].mxu0
      %v1579 = vadd.f32 0.0, %v1578
      %v1580 = vpop.f32.mrb[0].mxu0
      %1581 = vmatprep.mubr.f32.mxu0 0.0
      %1582 = vmatmul.mubr.f32.gmra.mrb[0].mxu0 %v1028
      %v1583 = vpop.f32.mrb[0].mxu0
      %v1584 = vadd.f32 0.0, %v1583
      %v1585 = vpop.f32.mrb[0].mxu0
      %1586 = vmatprep.mubr.f32.mxu0 0.0
      %1587 = vmatmul.mubr.f32.gmra.mrb[0].mxu0 %v1031
      %v1588 = vpop.f32.mrb[0].mxu0
      %v1589 = vadd.f32 0.0, %v1588
      %v1590 = vpop.f32.mrb[0].mxu0
      %1591 = vmatprep.mubr.f32.mxu0 0.0
      %1592 = vmatmul.mubr.f32.gmra.mrb[0].mxu0 %v1034
      %v1593 = vpop.f32.mrb[0].mxu0
      %v1594 = vadd.f32 0.0, %v1593
      %v1595 = vpop.f32.mrb[0].mxu0
      %1596 = vmatprep.mubr.f32.mxu0 0.0
      %1597 = vmatmul.mubr.f32.gmra.mrb[0].mxu0 %v1037
      %v1598 = vpop.f32.mrb[0].mxu0
      %v1599 = vadd.f32 0.0, %v1598
      %v1600 = vpop.f32.mrb[0].mxu0
      %1601 = vmatprep.mubr.f32.mxu0 0.0
      %1602 = vmatmul.mubr.f32.gmra.mrb[0].mxu0 %v1040
      %v1603 = vpop.f32.mrb[0].mxu0
      %v1604 = vadd.f32 0.0, %v1603
      %v1605 = vpop.f32.mrb[0].mxu0
      %1606 = vmatprep.mubr.f32.mxu0 0.0
      %1607 = vmatmul.mubr.f32.gmra.mrb[0].mxu0 %v1043
      %v1608 = vpop.f32.mrb[0].mxu0
      %v1609 = vadd.f32 0.0, %v1608
      %v1610 = vpop.f32.mrb[0].mxu0
      %1611 = vmatprep.mubr.f32.mxu0 0.0
      %1612 = vmatmul.mubr.f32.gmra.mrb[0].mxu0 %v1046
      %v1613 = vpop.f32.mrb[0].mxu0
      %v1614 = vadd.f32 0.0, %v1613
      %v1615 = vpop.f32.mrb[0].mxu0
      %1616 = vmatprep.mubr.f32.mxu0 0.0
      %1617 = vmatmul.mubr.f32.gmra.mrb[0].mxu0 %v1049
      %v1618 = vpop.f32.mrb[0].mxu0
      %v1619 = vadd.f32 0.0, %v1618
      %v1620 = vpop.f32.mrb[0].mxu0
      %1621 = vmatprep.mubr.f32.mxu0 0.0
      %1622 = vmatmul.mubr.f32.gmra.mrb[0].mxu0 %v1052
      %v1623 = vpop.f32.mrb[0].mxu0
      %v1624 = vadd.f32 0.0, %v1623
      %v1625 = vpop.f32.mrb[0].mxu0
      %1626 = vmatprep.mubr.f32.mxu0 0.0
      %1627 = vmatmul.mubr.f32.gmra.mrb[0].mxu0 %v1055
      %v1628 = vpop.f32.mrb[0].mxu0
      %v1629 = vadd.f32 0.0, %v1628
      %v1630 = vpop.f32.mrb[0].mxu0
      %1631 = vmatprep.mubr.f32.mxu0 0.0
      %1632 = vmatmul.mubr.f32.gmra.mrb[0].mxu0 %v1058
      %v1633 = vpop.f32.mrb[0].mxu0
      %v1634 = vadd.f32 0.0, %v1633
      %v1635 = vpop.f32.mrb[0].mxu0
      %1636 = vmatprep.mubr.f32.mxu0 0.0
      %1637 = vmatmul.mubr.f32.gmra.mrb[0].mxu0 %v1061
      %v1638 = vpop.f32.mrb[0].mxu0
      %v1639 = vadd.f32 0.0, %v1638
      %v1640 = vpop.f32.mrb[0].mxu0
      %1641 = vmatprep.mubr.f32.mxu0 0.0
      %1642 = vmatmul.mubr.f32.gmra.mrb[0].mxu0 %v1064
      %v1643 = vpop.f32.mrb[0].mxu0
      %v1644 = vadd.f32 0.0, %v1643
      %v1645 = vpop.f32.mrb[0].mxu0
      %1646 = vmatprep.mubr.f32.mxu0 0.0
      %1647 = vmatmul.mubr.f32.gmra.mrb[0].mxu0 %v1067
      %v1648 = vpop.f32.mrb[0].mxu0
      %v1649 = vadd.f32 0.0, %v1648
      %v1650 = vpop.f32.mrb[0].mxu0
      %1651 = vmatprep.mubr.f32.mxu0 0.0
      %1652 = vmatmul.mubr.f32.gmra.mrb[0].mxu0 %v1070
      %v1653 = vpop.f32.mrb[0].mxu0
      %v1654 = vadd.f32 0.0, %v1653
      %v1655 = vpop.f32.mrb[0].mxu0
      %1656 = vmatprep.mubr.f32.mxu0 0.0
      %1657 = vmatmul.mubr.f32.gmra.mrb[0].mxu0 %v1073
      %v1658 = vpop.f32.mrb[0].mxu0
      %v1659 = vadd.f32 0.0, %v1658
      %v1660 = vpop.f32.mrb[0].mxu0
      %1661 = vmatprep.mubr.f32.mxu0 0.0
      %1662 = vmatmul.mubr.f32.gmra.mrb[0].mxu0 %v1076
      %v1663 = vpop.f32.mrb[0].mxu0
      %v1664 = vadd.f32 0.0, %v1663
      %v1665 = vpop.f32.mrb[0].mxu0
      %1666 = vmatprep.mubr.f32.mxu0 0.0
      %1667 = vmatmul.mubr.f32.gmra.mrb[0].mxu0 %v1079
      %v1668 = vpop.f32.mrb[0].mxu0
      %v1669 = vadd.f32 0.0, %v1668
      %v1670 = vpop.f32.mrb[0].mxu0
      %1671 = vmatprep.mubr.f32.mxu0 0.0
      %1672 = vmatmul.mubr.f32.gmra.mrb[0].mxu0 %v1082
      %v1673 = vpop.f32.mrb[0].mxu0
      %v1674 = vadd.f32 0.0, %v1673
      %v1675 = vpop.f32.mrb[0].mxu0
      %1676 = vmatprep.mubr.f32.mxu0 0.0
      %1677 = vmatmul.mubr.f32.gmra.mrb[0].mxu0 %v1085
      %v1678 = vpop.f32.mrb[0].mxu0
      %v1679 = vadd.f32 0.0, %v1678
      %v1680 = vpop.f32.mrb[0].mxu0
      %1681 = vmatprep.mubr.f32.mxu0 0.0
      %1682 = vmatmul.mubr.f32.gmra.mrb[0].mxu0 %v1088
      %v1683 = vpop.f32.mrb[0].mxu0
      %v1684 = vadd.f32 0.0, %v1683
      %v1685 = vpop.f32.mrb[0].mxu0
      %1686 = vmatprep.mubr.f32.mxu0 0.0
      %1687 = vmatmul.mubr.f32.gmra.mrb[0].mxu0 %v1091
      %v1688 = vpop.f32.mrb[0].mxu0
      %v1689 = vadd.f32 0.0, %v1688
      %v1690 = vpop.f32.mrb[0].mxu0
      %1691 = vmatprep.mubr.f32.mxu0 0.0
      %1692 = vmatmul.mubr.f32.gmra.mrb[0].mxu0 %v1094
      %v1693 = vpop.f32.mrb[0].mxu0
      %v1694 = vadd.f32 0.0, %v1693
      %v1695 = vpop.f32.mrb[0].mxu0
      %1696 = vmatprep.mubr.f32.mxu0 0.0
      %1697 = vmatmul.mubr.f32.gmra.mrb[0].mxu0 %v1097
      %v1698 = vpop.f32.mrb[0].mxu0
      %v1699 = vadd.f32 0.0, %v1698
      %v1700 = vpop.f32.mrb[0].mxu0
      %1701 = vmatprep.mubr.f32.mxu0 0.0
      %1702 = vmatmul.mubr.f32.gmra.mrb[0].mxu0 %v1100
      %v1703 = vpop.f32.mrb[0].mxu0
      %v1704 = vadd.f32 0.0, %v1703
      %v1705 = vpop.f32.mrb[0].mxu0
      %1706 = vmatprep.mubr.f32.mxu0 0.0
      %1707 = vmatmul.mubr.f32.gmra.mrb[0].mxu0 %v1103
      %v1708 = vpop.f32.mrb[0].mxu0
      %v1709 = vadd.f32 0.0, %v1708
      %v1710 = vpop.f32.mrb[0].mxu0
      %1711 = vmatprep.mubr.f32.mxu0 0.0
      %1712 = vmatmul.mubr.f32.gmra.mrb[0].mxu0 %v1106
      %v1713 = vpop.f32.mrb[0].mxu0
      %v1714 = vadd.f32 0.0, %v1713
      %v1715 = vpop.f32.mrb[0].mxu0
      %1716 = vmatprep.mubr.f32.mxu0 0.0
      %1717 = vmatmul.mubr.f32.gmra.mrb[0].mxu0 %v1109
      %v1718 = vpop.f32.mrb[0].mxu0
      %v1719 = vadd.f32 0.0, %v1718
      %v1720 = vpop.f32.mrb[0].mxu0
      %1721 = vmatprep.mubr.f32.mxu0 0.0
      %1722 = vmatmul.mubr.f32.gmra.mrb[0].mxu0 %v1112
      %v1723 = vpop.f32.mrb[0].mxu0
      %v1724 = vadd.f32 0.0, %v1723
      %v1725 = vpop.f32.mrb[0].mxu0
      %1726 = vmatprep.mubr.f32.mxu0 0.0
      %1727 = vmatmul.mubr.f32.gmra.mrb[0].mxu0 %v1115
      %v1728 = vpop.f32.mrb[0].mxu0
      %v1729 = vadd.f32 0.0, %v1728
      %v1730 = vpop.f32.mrb[0].mxu0
      %1731 = vmatprep.mubr.f32.mxu0 0.0
      %1732 = vmatmul.mubr.f32.gmra.mrb[0].mxu0 %v1118
      %v1733 = vpop.f32.mrb[0].mxu0
      %v1734 = vadd.f32 0.0, %v1733
      %v1735 = vpop.f32.mrb[0].mxu0
      %1736 = vmatprep.mubr.f32.mxu0 0.0
      %1737 = vmatmul.mubr.f32.gmra.mrb[0].mxu0 %v1121
      %v1738 = vpop.f32.mrb[0].mxu0
      %v1739 = vadd.f32 0.0, %v1738
      %v1740 = vpop.f32.mrb[0].mxu0
      %1741 = vmatprep.mubr.f32.mxu0 0.0
      %1742 = vmatmul.mubr.f32.gmra.mrb[0].mxu0 %v1124
      %v1743 = vpop.f32.mrb[0].mxu0
      %v1744 = vadd.f32 0.0, %v1743
      %v1745 = vpop.f32.mrb[0].mxu0
      %1746 = vmatprep.mubr.f32.mxu0 0.0
      %1747 = vmatmul.mubr.f32.gmra.mrb[0].mxu0 %v1127
      %v1748 = vpop.f32.mrb[0].mxu0
      %v1749 = vadd.f32 0.0, %v1748
      %v1750 = vpop.f32.mrb[0].mxu0
      %1751 = vmatprep.mubr.f32.mxu0 0.0
      %1752 = vmatmul.mubr.f32.gmra.mrb[0].mxu0 %v1130
      %v1753 = vpop.f32.mrb[0].mxu0
      %v1754 = vadd.f32 0.0, %v1753
      %v1755 = vpop.f32.mrb[0].mxu0
      %1756 = vdwg.mxu0
      %v1758 = vsel %vm795, %v570, 0
      %v1761 = vsel %vm795, %v571, 0
      %v1764 = vsel %vm795, %v572, 0
      %v1767 = vsel %vm795, %v573, 0
      %v1770 = vsel %vm795, %v574, 0
      %v1773 = vsel %vm795, %v575, 0
      %v1776 = vsel %vm795, %v576, 0
      %v1779 = vsel %vm795, %v577, 0
      %v1782 = vsel %vm795, %v578, 0
      %v1785 = vsel %vm795, %v579, 0
      %v1788 = vsel %vm795, %v580, 0
      %v1791 = vsel %vm795, %v581, 0
      %v1794 = vsel %vm795, %v582, 0
      %v1797 = vsel %vm795, %v583, 0
      %v1800 = vsel %vm795, %v584, 0
      %v1803 = vsel %vm795, %v585, 0
      %v1806 = vsel %vm795, %v586, 0
      %v1809 = vsel %vm795, %v587, 0
      %v1812 = vsel %vm795, %v588, 0
      %v1815 = vsel %vm795, %v589, 0
      %v1818 = vsel %vm795, %v590, 0
      %v1821 = vsel %vm795, %v591, 0
      %v1824 = vsel %vm795, %v592, 0
      %v1827 = vsel %vm795, %v593, 0
      %v1830 = vsel %vm795, %v594, 0
      %v1833 = vsel %vm795, %v595, 0
      %v1836 = vsel %vm795, %v596, 0
      %v1839 = vsel %vm795, %v597, 0
      %v1842 = vsel %vm795, %v598, 0
      %v1845 = vsel %vm795, %v599, 0
      %v1848 = vsel %vm795, %v600, 0
      %v1851 = vsel %vm795, %v601, 0
      %v1854 = vsel %vm795, %v602, 0
      %v1857 = vsel %vm795, %v603, 0
      %v1860 = vsel %vm795, %v604, 0
      %v1863 = vsel %vm795, %v605, 0
      %v1866 = vsel %vm795, %v606, 0
      %v1869 = vsel %vm795, %v607, 0
      %v1872 = vsel %vm795, %v608, 0
      %v1875 = vsel %vm795, %v609, 0
      %v1878 = vsel %vm795, %v610, 0
      %v1881 = vsel %vm795, %v611, 0
      %v1884 = vsel %vm795, %v612, 0
      %v1887 = vsel %vm795, %v613, 0
      %v1890 = vsel %vm795, %v614, 0
      %v1893 = vsel %vm795, %v615, 0
      %v1896 = vsel %vm795, %v616, 0
      %v1899 = vsel %vm795, %v617, 0
      %v1902 = vsel %vm795, %v618, 0
      %v1905 = vsel %vm795, %v619, 0
      %v1908 = vsel %vm795, %v620, 0
      %v1911 = vsel %vm795, %v621, 0
      %v1914 = vsel %vm795, %v622, 0
      %v1917 = vsel %vm795, %v623, 0
      %v1920 = vsel %vm795, %v624, 0
      %v1923 = vsel %vm795, %v625, 0
      %v1926 = vsel %vm795, %v626, 0
      %v1929 = vsel %vm795, %v627, 0
      %v1932 = vsel %vm795, %v628, 0
      %v1935 = vsel %vm795, %v629, 0
      %v1938 = vsel %vm795, %v630, 0
      %v1941 = vsel %vm795, %v631, 0
      %v1944 = vsel %vm795, %v632, 0
      %v1947 = vsel %vm795, %v633, 0
      %v1950 = vsel %vm795, %v634, 0
      %v1953 = vsel %vm795, %v635, 0
      %v1956 = vsel %vm795, %v636, 0
      %v1959 = vsel %vm795, %v637, 0
      %v1962 = vsel %vm795, %v638, 0
      %v1965 = vsel %vm795, %v639, 0
      %v1968 = vsel %vm795, %v640, 0
      %v1971 = vsel %vm795, %v641, 0
      %v1974 = vsel %vm795, %v642, 0
      %v1977 = vsel %vm795, %v643, 0
      %v1980 = vsel %vm795, %v644, 0
      %v1983 = vsel %vm795, %v645, 0
      %v1986 = vsel %vm795, %v646, 0
      %v1989 = vsel %vm795, %v647, 0
      %v1992 = vsel %vm795, %v648, 0
      %v1995 = vsel %vm795, %v649, 0
      %v1998 = vsel %vm795, %v650, 0
      %v2001 = vsel %vm795, %v651, 0
      %v2004 = vsel %vm795, %v652, 0
      %v2007 = vsel %vm795, %v653, 0
      %v2010 = vsel %vm795, %v654, 0
      %v2013 = vsel %vm795, %v655, 0
      %v2016 = vsel %vm795, %v656, 0
      %v2019 = vsel %vm795, %v657, 0
      %v2022 = vsel %vm795, %v658, 0
      %v2025 = vsel %vm795, %v659, 0
      %v2028 = vsel %vm795, %v660, 0
      %v2031 = vsel %vm795, %v661, 0
      %v2034 = vsel %vm795, %v662, 0
      %v2037 = vsel %vm795, %v663, 0
      %v2040 = vsel %vm795, %v664, 0
      %v2043 = vsel %vm795, %v665, 0
      %v2046 = vsel %vm795, %v666, 0
      %v2049 = vsel %vm795, %v667, 0
      %v2052 = vsel %vm795, %v668, 0
      %v2055 = vsel %vm795, %v669, 0
      %v2058 = vsel %vm795, %v670, 0
      %v2061 = vsel %vm795, %v671, 0
      %v2064 = vsel %vm795, %v672, 0
      %v2067 = vsel %vm795, %v673, 0
      %v2070 = vsel %vm795, %v674, 0
      %v2073 = vsel %vm795, %v675, 0
      %v2076 = vsel %vm795, %v676, 0
      %v2079 = vsel %vm795, %v677, 0
      %v2082 = vsel %vm795, %v678, 0
      %v2085 = vsel %vm795, %v679, 0
      %v2088 = vsel %vm795, %v680, 0
      %v2091 = vsel %vm795, %v681, 0
      %2093 = vmatprep.subr.mxu0 0.0
      %2094 = vmatpush1.msra.mxu0 %v346
      %2095 = vmatprep.subr.mxu0 0.0
      %2096 = vmatpush1.msra.mxu0 %v351
      %2097 = vmatprep.subr.mxu0 0.0
      %2098 = vmatpush1.msra.mxu0 %v356
      %2099 = vmatprep.subr.mxu0 0.0
      %2100 = vmatpush1.msra.mxu0 %v361
      %2101 = vmatprep.subr.mxu0 0.0
      %2102 = vmatpush1.msra.mxu0 %v366
      %2103 = vmatprep.subr.mxu0 0.0
      %2104 = vmatpush1.msra.mxu0 %v371
      %2105 = vmatprep.subr.mxu0 0.0
      %2106 = vmatpush1.msra.mxu0 0.0
      %2107 = vmatprep.subr.mxu0 0.0
      %2108 = vmatpush1.msra.mxu0 0.0
      %2109 = vmatprep.subr.mxu0 0.0
      %2110 = vmatpush1.msra.mxu0 0.0
      %2111 = vmatprep.subr.mxu0 0.0
      %2112 = vmatpush1.msra.mxu0 0.0
      %2113 = vmatprep.subr.mxu0 0.0
      %2114 = vmatpush1.msra.mxu0 0.0
      %2115 = vmatprep.subr.mxu0 0.0
      %2116 = vmatpush1.msra.mxu0 0.0
      %2117 = vmatprep.subr.mxu0 0.0
      %2118 = vmatpush1.msra.mxu0 0.0
      %2119 = vmatprep.subr.mxu0 0.0
      %2120 = vmatpush1.msra.mxu0 0.0
      %2121 = vmatprep.subr.mxu0 0.0
      %2122 = vmatpush1.msra.mxu0 0.0
      %2123 = vmatprep.subr.mxu0 0.0
      %2124 = vmatpush1.msra.mxu0 0.0
      %2125 = vmatprep.subr.mxu0 0.0
      %2126 = vmatpush1.msra.mxu0 0.0
      %2127 = vmatprep.subr.mxu0 0.0
      %2128 = vmatpush1.msra.mxu0 0.0
      %2129 = vmatprep.subr.mxu0 0.0
      %2130 = vmatpush1.msra.mxu0 0.0
      %2131 = vmatprep.subr.mxu0 0.0
      %2132 = vmatpush1.msra.mxu0 0.0
      %2133 = vmatprep.subr.mxu0 0.0
      %2134 = vmatpush1.msra.mxu0 0.0
      %2135 = vmatprep.subr.mxu0 0.0
      %2136 = vmatpush1.msra.mxu0 0.0
      %2137 = vmatprep.subr.mxu0 0.0
      %2138 = vmatpush1.msra.mxu0 0.0
      %2139 = vmatprep.subr.mxu0 0.0
      %2140 = vmatpush1.msra.mxu0 0.0
      %2141 = vmatprep.subr.mxu0 0.0
      %2142 = vmatpush1.msra.mxu0 0.0
      %2143 = vmatprep.subr.mxu0 0.0
      %2144 = vmatpush1.msra.mxu0 0.0
      %2145 = vmatprep.subr.mxu0 0.0
      %2146 = vmatpush1.msra.mxu0 0.0
      %2147 = vmatprep.subr.mxu0 0.0
      %2148 = vmatpush1.msra.mxu0 0.0
      %2149 = vmatprep.subr.mxu0 0.0
      %2150 = vmatpush1.msra.mxu0 0.0
      %2151 = vmatprep.subr.mxu0 0.0
      %2152 = vmatpush1.msra.mxu0 0.0
      %2153 = vmatprep.subr.mxu0 0.0
      %2154 = vmatpush1.msra.mxu0 0.0
      %2155 = vmatprep.subr.mxu0 0.0
      %2156 = vmatpush1.msra.mxu0 0.0
      %2157 = vmatprep.mubr.f32.mxu0 0.0
      %2158 = vmatmul.mubr.f32.gmra.mrb[0].mxu0 %v1758
      %v2159 = vpop.f32.mrb[0].mxu0
      %v2160 = vadd.f32 %v1199, %v2159
      %v2161 = vpop.f32.mrb[0].mxu0
      %2162 = vmatprep.mubr.f32.mxu0 0.0
      %2163 = vmatmul.mubr.f32.gmra.mrb[0].mxu0 %v1761
      %v2164 = vpop.f32.mrb[0].mxu0
      %v2165 = vadd.f32 %v1204, %v2164
      %v2166 = vpop.f32.mrb[0].mxu0
      %2167 = vmatprep.mubr.f32.mxu0 0.0
      %2168 = vmatmul.mubr.f32.gmra.mrb[0].mxu0 %v1764
      %v2169 = vpop.f32.mrb[0].mxu0
      %v2170 = vadd.f32 %v1209, %v2169
      %v2171 = vpop.f32.mrb[0].mxu0
      %2172 = vmatprep.mubr.f32.mxu0 0.0
      %2173 = vmatmul.mubr.f32.gmra.mrb[0].mxu0 %v1767
      %v2174 = vpop.f32.mrb[0].mxu0
      %v2175 = vadd.f32 %v1214, %v2174
      %v2176 = vpop.f32.mrb[0].mxu0
      %2177 = vmatprep.mubr.f32.mxu0 0.0
      %2178 = vmatmul.mubr.f32.gmra.mrb[0].mxu0 %v1770
      %v2179 = vpop.f32.mrb[0].mxu0
      %v2180 = vadd.f32 %v1219, %v2179
      %v2181 = vpop.f32.mrb[0].mxu0
      %2182 = vmatprep.mubr.f32.mxu0 0.0
      %2183 = vmatmul.mubr.f32.gmra.mrb[0].mxu0 %v1773
      %v2184 = vpop.f32.mrb[0].mxu0
      %v2185 = vadd.f32 %v1224, %v2184
      %v2186 = vpop.f32.mrb[0].mxu0
      %2187 = vmatprep.mubr.f32.mxu0 0.0
      %2188 = vmatmul.mubr.f32.gmra.mrb[0].mxu0 %v1776
      %v2189 = vpop.f32.mrb[0].mxu0
      %v2190 = vadd.f32 %v1229, %v2189
      %v2191 = vpop.f32.mrb[0].mxu0
      %2192 = vmatprep.mubr.f32.mxu0 0.0
      %2193 = vmatmul.mubr.f32.gmra.mrb[0].mxu0 %v1779
      %v2194 = vpop.f32.mrb[0].mxu0
      %v2195 = vadd.f32 %v1234, %v2194
      %v2196 = vpop.f32.mrb[0].mxu0
      %2197 = vmatprep.mubr.f32.mxu0 0.0
      %2198 = vmatmul.mubr.f32.gmra.mrb[0].mxu0 %v1782
      %v2199 = vpop.f32.mrb[0].mxu0
      %v2200 = vadd.f32 %v1239, %v2199
      %v2201 = vpop.f32.mrb[0].mxu0
      %2202 = vmatprep.mubr.f32.mxu0 0.0
      %2203 = vmatmul.mubr.f32.gmra.mrb[0].mxu0 %v1785
      %v2204 = vpop.f32.mrb[0].mxu0
      %v2205 = vadd.f32 %v1244, %v2204
      %v2206 = vpop.f32.mrb[0].mxu0
      %2207 = vmatprep.mubr.f32.mxu0 0.0
      %2208 = vmatmul.mubr.f32.gmra.mrb[0].mxu0 %v1788
      %v2209 = vpop.f32.mrb[0].mxu0
      %v2210 = vadd.f32 %v1249, %v2209
      %v2211 = vpop.f32.mrb[0].mxu0
      %2212 = vmatprep.mubr.f32.mxu0 0.0
      %2213 = vmatmul.mubr.f32.gmra.mrb[0].mxu0 %v1791
      %v2214 = vpop.f32.mrb[0].mxu0
      %v2215 = vadd.f32 %v1254, %v2214
      %v2216 = vpop.f32.mrb[0].mxu0
      %2217 = vmatprep.mubr.f32.mxu0 0.0
      %2218 = vmatmul.mubr.f32.gmra.mrb[0].mxu0 %v1794
      %v2219 = vpop.f32.mrb[0].mxu0
      %v2220 = vadd.f32 %v1259, %v2219
      %v2221 = vpop.f32.mrb[0].mxu0
      %2222 = vmatprep.mubr.f32.mxu0 0.0
      %2223 = vmatmul.mubr.f32.gmra.mrb[0].mxu0 %v1797
      %v2224 = vpop.f32.mrb[0].mxu0
      %v2225 = vadd.f32 %v1264, %v2224
      %v2226 = vpop.f32.mrb[0].mxu0
      %2227 = vmatprep.mubr.f32.mxu0 0.0
      %2228 = vmatmul.mubr.f32.gmra.mrb[0].mxu0 %v1800
      %v2229 = vpop.f32.mrb[0].mxu0
      %v2230 = vadd.f32 %v1269, %v2229
      %v2231 = vpop.f32.mrb[0].mxu0
      %2232 = vmatprep.mubr.f32.mxu0 0.0
      %2233 = vmatmul.mubr.f32.gmra.mrb[0].mxu0 %v1803
      %v2234 = vpop.f32.mrb[0].mxu0
      %v2235 = vadd.f32 %v1274, %v2234
      %v2236 = vpop.f32.mrb[0].mxu0
      %2237 = vmatprep.mubr.f32.mxu0 0.0
      %2238 = vmatmul.mubr.f32.gmra.mrb[0].mxu0 %v1806
      %v2239 = vpop.f32.mrb[0].mxu0
      %v2240 = vadd.f32 %v1279, %v2239
      %v2241 = vpop.f32.mrb[0].mxu0
      %2242 = vmatprep.mubr.f32.mxu0 0.0
      %2243 = vmatmul.mubr.f32.gmra.mrb[0].mxu0 %v1809
      %v2244 = vpop.f32.mrb[0].mxu0
      %v2245 = vadd.f32 %v1284, %v2244
      %v2246 = vpop.f32.mrb[0].mxu0
      %2247 = vmatprep.mubr.f32.mxu0 0.0
      %2248 = vmatmul.mubr.f32.gmra.mrb[0].mxu0 %v1812
      %v2249 = vpop.f32.mrb[0].mxu0
      %v2250 = vadd.f32 %v1289, %v2249
      %v2251 = vpop.f32.mrb[0].mxu0
      %2252 = vmatprep.mubr.f32.mxu0 0.0
      %2253 = vmatmul.mubr.f32.gmra.mrb[0].mxu0 %v1815
      %v2254 = vpop.f32.mrb[0].mxu0
      %v2255 = vadd.f32 %v1294, %v2254
      %v2256 = vpop.f32.mrb[0].mxu0
      %2257 = vmatprep.mubr.f32.mxu0 0.0
      %2258 = vmatmul.mubr.f32.gmra.mrb[0].mxu0 %v1818
      %v2259 = vpop.f32.mrb[0].mxu0
      %v2260 = vadd.f32 %v1299, %v2259
      %v2261 = vpop.f32.mrb[0].mxu0
      %2262 = vmatprep.mubr.f32.mxu0 0.0
      %2263 = vmatmul.mubr.f32.gmra.mrb[0].mxu0 %v1821
      %v2264 = vpop.f32.mrb[0].mxu0
      %v2265 = vadd.f32 %v1304, %v2264
      %v2266 = vpop.f32.mrb[0].mxu0
      %2267 = vmatprep.mubr.f32.mxu0 0.0
      %2268 = vmatmul.mubr.f32.gmra.mrb[0].mxu0 %v1824
      %v2269 = vpop.f32.mrb[0].mxu0
      %v2270 = vadd.f32 %v1309, %v2269
      %v2271 = vpop.f32.mrb[0].mxu0
      %2272 = vmatprep.mubr.f32.mxu0 0.0
      %2273 = vmatmul.mubr.f32.gmra.mrb[0].mxu0 %v1827
      %v2274 = vpop.f32.mrb[0].mxu0
      %v2275 = vadd.f32 %v1314, %v2274
      %v2276 = vpop.f32.mrb[0].mxu0
      %2277 = vmatprep.mubr.f32.mxu0 0.0
      %2278 = vmatmul.mubr.f32.gmra.mrb[0].mxu0 %v1830
      %v2279 = vpop.f32.mrb[0].mxu0
      %v2280 = vadd.f32 %v1319, %v2279
      %v2281 = vpop.f32.mrb[0].mxu0
      %2282 = vmatprep.mubr.f32.mxu0 0.0
      %2283 = vmatmul.mubr.f32.gmra.mrb[0].mxu0 %v1833
      %v2284 = vpop.f32.mrb[0].mxu0
      %v2285 = vadd.f32 %v1324, %v2284
      %v2286 = vpop.f32.mrb[0].mxu0
      %2287 = vmatprep.mubr.f32.mxu0 0.0
      %2288 = vmatmul.mubr.f32.gmra.mrb[0].mxu0 %v1836
      %v2289 = vpop.f32.mrb[0].mxu0
      %v2290 = vadd.f32 %v1329, %v2289
      %v2291 = vpop.f32.mrb[0].mxu0
      %2292 = vmatprep.mubr.f32.mxu0 0.0
      %2293 = vmatmul.mubr.f32.gmra.mrb[0].mxu0 %v1839
      %v2294 = vpop.f32.mrb[0].mxu0
      %v2295 = vadd.f32 %v1334, %v2294
      %v2296 = vpop.f32.mrb[0].mxu0
      %2297 = vmatprep.mubr.f32.mxu0 0.0
      %2298 = vmatmul.mubr.f32.gmra.mrb[0].mxu0 %v1842
      %v2299 = vpop.f32.mrb[0].mxu0
      %v2300 = vadd.f32 %v1339, %v2299
      %v2301 = vpop.f32.mrb[0].mxu0
      %2302 = vmatprep.mubr.f32.mxu0 0.0
      %2303 = vmatmul.mubr.f32.gmra.mrb[0].mxu0 %v1845
      %v2304 = vpop.f32.mrb[0].mxu0
      %v2305 = vadd.f32 %v1344, %v2304
      %v2306 = vpop.f32.mrb[0].mxu0
      %2307 = vmatprep.mubr.f32.mxu0 0.0
      %2308 = vmatmul.mubr.f32.gmra.mrb[0].mxu0 %v1848
      %v2309 = vpop.f32.mrb[0].mxu0
      %v2310 = vadd.f32 %v1349, %v2309
      %v2311 = vpop.f32.mrb[0].mxu0
      %2312 = vmatprep.mubr.f32.mxu0 0.0
      %2313 = vmatmul.mubr.f32.gmra.mrb[0].mxu0 %v1851
      %v2314 = vpop.f32.mrb[0].mxu0
      %v2315 = vadd.f32 %v1354, %v2314
      %v2316 = vpop.f32.mrb[0].mxu0
      %2317 = vmatprep.mubr.f32.mxu0 0.0
      %2318 = vmatmul.mubr.f32.gmra.mrb[0].mxu0 %v1854
      %v2319 = vpop.f32.mrb[0].mxu0
      %v2320 = vadd.f32 %v1359, %v2319
      %v2321 = vpop.f32.mrb[0].mxu0
      %2322 = vmatprep.mubr.f32.mxu0 0.0
      %2323 = vmatmul.mubr.f32.gmra.mrb[0].mxu0 %v1857
      %v2324 = vpop.f32.mrb[0].mxu0
      %v2325 = vadd.f32 %v1364, %v2324
      %v2326 = vpop.f32.mrb[0].mxu0
      %2327 = vmatprep.mubr.f32.mxu0 0.0
      %2328 = vmatmul.mubr.f32.gmra.mrb[0].mxu0 %v1860
      %v2329 = vpop.f32.mrb[0].mxu0
      %v2330 = vadd.f32 %v1369, %v2329
      %v2331 = vpop.f32.mrb[0].mxu0
      %2332 = vmatprep.mubr.f32.mxu0 0.0
      %2333 = vmatmul.mubr.f32.gmra.mrb[0].mxu0 %v1863
      %v2334 = vpop.f32.mrb[0].mxu0
      %v2335 = vadd.f32 %v1374, %v2334
      %v2336 = vpop.f32.mrb[0].mxu0
      %2337 = vmatprep.mubr.f32.mxu0 0.0
      %2338 = vmatmul.mubr.f32.gmra.mrb[0].mxu0 %v1866
      %v2339 = vpop.f32.mrb[0].mxu0
      %v2340 = vadd.f32 %v1379, %v2339
      %v2341 = vpop.f32.mrb[0].mxu0
      %2342 = vmatprep.mubr.f32.mxu0 0.0
      %2343 = vmatmul.mubr.f32.gmra.mrb[0].mxu0 %v1869
      %v2344 = vpop.f32.mrb[0].mxu0
      %v2345 = vadd.f32 %v1384, %v2344
      %v2346 = vpop.f32.mrb[0].mxu0
      %2347 = vmatprep.mubr.f32.mxu0 0.0
      %2348 = vmatmul.mubr.f32.gmra.mrb[0].mxu0 %v1872
      %v2349 = vpop.f32.mrb[0].mxu0
      %v2350 = vadd.f32 %v1389, %v2349
      %v2351 = vpop.f32.mrb[0].mxu0
      %2352 = vmatprep.mubr.f32.mxu0 0.0
      %2353 = vmatmul.mubr.f32.gmra.mrb[0].mxu0 %v1875
      %v2354 = vpop.f32.mrb[0].mxu0
      %v2355 = vadd.f32 %v1394, %v2354
      %v2356 = vpop.f32.mrb[0].mxu0
      %2357 = vmatprep.mubr.f32.mxu0 0.0
      %2358 = vmatmul.mubr.f32.gmra.mrb[0].mxu0 %v1878
      %v2359 = vpop.f32.mrb[0].mxu0
      %v2360 = vadd.f32 %v1399, %v2359
      %v2361 = vpop.f32.mrb[0].mxu0
      %2362 = vmatprep.mubr.f32.mxu0 0.0
      %2363 = vmatmul.mubr.f32.gmra.mrb[0].mxu0 %v1881
      %v2364 = vpop.f32.mrb[0].mxu0
      %v2365 = vadd.f32 %v1404, %v2364
      %v2366 = vpop.f32.mrb[0].mxu0
      %2367 = vmatprep.mubr.f32.mxu0 0.0
      %2368 = vmatmul.mubr.f32.gmra.mrb[0].mxu0 %v1884
      %v2369 = vpop.f32.mrb[0].mxu0
      %v2370 = vadd.f32 %v1409, %v2369
      %v2371 = vpop.f32.mrb[0].mxu0
      %2372 = vmatprep.mubr.f32.mxu0 0.0
      %2373 = vmatmul.mubr.f32.gmra.mrb[0].mxu0 %v1887
      %v2374 = vpop.f32.mrb[0].mxu0
      %v2375 = vadd.f32 %v1414, %v2374
      %v2376 = vpop.f32.mrb[0].mxu0
      %2377 = vmatprep.mubr.f32.mxu0 0.0
      %2378 = vmatmul.mubr.f32.gmra.mrb[0].mxu0 %v1890
      %v2379 = vpop.f32.mrb[0].mxu0
      %v2380 = vadd.f32 %v1419, %v2379
      %v2381 = vpop.f32.mrb[0].mxu0
      %2382 = vmatprep.mubr.f32.mxu0 0.0
      %2383 = vmatmul.mubr.f32.gmra.mrb[0].mxu0 %v1893
      %v2384 = vpop.f32.mrb[0].mxu0
      %v2385 = vadd.f32 %v1424, %v2384
      %v2386 = vpop.f32.mrb[0].mxu0
      %2387 = vmatprep.mubr.f32.mxu0 0.0
      %2388 = vmatmul.mubr.f32.gmra.mrb[0].mxu0 %v1896
      %v2389 = vpop.f32.mrb[0].mxu0
      %v2390 = vadd.f32 %v1429, %v2389
      %v2391 = vpop.f32.mrb[0].mxu0
      %2392 = vmatprep.mubr.f32.mxu0 0.0
      %2393 = vmatmul.mubr.f32.gmra.mrb[0].mxu0 %v1899
      %v2394 = vpop.f32.mrb[0].mxu0
      %v2395 = vadd.f32 %v1434, %v2394
      %v2396 = vpop.f32.mrb[0].mxu0
      %2397 = vmatprep.mubr.f32.mxu0 0.0
      %2398 = vmatmul.mubr.f32.gmra.mrb[0].mxu0 %v1902
      %v2399 = vpop.f32.mrb[0].mxu0
      %v2400 = vadd.f32 %v1439, %v2399
      %v2401 = vpop.f32.mrb[0].mxu0
      %2402 = vmatprep.mubr.f32.mxu0 0.0
      %2403 = vmatmul.mubr.f32.gmra.mrb[0].mxu0 %v1905
      %v2404 = vpop.f32.mrb[0].mxu0
      %v2405 = vadd.f32 %v1444, %v2404
      %v2406 = vpop.f32.mrb[0].mxu0
      %2407 = vmatprep.mubr.f32.mxu0 0.0
      %2408 = vmatmul.mubr.f32.gmra.mrb[0].mxu0 %v1908
      %v2409 = vpop.f32.mrb[0].mxu0
      %v2410 = vadd.f32 %v1449, %v2409
      %v2411 = vpop.f32.mrb[0].mxu0
      %2412 = vmatprep.mubr.f32.mxu0 0.0
      %2413 = vmatmul.mubr.f32.gmra.mrb[0].mxu0 %v1911
      %v2414 = vpop.f32.mrb[0].mxu0
      %v2415 = vadd.f32 %v1454, %v2414
      %v2416 = vpop.f32.mrb[0].mxu0
      %2417 = vmatprep.mubr.f32.mxu0 0.0
      %2418 = vmatmul.mubr.f32.gmra.mrb[0].mxu0 %v1914
      %v2419 = vpop.f32.mrb[0].mxu0
      %v2420 = vadd.f32 %v1459, %v2419
      %v2421 = vpop.f32.mrb[0].mxu0
      %2422 = vmatprep.mubr.f32.mxu0 0.0
      %2423 = vmatmul.mubr.f32.gmra.mrb[0].mxu0 %v1917
      %v2424 = vpop.f32.mrb[0].mxu0
      %v2425 = vadd.f32 %v1464, %v2424
      %v2426 = vpop.f32.mrb[0].mxu0
      %2427 = vmatprep.mubr.f32.mxu0 0.0
      %2428 = vmatmul.mubr.f32.gmra.mrb[0].mxu0 %v1920
      %v2429 = vpop.f32.mrb[0].mxu0
      %v2430 = vadd.f32 %v1469, %v2429
      %v2431 = vpop.f32.mrb[0].mxu0
      %2432 = vmatprep.mubr.f32.mxu0 0.0
      %2433 = vmatmul.mubr.f32.gmra.mrb[0].mxu0 %v1923
      %v2434 = vpop.f32.mrb[0].mxu0
      %v2435 = vadd.f32 %v1474, %v2434
      %v2436 = vpop.f32.mrb[0].mxu0
      %2437 = vmatprep.mubr.f32.mxu0 0.0
      %2438 = vmatmul.mubr.f32.gmra.mrb[0].mxu0 %v1926
      %v2439 = vpop.f32.mrb[0].mxu0
      %v2440 = vadd.f32 %v1479, %v2439
      %v2441 = vpop.f32.mrb[0].mxu0
      %2442 = vmatprep.mubr.f32.mxu0 0.0
      %2443 = vmatmul.mubr.f32.gmra.mrb[0].mxu0 %v1929
      %v2444 = vpop.f32.mrb[0].mxu0
      %v2445 = vadd.f32 %v1484, %v2444
      %v2446 = vpop.f32.mrb[0].mxu0
      %2447 = vmatprep.mubr.f32.mxu0 0.0
      %2448 = vmatmul.mubr.f32.gmra.mrb[0].mxu0 %v1932
      %v2449 = vpop.f32.mrb[0].mxu0
      %v2450 = vadd.f32 %v1489, %v2449
      %v2451 = vpop.f32.mrb[0].mxu0
      %2452 = vmatprep.mubr.f32.mxu0 0.0
      %2453 = vmatmul.mubr.f32.gmra.mrb[0].mxu0 %v1935
      %v2454 = vpop.f32.mrb[0].mxu0
      %v2455 = vadd.f32 %v1494, %v2454
      %v2456 = vpop.f32.mrb[0].mxu0
      %2457 = vmatprep.mubr.f32.mxu0 0.0
      %2458 = vmatmul.mubr.f32.gmra.mrb[0].mxu0 %v1938
      %v2459 = vpop.f32.mrb[0].mxu0
      %v2460 = vadd.f32 %v1499, %v2459
      %v2461 = vpop.f32.mrb[0].mxu0
      %2462 = vmatprep.mubr.f32.mxu0 0.0
      %2463 = vmatmul.mubr.f32.gmra.mrb[0].mxu0 %v1941
      %v2464 = vpop.f32.mrb[0].mxu0
      %v2465 = vadd.f32 %v1504, %v2464
      %v2466 = vpop.f32.mrb[0].mxu0
      %2467 = vmatprep.mubr.f32.mxu0 0.0
      %2468 = vmatmul.mubr.f32.gmra.mrb[0].mxu0 %v1944
      %v2469 = vpop.f32.mrb[0].mxu0
      %v2470 = vadd.f32 %v1509, %v2469
      %v2471 = vpop.f32.mrb[0].mxu0
      %2472 = vmatprep.mubr.f32.mxu0 0.0
      %2473 = vmatmul.mubr.f32.gmra.mrb[0].mxu0 %v1947
      %v2474 = vpop.f32.mrb[0].mxu0
      %v2475 = vadd.f32 %v1514, %v2474
      %v2476 = vpop.f32.mrb[0].mxu0
      %2477 = vmatprep.mubr.f32.mxu0 0.0
      %2478 = vmatmul.mubr.f32.gmra.mrb[0].mxu0 %v1950
      %v2479 = vpop.f32.mrb[0].mxu0
      %v2480 = vadd.f32 %v1519, %v2479
      %v2481 = vpop.f32.mrb[0].mxu0
      %2482 = vmatprep.mubr.f32.mxu0 0.0
      %2483 = vmatmul.mubr.f32.gmra.mrb[0].mxu0 %v1953
      %v2484 = vpop.f32.mrb[0].mxu0
      %v2485 = vadd.f32 %v1524, %v2484
      %v2486 = vpop.f32.mrb[0].mxu0
      %2487 = vmatprep.mubr.f32.mxu0 0.0
      %2488 = vmatmul.mubr.f32.gmra.mrb[0].mxu0 %v1956
      %v2489 = vpop.f32.mrb[0].mxu0
      %v2490 = vadd.f32 %v1529, %v2489
      %v2491 = vpop.f32.mrb[0].mxu0
      %2492 = vmatprep.mubr.f32.mxu0 0.0
      %2493 = vmatmul.mubr.f32.gmra.mrb[0].mxu0 %v1959
      %v2494 = vpop.f32.mrb[0].mxu0
      %v2495 = vadd.f32 %v1534, %v2494
      %v2496 = vpop.f32.mrb[0].mxu0
      %2497 = vmatprep.mubr.f32.mxu0 0.0
      %2498 = vmatmul.mubr.f32.gmra.mrb[0].mxu0 %v1962
      %v2499 = vpop.f32.mrb[0].mxu0
      %v2500 = vadd.f32 %v1539, %v2499
      %v2501 = vpop.f32.mrb[0].mxu0
      %2502 = vmatprep.mubr.f32.mxu0 0.0
      %2503 = vmatmul.mubr.f32.gmra.mrb[0].mxu0 %v1965
      %v2504 = vpop.f32.mrb[0].mxu0
      %v2505 = vadd.f32 %v1544, %v2504
      %v2506 = vpop.f32.mrb[0].mxu0
      %2507 = vmatprep.mubr.f32.mxu0 0.0
      %2508 = vmatmul.mubr.f32.gmra.mrb[0].mxu0 %v1968
      %v2509 = vpop.f32.mrb[0].mxu0
      %v2510 = vadd.f32 %v1549, %v2509
      %v2511 = vpop.f32.mrb[0].mxu0
      %2512 = vmatprep.mubr.f32.mxu0 0.0
      %2513 = vmatmul.mubr.f32.gmra.mrb[0].mxu0 %v1971
      %v2514 = vpop.f32.mrb[0].mxu0
      %v2515 = vadd.f32 %v1554, %v2514
      %v2516 = vpop.f32.mrb[0].mxu0
      %2517 = vmatprep.mubr.f32.mxu0 0.0
      %2518 = vmatmul.mubr.f32.gmra.mrb[0].mxu0 %v1974
      %v2519 = vpop.f32.mrb[0].mxu0
      %v2520 = vadd.f32 %v1559, %v2519
      %v2521 = vpop.f32.mrb[0].mxu0
      %2522 = vmatprep.mubr.f32.mxu0 0.0
      %2523 = vmatmul.mubr.f32.gmra.mrb[0].mxu0 %v1977
      %v2524 = vpop.f32.mrb[0].mxu0
      %v2525 = vadd.f32 %v1564, %v2524
      %v2526 = vpop.f32.mrb[0].mxu0
      %2527 = vmatprep.mubr.f32.mxu0 0.0
      %2528 = vmatmul.mubr.f32.gmra.mrb[0].mxu0 %v1980
      %v2529 = vpop.f32.mrb[0].mxu0
      %v2530 = vadd.f32 %v1569, %v2529
      %v2531 = vpop.f32.mrb[0].mxu0
      %2532 = vmatprep.mubr.f32.mxu0 0.0
      %2533 = vmatmul.mubr.f32.gmra.mrb[0].mxu0 %v1983
      %v2534 = vpop.f32.mrb[0].mxu0
      %v2535 = vadd.f32 %v1574, %v2534
      %v2536 = vpop.f32.mrb[0].mxu0
      %2537 = vmatprep.mubr.f32.mxu0 0.0
      %2538 = vmatmul.mubr.f32.gmra.mrb[0].mxu0 %v1986
      %v2539 = vpop.f32.mrb[0].mxu0
      %v2540 = vadd.f32 %v1579, %v2539
      %v2541 = vpop.f32.mrb[0].mxu0
      %2542 = vmatprep.mubr.f32.mxu0 0.0
      %2543 = vmatmul.mubr.f32.gmra.mrb[0].mxu0 %v1989
      %v2544 = vpop.f32.mrb[0].mxu0
      %v2545 = vadd.f32 %v1584, %v2544
      %v2546 = vpop.f32.mrb[0].mxu0
      %2547 = vmatprep.mubr.f32.mxu0 0.0
      %2548 = vmatmul.mubr.f32.gmra.mrb[0].mxu0 %v1992
      %v2549 = vpop.f32.mrb[0].mxu0
      %v2550 = vadd.f32 %v1589, %v2549
      %v2551 = vpop.f32.mrb[0].mxu0
      %2552 = vmatprep.mubr.f32.mxu0 0.0
      %2553 = vmatmul.mubr.f32.gmra.mrb[0].mxu0 %v1995
      %v2554 = vpop.f32.mrb[0].mxu0
      %v2555 = vadd.f32 %v1594, %v2554
      %v2556 = vpop.f32.mrb[0].mxu0
      %2557 = vmatprep.mubr.f32.mxu0 0.0
      %2558 = vmatmul.mubr.f32.gmra.mrb[0].mxu0 %v1998
      %v2559 = vpop.f32.mrb[0].mxu0
      %v2560 = vadd.f32 %v1599, %v2559
      %v2561 = vpop.f32.mrb[0].mxu0
      %2562 = vmatprep.mubr.f32.mxu0 0.0
      %2563 = vmatmul.mubr.f32.gmra.mrb[0].mxu0 %v2001
      %v2564 = vpop.f32.mrb[0].mxu0
      %v2565 = vadd.f32 %v1604, %v2564
      %v2566 = vpop.f32.mrb[0].mxu0
      %2567 = vmatprep.mubr.f32.mxu0 0.0
      %2568 = vmatmul.mubr.f32.gmra.mrb[0].mxu0 %v2004
      %v2569 = vpop.f32.mrb[0].mxu0
      %v2570 = vadd.f32 %v1609, %v2569
      %v2571 = vpop.f32.mrb[0].mxu0
      %2572 = vmatprep.mubr.f32.mxu0 0.0
      %2573 = vmatmul.mubr.f32.gmra.mrb[0].mxu0 %v2007
      %v2574 = vpop.f32.mrb[0].mxu0
      %v2575 = vadd.f32 %v1614, %v2574
      %v2576 = vpop.f32.mrb[0].mxu0
      %2577 = vmatprep.mubr.f32.mxu0 0.0
      %2578 = vmatmul.mubr.f32.gmra.mrb[0].mxu0 %v2010
      %v2579 = vpop.f32.mrb[0].mxu0
      %v2580 = vadd.f32 %v1619, %v2579
      %v2581 = vpop.f32.mrb[0].mxu0
      %2582 = vmatprep.mubr.f32.mxu0 0.0
      %2583 = vmatmul.mubr.f32.gmra.mrb[0].mxu0 %v2013
      %v2584 = vpop.f32.mrb[0].mxu0
      %v2585 = vadd.f32 %v1624, %v2584
      %v2586 = vpop.f32.mrb[0].mxu0
      %2587 = vmatprep.mubr.f32.mxu0 0.0
      %2588 = vmatmul.mubr.f32.gmra.mrb[0].mxu0 %v2016
      %v2589 = vpop.f32.mrb[0].mxu0
      %v2590 = vadd.f32 %v1629, %v2589
      %v2591 = vpop.f32.mrb[0].mxu0
      %2592 = vmatprep.mubr.f32.mxu0 0.0
      %2593 = vmatmul.mubr.f32.gmra.mrb[0].mxu0 %v2019
      %v2594 = vpop.f32.mrb[0].mxu0
      %v2595 = vadd.f32 %v1634, %v2594
      %v2596 = vpop.f32.mrb[0].mxu0
      %2597 = vmatprep.mubr.f32.mxu0 0.0
      %2598 = vmatmul.mubr.f32.gmra.mrb[0].mxu0 %v2022
      %v2599 = vpop.f32.mrb[0].mxu0
      %v2600 = vadd.f32 %v1639, %v2599
      %v2601 = vpop.f32.mrb[0].mxu0
      %2602 = vmatprep.mubr.f32.mxu0 0.0
      %2603 = vmatmul.mubr.f32.gmra.mrb[0].mxu0 %v2025
      %v2604 = vpop.f32.mrb[0].mxu0
      %v2605 = vadd.f32 %v1644, %v2604
      %v2606 = vpop.f32.mrb[0].mxu0
      %2607 = vmatprep.mubr.f32.mxu0 0.0
      %2608 = vmatmul.mubr.f32.gmra.mrb[0].mxu0 %v2028
      %v2609 = vpop.f32.mrb[0].mxu0
      %v2610 = vadd.f32 %v1649, %v2609
      %v2611 = vpop.f32.mrb[0].mxu0
      %2612 = vmatprep.mubr.f32.mxu0 0.0
      %2613 = vmatmul.mubr.f32.gmra.mrb[0].mxu0 %v2031
      %v2614 = vpop.f32.mrb[0].mxu0
      %v2615 = vadd.f32 %v1654, %v2614
      %v2616 = vpop.f32.mrb[0].mxu0
      %2617 = vmatprep.mubr.f32.mxu0 0.0
      %2618 = vmatmul.mubr.f32.gmra.mrb[0].mxu0 %v2034
      %v2619 = vpop.f32.mrb[0].mxu0
      %v2620 = vadd.f32 %v1659, %v2619
      %v2621 = vpop.f32.mrb[0].mxu0
      %2622 = vmatprep.mubr.f32.mxu0 0.0
      %2623 = vmatmul.mubr.f32.gmra.mrb[0].mxu0 %v2037
      %v2624 = vpop.f32.mrb[0].mxu0
      %v2625 = vadd.f32 %v1664, %v2624
      %v2626 = vpop.f32.mrb[0].mxu0
      %2627 = vmatprep.mubr.f32.mxu0 0.0
      %2628 = vmatmul.mubr.f32.gmra.mrb[0].mxu0 %v2040
      %v2629 = vpop.f32.mrb[0].mxu0
      %v2630 = vadd.f32 %v1669, %v2629
      %v2631 = vpop.f32.mrb[0].mxu0
      %2632 = vmatprep.mubr.f32.mxu0 0.0
      %2633 = vmatmul.mubr.f32.gmra.mrb[0].mxu0 %v2043
      %v2634 = vpop.f32.mrb[0].mxu0
      %v2635 = vadd.f32 %v1674, %v2634
      %v2636 = vpop.f32.mrb[0].mxu0
      %2637 = vmatprep.mubr.f32.mxu0 0.0
      %2638 = vmatmul.mubr.f32.gmra.mrb[0].mxu0 %v2046
      %v2639 = vpop.f32.mrb[0].mxu0
      %v2640 = vadd.f32 %v1679, %v2639
      %v2641 = vpop.f32.mrb[0].mxu0
      %2642 = vmatprep.mubr.f32.mxu0 0.0
      %2643 = vmatmul.mubr.f32.gmra.mrb[0].mxu0 %v2049
      %v2644 = vpop.f32.mrb[0].mxu0
      %v2645 = vadd.f32 %v1684, %v2644
      %v2646 = vpop.f32.mrb[0].mxu0
      %2647 = vmatprep.mubr.f32.mxu0 0.0
      %2648 = vmatmul.mubr.f32.gmra.mrb[0].mxu0 %v2052
      %v2649 = vpop.f32.mrb[0].mxu0
      %v2650 = vadd.f32 %v1689, %v2649
      %v2651 = vpop.f32.mrb[0].mxu0
      %2652 = vmatprep.mubr.f32.mxu0 0.0
      %2653 = vmatmul.mubr.f32.gmra.mrb[0].mxu0 %v2055
      %v2654 = vpop.f32.mrb[0].mxu0
      %v2655 = vadd.f32 %v1694, %v2654
      %v2656 = vpop.f32.mrb[0].mxu0
      %2657 = vmatprep.mubr.f32.mxu0 0.0
      %2658 = vmatmul.mubr.f32.gmra.mrb[0].mxu0 %v2058
      %v2659 = vpop.f32.mrb[0].mxu0
      %v2660 = vadd.f32 %v1699, %v2659
      %v2661 = vpop.f32.mrb[0].mxu0
      %2662 = vmatprep.mubr.f32.mxu0 0.0
      %2663 = vmatmul.mubr.f32.gmra.mrb[0].mxu0 %v2061
      %v2664 = vpop.f32.mrb[0].mxu0
      %v2665 = vadd.f32 %v1704, %v2664
      %v2666 = vpop.f32.mrb[0].mxu0
      %2667 = vmatprep.mubr.f32.mxu0 0.0
      %2668 = vmatmul.mubr.f32.gmra.mrb[0].mxu0 %v2064
      %v2669 = vpop.f32.mrb[0].mxu0
      %v2670 = vadd.f32 %v1709, %v2669
      %v2671 = vpop.f32.mrb[0].mxu0
      %2672 = vmatprep.mubr.f32.mxu0 0.0
      %2673 = vmatmul.mubr.f32.gmra.mrb[0].mxu0 %v2067
      %v2674 = vpop.f32.mrb[0].mxu0
      %v2675 = vadd.f32 %v1714, %v2674
      %v2676 = vpop.f32.mrb[0].mxu0
      %2677 = vmatprep.mubr.f32.mxu0 0.0
      %2678 = vmatmul.mubr.f32.gmra.mrb[0].mxu0 %v2070
      %v2679 = vpop.f32.mrb[0].mxu0
      %v2680 = vadd.f32 %v1719, %v2679
      %v2681 = vpop.f32.mrb[0].mxu0
      %2682 = vmatprep.mubr.f32.mxu0 0.0
      %2683 = vmatmul.mubr.f32.gmra.mrb[0].mxu0 %v2073
      %v2684 = vpop.f32.mrb[0].mxu0
      %v2685 = vadd.f32 %v1724, %v2684
      %v2686 = vpop.f32.mrb[0].mxu0
      %2687 = vmatprep.mubr.f32.mxu0 0.0
      %2688 = vmatmul.mubr.f32.gmra.mrb[0].mxu0 %v2076
      %v2689 = vpop.f32.mrb[0].mxu0
      %v2690 = vadd.f32 %v1729, %v2689
      %v2691 = vpop.f32.mrb[0].mxu0
      %2692 = vmatprep.mubr.f32.mxu0 0.0
      %2693 = vmatmul.mubr.f32.gmra.mrb[0].mxu0 %v2079
      %v2694 = vpop.f32.mrb[0].mxu0
      %v2695 = vadd.f32 %v1734, %v2694
      %v2696 = vpop.f32.mrb[0].mxu0
      %2697 = vmatprep.mubr.f32.mxu0 0.0
      %2698 = vmatmul.mubr.f32.gmra.mrb[0].mxu0 %v2082
      %v2699 = vpop.f32.mrb[0].mxu0
      %v2700 = vadd.f32 %v1739, %v2699
      %v2701 = vpop.f32.mrb[0].mxu0
      %2702 = vmatprep.mubr.f32.mxu0 0.0
      %2703 = vmatmul.mubr.f32.gmra.mrb[0].mxu0 %v2085
      %v2704 = vpop.f32.mrb[0].mxu0
      %v2705 = vadd.f32 %v1744, %v2704
      %v2706 = vpop.f32.mrb[0].mxu0
      %2707 = vmatprep.mubr.f32.mxu0 0.0
      %2708 = vmatmul.mubr.f32.gmra.mrb[0].mxu0 %v2088
      %v2709 = vpop.f32.mrb[0].mxu0
      %v2710 = vadd.f32 %v1749, %v2709
      %v2711 = vpop.f32.mrb[0].mxu0
      %2712 = vmatprep.mubr.f32.mxu0 0.0
      %2713 = vmatmul.mubr.f32.gmra.mrb[0].mxu0 %v2091
      %v2714 = vpop.f32.mrb[0].mxu0
      %v2715 = vadd.f32 %v1754, %v2714
      %v2716 = vpop.f32.mrb[0].mxu0
      %2717 = vdwg.mxu0
      %s2718 = scalar_lea.vmem %s2, 1792
      %v2719 = vld [vmem:[%s2718] sm:$0xff]
      %v2720 = vld [vmem:[%s2718 + $0x8] sm:$0xff]
      %v2721 = vld [vmem:[%s2718 + $0x10] sm:$0xff]
      %v2722 = vld [vmem:[%s2718 + $0x18] sm:$0xff]
      %v2723 = vld [vmem:[%s2718 + $0x20] sm:$0xff]
      %v2724 = vld [vmem:[%s2718 + $0x28] sm:$0xff]
      %v2725 = vld [vmem:[%s2718 + $0x30] sm:$0xff]
      %v2726 = vld [vmem:[%s2718 + $0x38] sm:$0xff]
      %v2727 = vld [vmem:[%s2718 + $0x40] sm:$0xff]
      %v2728 = vld [vmem:[%s2718 + $0x48] sm:$0xff]
      %v2729 = vld [vmem:[%s2718 + $0x50] sm:$0xff]
      %v2730 = vld [vmem:[%s2718 + $0x58] sm:$0xff]
      %v2731 = vld [vmem:[%s2718 + $0x60] sm:$0xff]
      %v2732 = vld [vmem:[%s2718 + $0x68] sm:$0xff]
      %v2733 = vld [vmem:[%s2718 + $0x70] sm:$0xff]
      %v2734 = vld [vmem:[%s2718 + $0x78] sm:$0xff]
      %v2735 = vld [vmem:[%s2718 + $0x80] sm:$0xff]
      %v2736 = vld [vmem:[%s2718 + $0x88] sm:$0xff]
      %v2737 = vld [vmem:[%s2718 + $0x90] sm:$0xff]
      %v2738 = vld [vmem:[%s2718 + $0x98] sm:$0xff]
      %v2739 = vld [vmem:[%s2718 + $0xa0] sm:$0xff]
      %v2740 = vld [vmem:[%s2718 + $0xa8] sm:$0xff]
      %v2741 = vld [vmem:[%s2718 + $0xb0] sm:$0xff]
      %v2742 = vld [vmem:[%s2718 + $0xb8] sm:$0xff]
      %v2743 = vld [vmem:[%s2718 + $0xc0] sm:$0xff]
      %v2744 = vld [vmem:[%s2718 + $0xc8] sm:$0xff]
      %v2745 = vld [vmem:[%s2718 + $0xd0] sm:$0xff]
      %v2746 = vld [vmem:[%s2718 + $0xd8] sm:$0xff]
      %v2747 = vld [vmem:[%s2718 + $0xe0] sm:$0xff]
      %v2748 = vld [vmem:[%s2718 + $0xe8] sm:$0xff]
      %v2749 = vld [vmem:[%s2718 + $0xf0] sm:$0xff]
      %v2750 = vld [vmem:[%s2718 + $0xf8] sm:$0xff]
      %v2751 = vld [vmem:[%s2718 + $0x100] sm:$0xff]
      %v2752 = vld [vmem:[%s2718 + $0x108] sm:$0xff]
      %v2753 = vld [vmem:[%s2718 + $0x110] sm:$0xff]
      %v2754 = vld [vmem:[%s2718 + $0x118] sm:$0xff]
      %v2755 = vld [vmem:[%s2718 + $0x120] sm:$0xff]
      %v2756 = vld [vmem:[%s2718 + $0x128] sm:$0xff]
      %v2757 = vld [vmem:[%s2718 + $0x130] sm:$0xff]
      %v2758 = vld [vmem:[%s2718 + $0x138] sm:$0xff]
      %v2759 = vld [vmem:[%s2718 + $0x140] sm:$0xff]
      %v2760 = vld [vmem:[%s2718 + $0x148] sm:$0xff]
      %v2761 = vld [vmem:[%s2718 + $0x150] sm:$0xff]
      %v2762 = vld [vmem:[%s2718 + $0x158] sm:$0xff]
      %v2763 = vld [vmem:[%s2718 + $0x160] sm:$0xff]
      %v2764 = vld [vmem:[%s2718 + $0x168] sm:$0xff]
      %v2765 = vld [vmem:[%s2718 + $0x170] sm:$0xff]
      %v2766 = vld [vmem:[%s2718 + $0x178] sm:$0xff]
      %v2767 = vld [vmem:[%s2718 + $0x180] sm:$0xff]
      %v2768 = vld [vmem:[%s2718 + $0x188] sm:$0xff]
      %v2769 = vld [vmem:[%s2718 + $0x190] sm:$0xff]
      %v2770 = vld [vmem:[%s2718 + $0x198] sm:$0xff]
      %v2771 = vld [vmem:[%s2718 + $0x1a0] sm:$0xff]
      %v2772 = vld [vmem:[%s2718 + $0x1a8] sm:$0xff]
      %v2773 = vld [vmem:[%s2718 + $0x1b0] sm:$0xff]
      %v2774 = vld [vmem:[%s2718 + $0x1b8] sm:$0xff]
      %v2775 = vld [vmem:[%s2718 + $0x1c0] sm:$0xff]
      %v2776 = vld [vmem:[%s2718 + $0x1c8] sm:$0xff]
      %v2777 = vld [vmem:[%s2718 + $0x1d0] sm:$0xff]
      %v2778 = vld [vmem:[%s2718 + $0x1d8] sm:$0xff]
      %v2779 = vld [vmem:[%s2718 + $0x1e0] sm:$0xff]
      %v2780 = vld [vmem:[%s2718 + $0x1e8] sm:$0xff]
      %v2781 = vld [vmem:[%s2718 + $0x1f0] sm:$0xff]
      %v2782 = vld [vmem:[%s2718 + $0x1f8] sm:$0xff]
      %v2783 = vld [vmem:[%s2718 + $0x200] sm:$0xff]
      %v2784 = vld [vmem:[%s2718 + $0x208] sm:$0xff]
      %v2785 = vld [vmem:[%s2718 + $0x210] sm:$0xff]
      %v2786 = vld [vmem:[%s2718 + $0x218] sm:$0xff]
      %v2787 = vld [vmem:[%s2718 + $0x220] sm:$0xff]
      %v2788 = vld [vmem:[%s2718 + $0x228] sm:$0xff]
      %v2789 = vld [vmem:[%s2718 + $0x230] sm:$0xff]
      %v2790 = vld [vmem:[%s2718 + $0x238] sm:$0xff]
      %v2791 = vld [vmem:[%s2718 + $0x240] sm:$0xff]
      %v2792 = vld [vmem:[%s2718 + $0x248] sm:$0xff]
      %v2793 = vld [vmem:[%s2718 + $0x250] sm:$0xff]
      %v2794 = vld [vmem:[%s2718 + $0x258] sm:$0xff]
      %v2795 = vld [vmem:[%s2718 + $0x260] sm:$0xff]
      %v2796 = vld [vmem:[%s2718 + $0x268] sm:$0xff]
      %v2797 = vld [vmem:[%s2718 + $0x270] sm:$0xff]
      %v2798 = vld [vmem:[%s2718 + $0x278] sm:$0xff]
      %v2799 = vld [vmem:[%s2718 + $0x280] sm:$0xff]
      %v2800 = vld [vmem:[%s2718 + $0x288] sm:$0xff]
      %v2801 = vld [vmem:[%s2718 + $0x290] sm:$0xff]
      %v2802 = vld [vmem:[%s2718 + $0x298] sm:$0xff]
      %v2803 = vld [vmem:[%s2718 + $0x2a0] sm:$0xff]
      %v2804 = vld [vmem:[%s2718 + $0x2a8] sm:$0xff]
      %v2805 = vld [vmem:[%s2718 + $0x2b0] sm:$0xff]
      %v2806 = vld [vmem:[%s2718 + $0x2b8] sm:$0xff]
      %v2807 = vld [vmem:[%s2718 + $0x2c0] sm:$0xff]
      %v2808 = vld [vmem:[%s2718 + $0x2c8] sm:$0xff]
      %v2809 = vld [vmem:[%s2718 + $0x2d0] sm:$0xff]
      %v2810 = vld [vmem:[%s2718 + $0x2d8] sm:$0xff]
      %v2811 = vld [vmem:[%s2718 + $0x2e0] sm:$0xff]
      %v2812 = vld [vmem:[%s2718 + $0x2e8] sm:$0xff]
      %v2813 = vld [vmem:[%s2718 + $0x2f0] sm:$0xff]
      %v2814 = vld [vmem:[%s2718 + $0x2f8] sm:$0xff]
      %v2815 = vld [vmem:[%s2718 + $0x300] sm:$0xff]
      %v2816 = vld [vmem:[%s2718 + $0x308] sm:$0xff]
      %v2817 = vld [vmem:[%s2718 + $0x310] sm:$0xff]
      %v2818 = vld [vmem:[%s2718 + $0x318] sm:$0xff]
      %v2819 = vld [vmem:[%s2718 + $0x320] sm:$0xff]
      %v2820 = vld [vmem:[%s2718 + $0x328] sm:$0xff]
      %v2821 = vld [vmem:[%s2718 + $0x330] sm:$0xff]
      %v2822 = vld [vmem:[%s2718 + $0x338] sm:$0xff]
      %v2823 = vld [vmem:[%s2718 + $0x340] sm:$0xff]
      %v2824 = vld [vmem:[%s2718 + $0x348] sm:$0xff]
      %v2825 = vld [vmem:[%s2718 + $0x350] sm:$0xff]
      %v2826 = vld [vmem:[%s2718 + $0x358] sm:$0xff]
      %v2827 = vld [vmem:[%s2718 + $0x360] sm:$0xff]
      %v2828 = vld [vmem:[%s2718 + $0x368] sm:$0xff]
      %v2829 = vld [vmem:[%s2718 + $0x370] sm:$0xff]
      %v2830 = vld [vmem:[%s2718 + $0x378] sm:$0xff]
      %v2832 = vsel %vm795, %v2719, 0
      %v2835 = vsel %vm795, %v2720, 0
      %v2838 = vsel %vm795, %v2721, 0
      %v2841 = vsel %vm795, %v2722, 0
      %v2844 = vsel %vm795, %v2723, 0
      %v2847 = vsel %vm795, %v2724, 0
      %v2850 = vsel %vm795, %v2725, 0
      %v2853 = vsel %vm795, %v2726, 0
      %v2856 = vsel %vm795, %v2727, 0
      %v2859 = vsel %vm795, %v2728, 0
      %v2862 = vsel %vm795, %v2729, 0
      %v2865 = vsel %vm795, %v2730, 0
      %v2868 = vsel %vm795, %v2731, 0
      %v2871 = vsel %vm795, %v2732, 0
      %v2874 = vsel %vm795, %v2733, 0
      %v2877 = vsel %vm795, %v2734, 0
      %v2880 = vsel %vm795, %v2735, 0
      %v2883 = vsel %vm795, %v2736, 0
      %v2886 = vsel %vm795, %v2737, 0
      %v2889 = vsel %vm795, %v2738, 0
      %v2892 = vsel %vm795, %v2739, 0
      %v2895 = vsel %vm795, %v2740, 0
      %v2898 = vsel %vm795, %v2741, 0
      %v2901 = vsel %vm795, %v2742, 0
      %v2904 = vsel %vm795, %v2743, 0
      %v2907 = vsel %vm795, %v2744, 0
      %v2910 = vsel %vm795, %v2745, 0
      %v2913 = vsel %vm795, %v2746, 0
      %v2916 = vsel %vm795, %v2747, 0
      %v2919 = vsel %vm795, %v2748, 0
      %v2922 = vsel %vm795, %v2749, 0
      %v2925 = vsel %vm795, %v2750, 0
      %v2928 = vsel %vm795, %v2751, 0
      %v2931 = vsel %vm795, %v2752, 0
      %v2934 = vsel %vm795, %v2753, 0
      %v2937 = vsel %vm795, %v2754, 0
      %v2940 = vsel %vm795, %v2755, 0
      %v2943 = vsel %vm795, %v2756, 0
      %v2946 = vsel %vm795, %v2757, 0
      %v2949 = vsel %vm795, %v2758, 0
      %v2952 = vsel %vm795, %v2759, 0
      %v2955 = vsel %vm795, %v2760, 0
      %v2958 = vsel %vm795, %v2761, 0
      %v2961 = vsel %vm795, %v2762, 0
      %v2964 = vsel %vm795, %v2763, 0
      %v2967 = vsel %vm795, %v2764, 0
      %v2970 = vsel %vm795, %v2765, 0
      %v2973 = vsel %vm795, %v2766, 0
      %v2976 = vsel %vm795, %v2767, 0
      %v2979 = vsel %vm795, %v2768, 0
      %v2982 = vsel %vm795, %v2769, 0
      %v2985 = vsel %vm795, %v2770, 0
      %v2988 = vsel %vm795, %v2771, 0
      %v2991 = vsel %vm795, %v2772, 0
      %v2994 = vsel %vm795, %v2773, 0
      %v2997 = vsel %vm795, %v2774, 0
      %v3000 = vsel %vm795, %v2775, 0
      %v3003 = vsel %vm795, %v2776, 0
      %v3006 = vsel %vm795, %v2777, 0
      %v3009 = vsel %vm795, %v2778, 0
      %v3012 = vsel %vm795, %v2779, 0
      %v3015 = vsel %vm795, %v2780, 0
      %v3018 = vsel %vm795, %v2781, 0
      %v3021 = vsel %vm795, %v2782, 0
      %v3024 = vsel %vm795, %v2783, 0
      %v3027 = vsel %vm795, %v2784, 0
      %v3030 = vsel %vm795, %v2785, 0
      %v3033 = vsel %vm795, %v2786, 0
      %v3036 = vsel %vm795, %v2787, 0
      %v3039 = vsel %vm795, %v2788, 0
      %v3042 = vsel %vm795, %v2789, 0
      %v3045 = vsel %vm795, %v2790, 0
      %v3048 = vsel %vm795, %v2791, 0
      %v3051 = vsel %vm795, %v2792, 0
      %v3054 = vsel %vm795, %v2793, 0
      %v3057 = vsel %vm795, %v2794, 0
      %v3060 = vsel %vm795, %v2795, 0
      %v3063 = vsel %vm795, %v2796, 0
      %v3066 = vsel %vm795, %v2797, 0
      %v3069 = vsel %vm795, %v2798, 0
      %v3072 = vsel %vm795, %v2799, 0
      %v3075 = vsel %vm795, %v2800, 0
      %v3078 = vsel %vm795, %v2801, 0
      %v3081 = vsel %vm795, %v2802, 0
      %v3084 = vsel %vm795, %v2803, 0
      %v3087 = vsel %vm795, %v2804, 0
      %v3090 = vsel %vm795, %v2805, 0
      %v3093 = vsel %vm795, %v2806, 0
      %v3096 = vsel %vm795, %v2807, 0
      %v3099 = vsel %vm795, %v2808, 0
      %v3102 = vsel %vm795, %v2809, 0
      %v3105 = vsel %vm795, %v2810, 0
      %v3108 = vsel %vm795, %v2811, 0
      %v3111 = vsel %vm795, %v2812, 0
      %v3114 = vsel %vm795, %v2813, 0
      %v3117 = vsel %vm795, %v2814, 0
      %v3120 = vsel %vm795, %v2815, 0
      %v3123 = vsel %vm795, %v2816, 0
      %v3126 = vsel %vm795, %v2817, 0
      %v3129 = vsel %vm795, %v2818, 0
      %v3132 = vsel %vm795, %v2819, 0
      %v3135 = vsel %vm795, %v2820, 0
      %v3138 = vsel %vm795, %v2821, 0
      %v3141 = vsel %vm795, %v2822, 0
      %v3144 = vsel %vm795, %v2823, 0
      %v3147 = vsel %vm795, %v2824, 0
      %v3150 = vsel %vm795, %v2825, 0
      %v3153 = vsel %vm795, %v2826, 0
      %v3156 = vsel %vm795, %v2827, 0
      %v3159 = vsel %vm795, %v2828, 0
      %v3162 = vsel %vm795, %v2829, 0
      %v3165 = vsel %vm795, %v2830, 0
      %3167 = vmatprep.subr.mxu0 0.0
      %3168 = vmatpush1.msra.mxu0 %v542
      %3169 = vmatprep.subr.mxu0 0.0
      %3170 = vmatpush1.msra.mxu0 %v547
      %3171 = vmatprep.subr.mxu0 0.0
      %3172 = vmatpush1.msra.mxu0 %v552
      %3173 = vmatprep.subr.mxu0 0.0
      %3174 = vmatpush1.msra.mxu0 %v557
      %3175 = vmatprep.subr.mxu0 0.0
      %3176 = vmatpush1.msra.mxu0 %v562
      %3177 = vmatprep.subr.mxu0 0.0
      %3178 = vmatpush1.msra.mxu0 %v567
      %3179 = vmatprep.subr.mxu0 0.0
      %3180 = vmatpush1.msra.mxu0 0.0
      %3181 = vmatprep.subr.mxu0 0.0
      %3182 = vmatpush1.msra.mxu0 0.0
      %3183 = vmatprep.subr.mxu0 0.0
      %3184 = vmatpush1.msra.mxu0 0.0
      %3185 = vmatprep.subr.mxu0 0.0
      %3186 = vmatpush1.msra.mxu0 0.0
      %3187 = vmatprep.subr.mxu0 0.0
      %3188 = vmatpush1.msra.mxu0 0.0
      %3189 = vmatprep.subr.mxu0 0.0
      %3190 = vmatpush1.msra.mxu0 0.0
      %3191 = vmatprep.subr.mxu0 0.0
      %3192 = vmatpush1.msra.mxu0 0.0
      %3193 = vmatprep.subr.mxu0 0.0
      %3194 = vmatpush1.msra.mxu0 0.0
      %3195 = vmatprep.subr.mxu0 0.0
      %3196 = vmatpush1.msra.mxu0 0.0
      %3197 = vmatprep.subr.mxu0 0.0
      %3198 = vmatpush1.msra.mxu0 0.0
      %3199 = vmatprep.subr.mxu0 0.0
      %3200 = vmatpush1.msra.mxu0 0.0
      %3201 = vmatprep.subr.mxu0 0.0
      %3202 = vmatpush1.msra.mxu0 0.0
      %3203 = vmatprep.subr.mxu0 0.0
      %3204 = vmatpush1.msra.mxu0 0.0
      %3205 = vmatprep.subr.mxu0 0.0
      %3206 = vmatpush1.msra.mxu0 0.0
      %3207 = vmatprep.subr.mxu0 0.0
      %3208 = vmatpush1.msra.mxu0 0.0
      %3209 = vmatprep.subr.mxu0 0.0
      %3210 = vmatpush1.msra.mxu0 0.0
      %3211 = vmatprep.subr.mxu0 0.0
      %3212 = vmatpush1.msra.mxu0 0.0
      %3213 = vmatprep.subr.mxu0 0.0
      %3214 = vmatpush1.msra.mxu0 0.0
      %3215 = vmatprep.subr.mxu0 0.0
      %3216 = vmatpush1.msra.mxu0 0.0
      %3217 = vmatprep.subr.mxu0 0.0
      %3218 = vmatpush1.msra.mxu0 0.0
      %3219 = vmatprep.subr.mxu0 0.0
      %3220 = vmatpush1.msra.mxu0 0.0
      %3221 = vmatprep.subr.mxu0 0.0
      %3222 = vmatpush1.msra.mxu0 0.0
      %3223 = vmatprep.subr.mxu0 0.0
      %3224 = vmatpush1.msra.mxu0 0.0
      %3225 = vmatprep.subr.mxu0 0.0
      %3226 = vmatpush1.msra.mxu0 0.0
      %3227 = vmatprep.subr.mxu0 0.0
      %3228 = vmatpush1.msra.mxu0 0.0
      %3229 = vmatprep.subr.mxu0 0.0
      %3230 = vmatpush1.msra.mxu0 0.0
      %3231 = vmatprep.mubr.f32.mxu0 0.0
      %3232 = vmatmul.mubr.f32.gmra.mrb[0].mxu0 %v2832
      %v3233 = vpop.f32.mrb[0].mxu0
      %v3234 = vadd.f32 0.0, %v3233
      %v3235 = vpop.f32.mrb[0].mxu0
      %3236 = vmatprep.mubr.f32.mxu0 0.0
      %3237 = vmatmul.mubr.f32.gmra.mrb[0].mxu0 %v2835
      %v3238 = vpop.f32.mrb[0].mxu0
      %v3239 = vadd.f32 0.0, %v3238
      %v3240 = vpop.f32.mrb[0].mxu0
      %3241 = vmatprep.mubr.f32.mxu0 0.0
      %3242 = vmatmul.mubr.f32.gmra.mrb[0].mxu0 %v2838
      %v3243 = vpop.f32.mrb[0].mxu0
      %v3244 = vadd.f32 0.0, %v3243
      %v3245 = vpop.f32.mrb[0].mxu0
      %3246 = vmatprep.mubr.f32.mxu0 0.0
      %3247 = vmatmul.mubr.f32.gmra.mrb[0].mxu0 %v2841
      %v3248 = vpop.f32.mrb[0].mxu0
      %v3249 = vadd.f32 0.0, %v3248
      %v3250 = vpop.f32.mrb[0].mxu0
      %3251 = vmatprep.mubr.f32.mxu0 0.0
      %3252 = vmatmul.mubr.f32.gmra.mrb[0].mxu0 %v2844
      %v3253 = vpop.f32.mrb[0].mxu0
      %v3254 = vadd.f32 0.0, %v3253
      %v3255 = vpop.f32.mrb[0].mxu0
      %3256 = vmatprep.mubr.f32.mxu0 0.0
      %3257 = vmatmul.mubr.f32.gmra.mrb[0].mxu0 %v2847
      %v3258 = vpop.f32.mrb[0].mxu0
      %v3259 = vadd.f32 0.0, %v3258
      %v3260 = vpop.f32.mrb[0].mxu0
      %3261 = vmatprep.mubr.f32.mxu0 0.0
      %3262 = vmatmul.mubr.f32.gmra.mrb[0].mxu0 %v2850
      %v3263 = vpop.f32.mrb[0].mxu0
      %v3264 = vadd.f32 0.0, %v3263
      %v3265 = vpop.f32.mrb[0].mxu0
      %3266 = vmatprep.mubr.f32.mxu0 0.0
      %3267 = vmatmul.mubr.f32.gmra.mrb[0].mxu0 %v2853
      %v3268 = vpop.f32.mrb[0].mxu0
      %v3269 = vadd.f32 0.0, %v3268
      %v3270 = vpop.f32.mrb[0].mxu0
      %3271 = vmatprep.mubr.f32.mxu0 0.0
      %3272 = vmatmul.mubr.f32.gmra.mrb[0].mxu0 %v2856
      %v3273 = vpop.f32.mrb[0].mxu0
      %v3274 = vadd.f32 0.0, %v3273
      %v3275 = vpop.f32.mrb[0].mxu0
      %3276 = vmatprep.mubr.f32.mxu0 0.0
      %3277 = vmatmul.mubr.f32.gmra.mrb[0].mxu0 %v2859
      %v3278 = vpop.f32.mrb[0].mxu0
      %v3279 = vadd.f32 0.0, %v3278
      %v3280 = vpop.f32.mrb[0].mxu0
      %3281 = vmatprep.mubr.f32.mxu0 0.0
      %3282 = vmatmul.mubr.f32.gmra.mrb[0].mxu0 %v2862
      %v3283 = vpop.f32.mrb[0].mxu0
      %v3284 = vadd.f32 0.0, %v3283
      %v3285 = vpop.f32.mrb[0].mxu0
      %3286 = vmatprep.mubr.f32.mxu0 0.0
      %3287 = vmatmul.mubr.f32.gmra.mrb[0].mxu0 %v2865
      %v3288 = vpop.f32.mrb[0].mxu0
      %v3289 = vadd.f32 0.0, %v3288
      %v3290 = vpop.f32.mrb[0].mxu0
      %3291 = vmatprep.mubr.f32.mxu0 0.0
      %3292 = vmatmul.mubr.f32.gmra.mrb[0].mxu0 %v2868
      %v3293 = vpop.f32.mrb[0].mxu0
      %v3294 = vadd.f32 0.0, %v3293
      %v3295 = vpop.f32.mrb[0].mxu0
      %3296 = vmatprep.mubr.f32.mxu0 0.0
      %3297 = vmatmul.mubr.f32.gmra.mrb[0].mxu0 %v2871
      %v3298 = vpop.f32.mrb[0].mxu0
      %v3299 = vadd.f32 0.0, %v3298
      %v3300 = vpop.f32.mrb[0].mxu0
      %3301 = vmatprep.mubr.f32.mxu0 0.0
      %3302 = vmatmul.mubr.f32.gmra.mrb[0].mxu0 %v2874
      %v3303 = vpop.f32.mrb[0].mxu0
      %v3304 = vadd.f32 0.0, %v3303
      %v3305 = vpop.f32.mrb[0].mxu0
      %3306 = vmatprep.mubr.f32.mxu0 0.0
      %3307 = vmatmul.mubr.f32.gmra.mrb[0].mxu0 %v2877
      %v3308 = vpop.f32.mrb[0].mxu0
      %v3309 = vadd.f32 0.0, %v3308
      %v3310 = vpop.f32.mrb[0].mxu0
      %3311 = vmatprep.mubr.f32.mxu0 0.0
      %3312 = vmatmul.mubr.f32.gmra.mrb[0].mxu0 %v2880
      %v3313 = vpop.f32.mrb[0].mxu0
      %v3314 = vadd.f32 0.0, %v3313
      %v3315 = vpop.f32.mrb[0].mxu0
      %3316 = vmatprep.mubr.f32.mxu0 0.0
      %3317 = vmatmul.mubr.f32.gmra.mrb[0].mxu0 %v2883
      %v3318 = vpop.f32.mrb[0].mxu0
      %v3319 = vadd.f32 0.0, %v3318
      %v3320 = vpop.f32.mrb[0].mxu0
      %3321 = vmatprep.mubr.f32.mxu0 0.0
      %3322 = vmatmul.mubr.f32.gmra.mrb[0].mxu0 %v2886
      %v3323 = vpop.f32.mrb[0].mxu0
      %v3324 = vadd.f32 0.0, %v3323
      %v3325 = vpop.f32.mrb[0].mxu0
      %3326 = vmatprep.mubr.f32.mxu0 0.0
      %3327 = vmatmul.mubr.f32.gmra.mrb[0].mxu0 %v2889
      %v3328 = vpop.f32.mrb[0].mxu0
      %v3329 = vadd.f32 0.0, %v3328
      %v3330 = vpop.f32.mrb[0].mxu0
      %3331 = vmatprep.mubr.f32.mxu0 0.0
      %3332 = vmatmul.mubr.f32.gmra.mrb[0].mxu0 %v2892
      %v3333 = vpop.f32.mrb[0].mxu0
      %v3334 = vadd.f32 0.0, %v3333
      %v3335 = vpop.f32.mrb[0].mxu0
      %3336 = vmatprep.mubr.f32.mxu0 0.0
      %3337 = vmatmul.mubr.f32.gmra.mrb[0].mxu0 %v2895
      %v3338 = vpop.f32.mrb[0].mxu0
      %v3339 = vadd.f32 0.0, %v3338
      %v3340 = vpop.f32.mrb[0].mxu0
      %3341 = vmatprep.mubr.f32.mxu0 0.0
      %3342 = vmatmul.mubr.f32.gmra.mrb[0].mxu0 %v2898
      %v3343 = vpop.f32.mrb[0].mxu0
      %v3344 = vadd.f32 0.0, %v3343
      %v3345 = vpop.f32.mrb[0].mxu0
      %3346 = vmatprep.mubr.f32.mxu0 0.0
      %3347 = vmatmul.mubr.f32.gmra.mrb[0].mxu0 %v2901
      %v3348 = vpop.f32.mrb[0].mxu0
      %v3349 = vadd.f32 0.0, %v3348
      %v3350 = vpop.f32.mrb[0].mxu0
      %3351 = vmatprep.mubr.f32.mxu0 0.0
      %3352 = vmatmul.mubr.f32.gmra.mrb[0].mxu0 %v2904
      %v3353 = vpop.f32.mrb[0].mxu0
      %v3354 = vadd.f32 0.0, %v3353
      %v3355 = vpop.f32.mrb[0].mxu0
      %3356 = vmatprep.mubr.f32.mxu0 0.0
      %3357 = vmatmul.mubr.f32.gmra.mrb[0].mxu0 %v2907
      %v3358 = vpop.f32.mrb[0].mxu0
      %v3359 = vadd.f32 0.0, %v3358
      %v3360 = vpop.f32.mrb[0].mxu0
      %3361 = vmatprep.mubr.f32.mxu0 0.0
      %3362 = vmatmul.mubr.f32.gmra.mrb[0].mxu0 %v2910
      %v3363 = vpop.f32.mrb[0].mxu0
      %v3364 = vadd.f32 0.0, %v3363
      %v3365 = vpop.f32.mrb[0].mxu0
      %3366 = vmatprep.mubr.f32.mxu0 0.0
      %3367 = vmatmul.mubr.f32.gmra.mrb[0].mxu0 %v2913
      %v3368 = vpop.f32.mrb[0].mxu0
      %v3369 = vadd.f32 0.0, %v3368
      %v3370 = vpop.f32.mrb[0].mxu0
      %3371 = vmatprep.mubr.f32.mxu0 0.0
      %3372 = vmatmul.mubr.f32.gmra.mrb[0].mxu0 %v2916
      %v3373 = vpop.f32.mrb[0].mxu0
      %v3374 = vadd.f32 0.0, %v3373
      %v3375 = vpop.f32.mrb[0].mxu0
      %3376 = vmatprep.mubr.f32.mxu0 0.0
      %3377 = vmatmul.mubr.f32.gmra.mrb[0].mxu0 %v2919
      %v3378 = vpop.f32.mrb[0].mxu0
      %v3379 = vadd.f32 0.0, %v3378
      %v3380 = vpop.f32.mrb[0].mxu0
      %3381 = vmatprep.mubr.f32.mxu0 0.0
      %3382 = vmatmul.mubr.f32.gmra.mrb[0].mxu0 %v2922
      %v3383 = vpop.f32.mrb[0].mxu0
      %v3384 = vadd.f32 0.0, %v3383
      %v3385 = vpop.f32.mrb[0].mxu0
      %3386 = vmatprep.mubr.f32.mxu0 0.0
      %3387 = vmatmul.mubr.f32.gmra.mrb[0].mxu0 %v2925
      %v3388 = vpop.f32.mrb[0].mxu0
      %v3389 = vadd.f32 0.0, %v3388
      %v3390 = vpop.f32.mrb[0].mxu0
      %3391 = vmatprep.mubr.f32.mxu0 0.0
      %3392 = vmatmul.mubr.f32.gmra.mrb[0].mxu0 %v2928
      %v3393 = vpop.f32.mrb[0].mxu0
      %v3394 = vadd.f32 0.0, %v3393
      %v3395 = vpop.f32.mrb[0].mxu0
      %3396 = vmatprep.mubr.f32.mxu0 0.0
      %3397 = vmatmul.mubr.f32.gmra.mrb[0].mxu0 %v2931
      %v3398 = vpop.f32.mrb[0].mxu0
      %v3399 = vadd.f32 0.0, %v3398
      %v3400 = vpop.f32.mrb[0].mxu0
      %3401 = vmatprep.mubr.f32.mxu0 0.0
      %3402 = vmatmul.mubr.f32.gmra.mrb[0].mxu0 %v2934
      %v3403 = vpop.f32.mrb[0].mxu0
      %v3404 = vadd.f32 0.0, %v3403
      %v3405 = vpop.f32.mrb[0].mxu0
      %3406 = vmatprep.mubr.f32.mxu0 0.0
      %3407 = vmatmul.mubr.f32.gmra.mrb[0].mxu0 %v2937
      %v3408 = vpop.f32.mrb[0].mxu0
      %v3409 = vadd.f32 0.0, %v3408
      %v3410 = vpop.f32.mrb[0].mxu0
      %3411 = vmatprep.mubr.f32.mxu0 0.0
      %3412 = vmatmul.mubr.f32.gmra.mrb[0].mxu0 %v2940
      %v3413 = vpop.f32.mrb[0].mxu0
      %v3414 = vadd.f32 0.0, %v3413
      %v3415 = vpop.f32.mrb[0].mxu0
      %3416 = vmatprep.mubr.f32.mxu0 0.0
      %3417 = vmatmul.mubr.f32.gmra.mrb[0].mxu0 %v2943
      %v3418 = vpop.f32.mrb[0].mxu0
      %v3419 = vadd.f32 0.0, %v3418
      %v3420 = vpop.f32.mrb[0].mxu0
      %3421 = vmatprep.mubr.f32.mxu0 0.0
      %3422 = vmatmul.mubr.f32.gmra.mrb[0].mxu0 %v2946
      %v3423 = vpop.f32.mrb[0].mxu0
      %v3424 = vadd.f32 0.0, %v3423
      %v3425 = vpop.f32.mrb[0].mxu0
      %3426 = vmatprep.mubr.f32.mxu0 0.0
      %3427 = vmatmul.mubr.f32.gmra.mrb[0].mxu0 %v2949
      %v3428 = vpop.f32.mrb[0].mxu0
      %v3429 = vadd.f32 0.0, %v3428
      %v3430 = vpop.f32.mrb[0].mxu0
      %3431 = vmatprep.mubr.f32.mxu0 0.0
      %3432 = vmatmul.mubr.f32.gmra.mrb[0].mxu0 %v2952
      %v3433 = vpop.f32.mrb[0].mxu0
      %v3434 = vadd.f32 0.0, %v3433
      %v3435 = vpop.f32.mrb[0].mxu0
      %3436 = vmatprep.mubr.f32.mxu0 0.0
      %3437 = vmatmul.mubr.f32.gmra.mrb[0].mxu0 %v2955
      %v3438 = vpop.f32.mrb[0].mxu0
      %v3439 = vadd.f32 0.0, %v3438
      %v3440 = vpop.f32.mrb[0].mxu0
      %3441 = vmatprep.mubr.f32.mxu0 0.0
      %3442 = vmatmul.mubr.f32.gmra.mrb[0].mxu0 %v2958
      %v3443 = vpop.f32.mrb[0].mxu0
      %v3444 = vadd.f32 0.0, %v3443
      %v3445 = vpop.f32.mrb[0].mxu0
      %3446 = vmatprep.mubr.f32.mxu0 0.0
      %3447 = vmatmul.mubr.f32.gmra.mrb[0].mxu0 %v2961
      %v3448 = vpop.f32.mrb[0].mxu0
      %v3449 = vadd.f32 0.0, %v3448
      %v3450 = vpop.f32.mrb[0].mxu0
      %3451 = vmatprep.mubr.f32.mxu0 0.0
      %3452 = vmatmul.mubr.f32.gmra.mrb[0].mxu0 %v2964
      %v3453 = vpop.f32.mrb[0].mxu0
      %v3454 = vadd.f32 0.0, %v3453
      %v3455 = vpop.f32.mrb[0].mxu0
      %3456 = vmatprep.mubr.f32.mxu0 0.0
      %3457 = vmatmul.mubr.f32.gmra.mrb[0].mxu0 %v2967
      %v3458 = vpop.f32.mrb[0].mxu0
      %v3459 = vadd.f32 0.0, %v3458
      %v3460 = vpop.f32.mrb[0].mxu0
      %3461 = vmatprep.mubr.f32.mxu0 0.0
      %3462 = vmatmul.mubr.f32.gmra.mrb[0].mxu0 %v2970
      %v3463 = vpop.f32.mrb[0].mxu0
      %v3464 = vadd.f32 0.0, %v3463
      %v3465 = vpop.f32.mrb[0].mxu0
      %3466 = vmatprep.mubr.f32.mxu0 0.0
      %3467 = vmatmul.mubr.f32.gmra.mrb[0].mxu0 %v2973
      %v3468 = vpop.f32.mrb[0].mxu0
      %v3469 = vadd.f32 0.0, %v3468
      %v3470 = vpop.f32.mrb[0].mxu0
      %3471 = vmatprep.mubr.f32.mxu0 0.0
      %3472 = vmatmul.mubr.f32.gmra.mrb[0].mxu0 %v2976
      %v3473 = vpop.f32.mrb[0].mxu0
      %v3474 = vadd.f32 0.0, %v3473
      %v3475 = vpop.f32.mrb[0].mxu0
      %3476 = vmatprep.mubr.f32.mxu0 0.0
      %3477 = vmatmul.mubr.f32.gmra.mrb[0].mxu0 %v2979
      %v3478 = vpop.f32.mrb[0].mxu0
      %v3479 = vadd.f32 0.0, %v3478
      %v3480 = vpop.f32.mrb[0].mxu0
      %3481 = vmatprep.mubr.f32.mxu0 0.0
      %3482 = vmatmul.mubr.f32.gmra.mrb[0].mxu0 %v2982
      %v3483 = vpop.f32.mrb[0].mxu0
      %v3484 = vadd.f32 0.0, %v3483
      %v3485 = vpop.f32.mrb[0].mxu0
      %3486 = vmatprep.mubr.f32.mxu0 0.0
      %3487 = vmatmul.mubr.f32.gmra.mrb[0].mxu0 %v2985
      %v3488 = vpop.f32.mrb[0].mxu0
      %v3489 = vadd.f32 0.0, %v3488
      %v3490 = vpop.f32.mrb[0].mxu0
      %3491 = vmatprep.mubr.f32.mxu0 0.0
      %3492 = vmatmul.mubr.f32.gmra.mrb[0].mxu0 %v2988
      %v3493 = vpop.f32.mrb[0].mxu0
      %v3494 = vadd.f32 0.0, %v3493
      %v3495 = vpop.f32.mrb[0].mxu0
      %3496 = vmatprep.mubr.f32.mxu0 0.0
      %3497 = vmatmul.mubr.f32.gmra.mrb[0].mxu0 %v2991
      %v3498 = vpop.f32.mrb[0].mxu0
      %v3499 = vadd.f32 0.0, %v3498
      %v3500 = vpop.f32.mrb[0].mxu0
      %3501 = vmatprep.mubr.f32.mxu0 0.0
      %3502 = vmatmul.mubr.f32.gmra.mrb[0].mxu0 %v2994
      %v3503 = vpop.f32.mrb[0].mxu0
      %v3504 = vadd.f32 0.0, %v3503
      %v3505 = vpop.f32.mrb[0].mxu0
      %3506 = vmatprep.mubr.f32.mxu0 0.0
      %3507 = vmatmul.mubr.f32.gmra.mrb[0].mxu0 %v2997
      %v3508 = vpop.f32.mrb[0].mxu0
      %v3509 = vadd.f32 0.0, %v3508
      %v3510 = vpop.f32.mrb[0].mxu0
      %3511 = vmatprep.mubr.f32.mxu0 0.0
      %3512 = vmatmul.mubr.f32.gmra.mrb[0].mxu0 %v3000
      %v3513 = vpop.f32.mrb[0].mxu0
      %v3514 = vadd.f32 0.0, %v3513
      %v3515 = vpop.f32.mrb[0].mxu0
      %3516 = vmatprep.mubr.f32.mxu0 0.0
      %3517 = vmatmul.mubr.f32.gmra.mrb[0].mxu0 %v3003
      %v3518 = vpop.f32.mrb[0].mxu0
      %v3519 = vadd.f32 0.0, %v3518
      %v3520 = vpop.f32.mrb[0].mxu0
      %3521 = vmatprep.mubr.f32.mxu0 0.0
      %3522 = vmatmul.mubr.f32.gmra.mrb[0].mxu0 %v3006
      %v3523 = vpop.f32.mrb[0].mxu0
      %v3524 = vadd.f32 0.0, %v3523
      %v3525 = vpop.f32.mrb[0].mxu0
      %3526 = vmatprep.mubr.f32.mxu0 0.0
      %3527 = vmatmul.mubr.f32.gmra.mrb[0].mxu0 %v3009
      %v3528 = vpop.f32.mrb[0].mxu0
      %v3529 = vadd.f32 0.0, %v3528
      %v3530 = vpop.f32.mrb[0].mxu0
      %3531 = vmatprep.mubr.f32.mxu0 0.0
      %3532 = vmatmul.mubr.f32.gmra.mrb[0].mxu0 %v3012
      %v3533 = vpop.f32.mrb[0].mxu0
      %v3534 = vadd.f32 0.0, %v3533
      %v3535 = vpop.f32.mrb[0].mxu0
      %3536 = vmatprep.mubr.f32.mxu0 0.0
      %3537 = vmatmul.mubr.f32.gmra.mrb[0].mxu0 %v3015
      %v3538 = vpop.f32.mrb[0].mxu0
      %v3539 = vadd.f32 0.0, %v3538
      %v3540 = vpop.f32.mrb[0].mxu0
      %3541 = vmatprep.mubr.f32.mxu0 0.0
      %3542 = vmatmul.mubr.f32.gmra.mrb[0].mxu0 %v3018
      %v3543 = vpop.f32.mrb[0].mxu0
      %v3544 = vadd.f32 0.0, %v3543
      %v3545 = vpop.f32.mrb[0].mxu0
      %3546 = vmatprep.mubr.f32.mxu0 0.0
      %3547 = vmatmul.mubr.f32.gmra.mrb[0].mxu0 %v3021
      %v3548 = vpop.f32.mrb[0].mxu0
      %v3549 = vadd.f32 0.0, %v3548
      %v3550 = vpop.f32.mrb[0].mxu0
      %3551 = vmatprep.mubr.f32.mxu0 0.0
      %3552 = vmatmul.mubr.f32.gmra.mrb[0].mxu0 %v3024
      %v3553 = vpop.f32.mrb[0].mxu0
      %v3554 = vadd.f32 0.0, %v3553
      %v3555 = vpop.f32.mrb[0].mxu0
      %3556 = vmatprep.mubr.f32.mxu0 0.0
      %3557 = vmatmul.mubr.f32.gmra.mrb[0].mxu0 %v3027
      %v3558 = vpop.f32.mrb[0].mxu0
      %v3559 = vadd.f32 0.0, %v3558
      %v3560 = vpop.f32.mrb[0].mxu0
      %3561 = vmatprep.mubr.f32.mxu0 0.0
      %3562 = vmatmul.mubr.f32.gmra.mrb[0].mxu0 %v3030
      %v3563 = vpop.f32.mrb[0].mxu0
      %v3564 = vadd.f32 0.0, %v3563
      %v3565 = vpop.f32.mrb[0].mxu0
      %3566 = vmatprep.mubr.f32.mxu0 0.0
      %3567 = vmatmul.mubr.f32.gmra.mrb[0].mxu0 %v3033
      %v3568 = vpop.f32.mrb[0].mxu0
      %v3569 = vadd.f32 0.0, %v3568
      %v3570 = vpop.f32.mrb[0].mxu0
      %3571 = vmatprep.mubr.f32.mxu0 0.0
      %3572 = vmatmul.mubr.f32.gmra.mrb[0].mxu0 %v3036
      %v3573 = vpop.f32.mrb[0].mxu0
      %v3574 = vadd.f32 0.0, %v3573
      %v3575 = vpop.f32.mrb[0].mxu0
      %3576 = vmatprep.mubr.f32.mxu0 0.0
      %3577 = vmatmul.mubr.f32.gmra.mrb[0].mxu0 %v3039
      %v3578 = vpop.f32.mrb[0].mxu0
      %v3579 = vadd.f32 0.0, %v3578
      %v3580 = vpop.f32.mrb[0].mxu0
      %3581 = vmatprep.mubr.f32.mxu0 0.0
      %3582 = vmatmul.mubr.f32.gmra.mrb[0].mxu0 %v3042
      %v3583 = vpop.f32.mrb[0].mxu0
      %v3584 = vadd.f32 0.0, %v3583
      %v3585 = vpop.f32.mrb[0].mxu0
      %3586 = vmatprep.mubr.f32.mxu0 0.0
      %3587 = vmatmul.mubr.f32.gmra.mrb[0].mxu0 %v3045
      %v3588 = vpop.f32.mrb[0].mxu0
      %v3589 = vadd.f32 0.0, %v3588
      %v3590 = vpop.f32.mrb[0].mxu0
      %3591 = vmatprep.mubr.f32.mxu0 0.0
      %3592 = vmatmul.mubr.f32.gmra.mrb[0].mxu0 %v3048
      %v3593 = vpop.f32.mrb[0].mxu0
      %v3594 = vadd.f32 0.0, %v3593
      %v3595 = vpop.f32.mrb[0].mxu0
      %3596 = vmatprep.mubr.f32.mxu0 0.0
      %3597 = vmatmul.mubr.f32.gmra.mrb[0].mxu0 %v3051
      %v3598 = vpop.f32.mrb[0].mxu0
      %v3599 = vadd.f32 0.0, %v3598
      %v3600 = vpop.f32.mrb[0].mxu0
      %3601 = vmatprep.mubr.f32.mxu0 0.0
      %3602 = vmatmul.mubr.f32.gmra.mrb[0].mxu0 %v3054
      %v3603 = vpop.f32.mrb[0].mxu0
      %v3604 = vadd.f32 0.0, %v3603
      %v3605 = vpop.f32.mrb[0].mxu0
      %3606 = vmatprep.mubr.f32.mxu0 0.0
      %3607 = vmatmul.mubr.f32.gmra.mrb[0].mxu0 %v3057
      %v3608 = vpop.f32.mrb[0].mxu0
      %v3609 = vadd.f32 0.0, %v3608
      %v3610 = vpop.f32.mrb[0].mxu0
      %3611 = vmatprep.mubr.f32.mxu0 0.0
      %3612 = vmatmul.mubr.f32.gmra.mrb[0].mxu0 %v3060
      %v3613 = vpop.f32.mrb[0].mxu0
      %v3614 = vadd.f32 0.0, %v3613
      %v3615 = vpop.f32.mrb[0].mxu0
      %3616 = vmatprep.mubr.f32.mxu0 0.0
      %3617 = vmatmul.mubr.f32.gmra.mrb[0].mxu0 %v3063
      %v3618 = vpop.f32.mrb[0].mxu0
      %v3619 = vadd.f32 0.0, %v3618
      %v3620 = vpop.f32.mrb[0].mxu0
      %3621 = vmatprep.mubr.f32.mxu0 0.0
      %3622 = vmatmul.mubr.f32.gmra.mrb[0].mxu0 %v3066
      %v3623 = vpop.f32.mrb[0].mxu0
      %v3624 = vadd.f32 0.0, %v3623
      %v3625 = vpop.f32.mrb[0].mxu0
      %3626 = vmatprep.mubr.f32.mxu0 0.0
      %3627 = vmatmul.mubr.f32.gmra.mrb[0].mxu0 %v3069
      %v3628 = vpop.f32.mrb[0].mxu0
      %v3629 = vadd.f32 0.0, %v3628
      %v3630 = vpop.f32.mrb[0].mxu0
      %3631 = vmatprep.mubr.f32.mxu0 0.0
      %3632 = vmatmul.mubr.f32.gmra.mrb[0].mxu0 %v3072
      %v3633 = vpop.f32.mrb[0].mxu0
      %v3634 = vadd.f32 0.0, %v3633
      %v3635 = vpop.f32.mrb[0].mxu0
      %3636 = vmatprep.mubr.f32.mxu0 0.0
      %3637 = vmatmul.mubr.f32.gmra.mrb[0].mxu0 %v3075
      %v3638 = vpop.f32.mrb[0].mxu0
      %v3639 = vadd.f32 0.0, %v3638
      %v3640 = vpop.f32.mrb[0].mxu0
      %3641 = vmatprep.mubr.f32.mxu0 0.0
      %3642 = vmatmul.mubr.f32.gmra.mrb[0].mxu0 %v3078
      %v3643 = vpop.f32.mrb[0].mxu0
      %v3644 = vadd.f32 0.0, %v3643
      %v3645 = vpop.f32.mrb[0].mxu0
      %3646 = vmatprep.mubr.f32.mxu0 0.0
      %3647 = vmatmul.mubr.f32.gmra.mrb[0].mxu0 %v3081
      %v3648 = vpop.f32.mrb[0].mxu0
      %v3649 = vadd.f32 0.0, %v3648
      %v3650 = vpop.f32.mrb[0].mxu0
      %3651 = vmatprep.mubr.f32.mxu0 0.0
      %3652 = vmatmul.mubr.f32.gmra.mrb[0].mxu0 %v3084
      %v3653 = vpop.f32.mrb[0].mxu0
      %v3654 = vadd.f32 0.0, %v3653
      %v3655 = vpop.f32.mrb[0].mxu0
      %3656 = vmatprep.mubr.f32.mxu0 0.0
      %3657 = vmatmul.mubr.f32.gmra.mrb[0].mxu0 %v3087
      %v3658 = vpop.f32.mrb[0].mxu0
      %v3659 = vadd.f32 0.0, %v3658
      %v3660 = vpop.f32.mrb[0].mxu0
      %3661 = vmatprep.mubr.f32.mxu0 0.0
      %3662 = vmatmul.mubr.f32.gmra.mrb[0].mxu0 %v3090
      %v3663 = vpop.f32.mrb[0].mxu0
      %v3664 = vadd.f32 0.0, %v3663
      %v3665 = vpop.f32.mrb[0].mxu0
      %3666 = vmatprep.mubr.f32.mxu0 0.0
      %3667 = vmatmul.mubr.f32.gmra.mrb[0].mxu0 %v3093
      %v3668 = vpop.f32.mrb[0].mxu0
      %v3669 = vadd.f32 0.0, %v3668
      %v3670 = vpop.f32.mrb[0].mxu0
      %3671 = vmatprep.mubr.f32.mxu0 0.0
      %3672 = vmatmul.mubr.f32.gmra.mrb[0].mxu0 %v3096
      %v3673 = vpop.f32.mrb[0].mxu0
      %v3674 = vadd.f32 0.0, %v3673
      %v3675 = vpop.f32.mrb[0].mxu0
      %3676 = vmatprep.mubr.f32.mxu0 0.0
      %3677 = vmatmul.mubr.f32.gmra.mrb[0].mxu0 %v3099
      %v3678 = vpop.f32.mrb[0].mxu0
      %v3679 = vadd.f32 0.0, %v3678
      %v3680 = vpop.f32.mrb[0].mxu0
      %3681 = vmatprep.mubr.f32.mxu0 0.0
      %3682 = vmatmul.mubr.f32.gmra.mrb[0].mxu0 %v3102
      %v3683 = vpop.f32.mrb[0].mxu0
      %v3684 = vadd.f32 0.0, %v3683
      %v3685 = vpop.f32.mrb[0].mxu0
      %3686 = vmatprep.mubr.f32.mxu0 0.0
      %3687 = vmatmul.mubr.f32.gmra.mrb[0].mxu0 %v3105
      %v3688 = vpop.f32.mrb[0].mxu0
      %v3689 = vadd.f32 0.0, %v3688
      %v3690 = vpop.f32.mrb[0].mxu0
      %3691 = vmatprep.mubr.f32.mxu0 0.0
      %3692 = vmatmul.mubr.f32.gmra.mrb[0].mxu0 %v3108
      %v3693 = vpop.f32.mrb[0].mxu0
      %v3694 = vadd.f32 0.0, %v3693
      %v3695 = vpop.f32.mrb[0].mxu0
      %3696 = vmatprep.mubr.f32.mxu0 0.0
      %3697 = vmatmul.mubr.f32.gmra.mrb[0].mxu0 %v3111
      %v3698 = vpop.f32.mrb[0].mxu0
      %v3699 = vadd.f32 0.0, %v3698
      %v3700 = vpop.f32.mrb[0].mxu0
      %3701 = vmatprep.mubr.f32.mxu0 0.0
      %3702 = vmatmul.mubr.f32.gmra.mrb[0].mxu0 %v3114
      %v3703 = vpop.f32.mrb[0].mxu0
      %v3704 = vadd.f32 0.0, %v3703
      %v3705 = vpop.f32.mrb[0].mxu0
      %3706 = vmatprep.mubr.f32.mxu0 0.0
      %3707 = vmatmul.mubr.f32.gmra.mrb[0].mxu0 %v3117
      %v3708 = vpop.f32.mrb[0].mxu0
      %v3709 = vadd.f32 0.0, %v3708
      %v3710 = vpop.f32.mrb[0].mxu0
      %3711 = vmatprep.mubr.f32.mxu0 0.0
      %3712 = vmatmul.mubr.f32.gmra.mrb[0].mxu0 %v3120
      %v3713 = vpop.f32.mrb[0].mxu0
      %v3714 = vadd.f32 0.0, %v3713
      %v3715 = vpop.f32.mrb[0].mxu0
      %3716 = vmatprep.mubr.f32.mxu0 0.0
      %3717 = vmatmul.mubr.f32.gmra.mrb[0].mxu0 %v3123
      %v3718 = vpop.f32.mrb[0].mxu0
      %v3719 = vadd.f32 0.0, %v3718
      %v3720 = vpop.f32.mrb[0].mxu0
      %3721 = vmatprep.mubr.f32.mxu0 0.0
      %3722 = vmatmul.mubr.f32.gmra.mrb[0].mxu0 %v3126
      %v3723 = vpop.f32.mrb[0].mxu0
      %v3724 = vadd.f32 0.0, %v3723
      %v3725 = vpop.f32.mrb[0].mxu0
      %3726 = vmatprep.mubr.f32.mxu0 0.0
      %3727 = vmatmul.mubr.f32.gmra.mrb[0].mxu0 %v3129
      %v3728 = vpop.f32.mrb[0].mxu0
      %v3729 = vadd.f32 0.0, %v3728
      %v3730 = vpop.f32.mrb[0].mxu0
      %3731 = vmatprep.mubr.f32.mxu0 0.0
      %3732 = vmatmul.mubr.f32.gmra.mrb[0].mxu0 %v3132
      %v3733 = vpop.f32.mrb[0].mxu0
      %v3734 = vadd.f32 0.0, %v3733
      %v3735 = vpop.f32.mrb[0].mxu0
      %3736 = vmatprep.mubr.f32.mxu0 0.0
      %3737 = vmatmul.mubr.f32.gmra.mrb[0].mxu0 %v3135
      %v3738 = vpop.f32.mrb[0].mxu0
      %v3739 = vadd.f32 0.0, %v3738
      %v3740 = vpop.f32.mrb[0].mxu0
      %3741 = vmatprep.mubr.f32.mxu0 0.0
      %3742 = vmatmul.mubr.f32.gmra.mrb[0].mxu0 %v3138
      %v3743 = vpop.f32.mrb[0].mxu0
      %v3744 = vadd.f32 0.0, %v3743
      %v3745 = vpop.f32.mrb[0].mxu0
      %3746 = vmatprep.mubr.f32.mxu0 0.0
      %3747 = vmatmul.mubr.f32.gmra.mrb[0].mxu0 %v3141
      %v3748 = vpop.f32.mrb[0].mxu0
      %v3749 = vadd.f32 0.0, %v3748
      %v3750 = vpop.f32.mrb[0].mxu0
      %3751 = vmatprep.mubr.f32.mxu0 0.0
      %3752 = vmatmul.mubr.f32.gmra.mrb[0].mxu0 %v3144
      %v3753 = vpop.f32.mrb[0].mxu0
      %v3754 = vadd.f32 0.0, %v3753
      %v3755 = vpop.f32.mrb[0].mxu0
      %3756 = vmatprep.mubr.f32.mxu0 0.0
      %3757 = vmatmul.mubr.f32.gmra.mrb[0].mxu0 %v3147
      %v3758 = vpop.f32.mrb[0].mxu0
      %v3759 = vadd.f32 0.0, %v3758
      %v3760 = vpop.f32.mrb[0].mxu0
      %3761 = vmatprep.mubr.f32.mxu0 0.0
      %3762 = vmatmul.mubr.f32.gmra.mrb[0].mxu0 %v3150
      %v3763 = vpop.f32.mrb[0].mxu0
      %v3764 = vadd.f32 0.0, %v3763
      %v3765 = vpop.f32.mrb[0].mxu0
      %3766 = vmatprep.mubr.f32.mxu0 0.0
      %3767 = vmatmul.mubr.f32.gmra.mrb[0].mxu0 %v3153
      %v3768 = vpop.f32.mrb[0].mxu0
      %v3769 = vadd.f32 0.0, %v3768
      %v3770 = vpop.f32.mrb[0].mxu0
      %3771 = vmatprep.mubr.f32.mxu0 0.0
      %3772 = vmatmul.mubr.f32.gmra.mrb[0].mxu0 %v3156
      %v3773 = vpop.f32.mrb[0].mxu0
      %v3774 = vadd.f32 0.0, %v3773
      %v3775 = vpop.f32.mrb[0].mxu0
      %3776 = vmatprep.mubr.f32.mxu0 0.0
      %3777 = vmatmul.mubr.f32.gmra.mrb[0].mxu0 %v3159
      %v3778 = vpop.f32.mrb[0].mxu0
      %v3779 = vadd.f32 0.0, %v3778
      %v3780 = vpop.f32.mrb[0].mxu0
      %3781 = vmatprep.mubr.f32.mxu0 0.0
      %3782 = vmatmul.mubr.f32.gmra.mrb[0].mxu0 %v3162
      %v3783 = vpop.f32.mrb[0].mxu0
      %v3784 = vadd.f32 0.0, %v3783
      %v3785 = vpop.f32.mrb[0].mxu0
      %3786 = vmatprep.mubr.f32.mxu0 0.0
      %3787 = vmatmul.mubr.f32.gmra.mrb[0].mxu0 %v3165
      %v3788 = vpop.f32.mrb[0].mxu0
      %v3789 = vadd.f32 0.0, %v3788
      %v3790 = vpop.f32.mrb[0].mxu0
      %3791 = vdwg.mxu0
      %v3792 = vadd.f32 %v2160, %v3234
      %v3793 = vadd.f32 %v2165, %v3239
      %v3794 = vadd.f32 %v2170, %v3244
      %v3795 = vadd.f32 %v2175, %v3249
      %v3796 = vadd.f32 %v2180, %v3254
      %v3797 = vadd.f32 %v2185, %v3259
      %v3798 = vadd.f32 %v2190, %v3264
      %v3799 = vadd.f32 %v2195, %v3269
      %v3800 = vadd.f32 %v2200, %v3274
      %v3801 = vadd.f32 %v2205, %v3279
      %v3802 = vadd.f32 %v2210, %v3284
      %v3803 = vadd.f32 %v2215, %v3289
      %v3804 = vadd.f32 %v2220, %v3294
      %v3805 = vadd.f32 %v2225, %v3299
      %v3806 = vadd.f32 %v2230, %v3304
      %v3807 = vadd.f32 %v2235, %v3309
      %v3808 = vadd.f32 %v2240, %v3314
      %v3809 = vadd.f32 %v2245, %v3319
      %v3810 = vadd.f32 %v2250, %v3324
      %v3811 = vadd.f32 %v2255, %v3329
      %v3812 = vadd.f32 %v2260, %v3334
      %v3813 = vadd.f32 %v2265, %v3339
      %v3814 = vadd.f32 %v2270, %v3344
      %v3815 = vadd.f32 %v2275, %v3349
      %v3816 = vadd.f32 %v2280, %v3354
      %v3817 = vadd.f32 %v2285, %v3359
      %v3818 = vadd.f32 %v2290, %v3364
      %v3819 = vadd.f32 %v2295, %v3369
      %v3820 = vadd.f32 %v2300, %v3374
      %v3821 = vadd.f32 %v2305, %v3379
      %v3822 = vadd.f32 %v2310, %v3384
      %v3823 = vadd.f32 %v2315, %v3389
      %v3824 = vadd.f32 %v2320, %v3394
      %v3825 = vadd.f32 %v2325, %v3399
      %v3826 = vadd.f32 %v2330, %v3404
      %v3827 = vadd.f32 %v2335, %v3409
      %v3828 = vadd.f32 %v2340, %v3414
      %v3829 = vadd.f32 %v2345, %v3419
      %v3830 = vadd.f32 %v2350, %v3424
      %v3831 = vadd.f32 %v2355, %v3429
      %v3832 = vadd.f32 %v2360, %v3434
      %v3833 = vadd.f32 %v2365, %v3439
      %v3834 = vadd.f32 %v2370, %v3444
      %v3835 = vadd.f32 %v2375, %v3449
      %v3836 = vadd.f32 %v2380, %v3454
      %v3837 = vadd.f32 %v2385, %v3459
      %v3838 = vadd.f32 %v2390, %v3464
      %v3839 = vadd.f32 %v2395, %v3469
      %v3840 = vadd.f32 %v2400, %v3474
      %v3841 = vadd.f32 %v2405, %v3479
      %v3842 = vadd.f32 %v2410, %v3484
      %v3843 = vadd.f32 %v2415, %v3489
      %v3844 = vadd.f32 %v2420, %v3494
      %v3845 = vadd.f32 %v2425, %v3499
      %v3846 = vadd.f32 %v2430, %v3504
      %v3847 = vadd.f32 %v2435, %v3509
      %v3848 = vadd.f32 %v2440, %v3514
      %v3849 = vadd.f32 %v2445, %v3519
      %v3850 = vadd.f32 %v2450, %v3524
      %v3851 = vadd.f32 %v2455, %v3529
      %v3852 = vadd.f32 %v2460, %v3534
      %v3853 = vadd.f32 %v2465, %v3539
      %v3854 = vadd.f32 %v2470, %v3544
      %v3855 = vadd.f32 %v2475, %v3549
      %v3856 = vadd.f32 %v2480, %v3554
      %v3857 = vadd.f32 %v2485, %v3559
      %v3858 = vadd.f32 %v2490, %v3564
      %v3859 = vadd.f32 %v2495, %v3569
      %v3860 = vadd.f32 %v2500, %v3574
      %v3861 = vadd.f32 %v2505, %v3579
      %v3862 = vadd.f32 %v2510, %v3584
      %v3863 = vadd.f32 %v2515, %v3589
      %v3864 = vadd.f32 %v2520, %v3594
      %v3865 = vadd.f32 %v2525, %v3599
      %v3866 = vadd.f32 %v2530, %v3604
      %v3867 = vadd.f32 %v2535, %v3609
      %v3868 = vadd.f32 %v2540, %v3614
      %v3869 = vadd.f32 %v2545, %v3619
      %v3870 = vadd.f32 %v2550, %v3624
      %v3871 = vadd.f32 %v2555, %v3629
      %v3872 = vadd.f32 %v2560, %v3634
      %v3873 = vadd.f32 %v2565, %v3639
      %v3874 = vadd.f32 %v2570, %v3644
      %v3875 = vadd.f32 %v2575, %v3649
      %v3876 = vadd.f32 %v2580, %v3654
      %v3877 = vadd.f32 %v2585, %v3659
      %v3878 = vadd.f32 %v2590, %v3664
      %v3879 = vadd.f32 %v2595, %v3669
      %v3880 = vadd.f32 %v2600, %v3674
      %v3881 = vadd.f32 %v2605, %v3679
      %v3882 = vadd.f32 %v2610, %v3684
      %v3883 = vadd.f32 %v2615, %v3689
      %v3884 = vadd.f32 %v2620, %v3694
      %v3885 = vadd.f32 %v2625, %v3699
      %v3886 = vadd.f32 %v2630, %v3704
      %v3887 = vadd.f32 %v2635, %v3709
      %v3888 = vadd.f32 %v2640, %v3714
      %v3889 = vadd.f32 %v2645, %v3719
      %v3890 = vadd.f32 %v2650, %v3724
      %v3891 = vadd.f32 %v2655, %v3729
      %v3892 = vadd.f32 %v2660, %v3734
      %v3893 = vadd.f32 %v2665, %v3739
      %v3894 = vadd.f32 %v2670, %v3744
      %v3895 = vadd.f32 %v2675, %v3749
      %v3896 = vadd.f32 %v2680, %v3754
      %v3897 = vadd.f32 %v2685, %v3759
      %v3898 = vadd.f32 %v2690, %v3764
      %v3899 = vadd.f32 %v2695, %v3769
      %v3900 = vadd.f32 %v2700, %v3774
      %v3901 = vadd.f32 %v2705, %v3779
      %v3902 = vadd.f32 %v2710, %v3784
      %v3903 = vadd.f32 %v2715, %v3789
      %v3904 = vld [vmem:[%s3] sm:$0xff]
      %v3905 = vld [vmem:[%s3 + $0x8] sm:$0xff]
      %v3906 = vld [vmem:[%s3 + $0x10] sm:$0xff]
      %v3907 = vld [vmem:[%s3 + $0x18] sm:$0xff]
      %v3908 = vld [vmem:[%s3 + $0x20] sm:$0xff]
      %v3909 = vld [vmem:[%s3 + $0x28] sm:$0xff]
      %v3910 = vld [vmem:[%s3 + $0x30] sm:$0xff]
      %v3911 = vld [vmem:[%s3 + $0x38] sm:$0xff]
      %v3912 = vld [vmem:[%s3 + $0x40] sm:$0xff]
      %v3913 = vld [vmem:[%s3 + $0x48] sm:$0xff]
      %v3914 = vld [vmem:[%s3 + $0x50] sm:$0xff]
      %v3915 = vld [vmem:[%s3 + $0x58] sm:$0xff]
      %v3916 = vld [vmem:[%s3 + $0x60] sm:$0xff]
      %v3917 = vld [vmem:[%s3 + $0x68] sm:$0xff]
      %v3918 = vld [vmem:[%s3 + $0x70] sm:$0xff]
      %v3919 = vld [vmem:[%s3 + $0x78] sm:$0xff]
      %v3920 = vld [vmem:[%s3 + $0x80] sm:$0xff]
      %v3921 = vld [vmem:[%s3 + $0x88] sm:$0xff]
      %v3922 = vld [vmem:[%s3 + $0x90] sm:$0xff]
      %v3923 = vld [vmem:[%s3 + $0x98] sm:$0xff]
      %v3924 = vld [vmem:[%s3 + $0xa0] sm:$0xff]
      %v3925 = vld [vmem:[%s3 + $0xa8] sm:$0xff]
      %v3926 = vld [vmem:[%s3 + $0xb0] sm:$0xff]
      %v3927 = vld [vmem:[%s3 + $0xb8] sm:$0xff]
      %v3928 = vld [vmem:[%s3 + $0xc0] sm:$0xff]
      %v3929 = vld [vmem:[%s3 + $0xc8] sm:$0xff]
      %v3930 = vld [vmem:[%s3 + $0xd0] sm:$0xff]
      %v3931 = vld [vmem:[%s3 + $0xd8] sm:$0xff]
      %v3932 = vld [vmem:[%s3 + $0xe0] sm:$0xff]
      %v3933 = vld [vmem:[%s3 + $0xe8] sm:$0xff]
      %v3934 = vld [vmem:[%s3 + $0xf0] sm:$0xff]
      %v3935 = vld [vmem:[%s3 + $0xf8] sm:$0xff]
      %v3936 = vld [vmem:[%s3 + $0x100] sm:$0xff]
      %v3937 = vld [vmem:[%s3 + $0x108] sm:$0xff]
      %v3938 = vld [vmem:[%s3 + $0x110] sm:$0xff]
      %v3939 = vld [vmem:[%s3 + $0x118] sm:$0xff]
      %v3940 = vld [vmem:[%s3 + $0x120] sm:$0xff]
      %v3941 = vld [vmem:[%s3 + $0x128] sm:$0xff]
      %v3942 = vld [vmem:[%s3 + $0x130] sm:$0xff]
      %v3943 = vld [vmem:[%s3 + $0x138] sm:$0xff]
      %v3944 = vld [vmem:[%s3 + $0x140] sm:$0xff]
      %v3945 = vld [vmem:[%s3 + $0x148] sm:$0xff]
      %v3946 = vld [vmem:[%s3 + $0x150] sm:$0xff]
      %v3947 = vld [vmem:[%s3 + $0x158] sm:$0xff]
      %v3948 = vld [vmem:[%s3 + $0x160] sm:$0xff]
      %v3949 = vld [vmem:[%s3 + $0x168] sm:$0xff]
      %v3950 = vld [vmem:[%s3 + $0x170] sm:$0xff]
      %v3951 = vld [vmem:[%s3 + $0x178] sm:$0xff]
      %v3952 = vld [vmem:[%s3 + $0x180] sm:$0xff]
      %v3953 = vld [vmem:[%s3 + $0x188] sm:$0xff]
      %v3954 = vld [vmem:[%s3 + $0x190] sm:$0xff]
      %v3955 = vld [vmem:[%s3 + $0x198] sm:$0xff]
      %v3956 = vld [vmem:[%s3 + $0x1a0] sm:$0xff]
      %v3957 = vld [vmem:[%s3 + $0x1a8] sm:$0xff]
      %v3958 = vld [vmem:[%s3 + $0x1b0] sm:$0xff]
      %v3959 = vld [vmem:[%s3 + $0x1b8] sm:$0xff]
      %v3960 = vld [vmem:[%s3 + $0x1c0] sm:$0xff]
      %v3961 = vld [vmem:[%s3 + $0x1c8] sm:$0xff]
      %v3962 = vld [vmem:[%s3 + $0x1d0] sm:$0xff]
      %v3963 = vld [vmem:[%s3 + $0x1d8] sm:$0xff]
      %v3964 = vld [vmem:[%s3 + $0x1e0] sm:$0xff]
      %v3965 = vld [vmem:[%s3 + $0x1e8] sm:$0xff]
      %v3966 = vld [vmem:[%s3 + $0x1f0] sm:$0xff]
      %v3967 = vld [vmem:[%s3 + $0x1f8] sm:$0xff]
      %v3968 = vld [vmem:[%s3 + $0x200] sm:$0xff]
      %v3969 = vld [vmem:[%s3 + $0x208] sm:$0xff]
      %v3970 = vld [vmem:[%s3 + $0x210] sm:$0xff]
      %v3971 = vld [vmem:[%s3 + $0x218] sm:$0xff]
      %v3972 = vld [vmem:[%s3 + $0x220] sm:$0xff]
      %v3973 = vld [vmem:[%s3 + $0x228] sm:$0xff]
      %v3974 = vld [vmem:[%s3 + $0x230] sm:$0xff]
      %v3975 = vld [vmem:[%s3 + $0x238] sm:$0xff]
      %v3976 = vld [vmem:[%s3 + $0x240] sm:$0xff]
      %v3977 = vld [vmem:[%s3 + $0x248] sm:$0xff]
      %v3978 = vld [vmem:[%s3 + $0x250] sm:$0xff]
      %v3979 = vld [vmem:[%s3 + $0x258] sm:$0xff]
      %v3980 = vld [vmem:[%s3 + $0x260] sm:$0xff]
      %v3981 = vld [vmem:[%s3 + $0x268] sm:$0xff]
      %v3982 = vld [vmem:[%s3 + $0x270] sm:$0xff]
      %v3983 = vld [vmem:[%s3 + $0x278] sm:$0xff]
      %v3984 = vld [vmem:[%s3 + $0x280] sm:$0xff]
      %v3985 = vld [vmem:[%s3 + $0x288] sm:$0xff]
      %v3986 = vld [vmem:[%s3 + $0x290] sm:$0xff]
      %v3987 = vld [vmem:[%s3 + $0x298] sm:$0xff]
      %v3988 = vld [vmem:[%s3 + $0x2a0] sm:$0xff]
      %v3989 = vld [vmem:[%s3 + $0x2a8] sm:$0xff]
      %v3990 = vld [vmem:[%s3 + $0x2b0] sm:$0xff]
      %v3991 = vld [vmem:[%s3 + $0x2b8] sm:$0xff]
      %v3992 = vld [vmem:[%s3 + $0x2c0] sm:$0xff]
      %v3993 = vld [vmem:[%s3 + $0x2c8] sm:$0xff]
      %v3994 = vld [vmem:[%s3 + $0x2d0] sm:$0xff]
      %v3995 = vld [vmem:[%s3 + $0x2d8] sm:$0xff]
      %v3996 = vld [vmem:[%s3 + $0x2e0] sm:$0xff]
      %v3997 = vld [vmem:[%s3 + $0x2e8] sm:$0xff]
      %v3998 = vld [vmem:[%s3 + $0x2f0] sm:$0xff]
      %v3999 = vld [vmem:[%s3 + $0x2f8] sm:$0xff]
      %v4000 = vld [vmem:[%s3 + $0x300] sm:$0xff]
      %v4001 = vld [vmem:[%s3 + $0x308] sm:$0xff]
      %v4002 = vld [vmem:[%s3 + $0x310] sm:$0xff]
      %v4003 = vld [vmem:[%s3 + $0x318] sm:$0xff]
      %v4004 = vld [vmem:[%s3 + $0x320] sm:$0xff]
      %v4005 = vld [vmem:[%s3 + $0x328] sm:$0xff]
      %v4006 = vld [vmem:[%s3 + $0x330] sm:$0xff]
      %v4007 = vld [vmem:[%s3 + $0x338] sm:$0xff]
      %v4008 = vld [vmem:[%s3 + $0x340] sm:$0xff]
      %v4009 = vld [vmem:[%s3 + $0x348] sm:$0xff]
      %v4010 = vld [vmem:[%s3 + $0x350] sm:$0xff]
      %v4011 = vld [vmem:[%s3 + $0x358] sm:$0xff]
      %v4012 = vld [vmem:[%s3 + $0x360] sm:$0xff]
      %v4013 = vld [vmem:[%s3 + $0x368] sm:$0xff]
      %v4014 = vld [vmem:[%s3 + $0x370] sm:$0xff]
      %v4015 = vld [vmem:[%s3 + $0x378] sm:$0xff]
      %4017 = vset.pattern.permute.xlu0 0
      %4018 = vperm.xlu0 %4017, %v3904
      %v4019 = vpop.permute.xlu0 %4018
      %4022 = vset.pattern.permute.xlu0 0
      %4023 = vperm.xlu0 %4022, %v3905
      %v4024 = vpop.permute.xlu0 %4023
      %4027 = vset.pattern.permute.xlu0 0
      %4028 = vperm.xlu0 %4027, %v3906
      %v4029 = vpop.permute.xlu0 %4028
      %4032 = vset.pattern.permute.xlu0 0
      %4033 = vperm.xlu0 %4032, %v3907
      %v4034 = vpop.permute.xlu0 %4033
      %4037 = vset.pattern.permute.xlu0 0
      %4038 = vperm.xlu0 %4037, %v3908
      %v4039 = vpop.permute.xlu0 %4038
      %4042 = vset.pattern.permute.xlu0 0
      %4043 = vperm.xlu0 %4042, %v3909
      %v4044 = vpop.permute.xlu0 %4043
      %4047 = vset.pattern.permute.xlu0 0
      %4048 = vperm.xlu0 %4047, %v3910
      %v4049 = vpop.permute.xlu0 %4048
      %4052 = vset.pattern.permute.xlu0 0
      %4053 = vperm.xlu0 %4052, %v3911
      %v4054 = vpop.permute.xlu0 %4053
      %4057 = vset.pattern.permute.xlu0 0
      %4058 = vperm.xlu0 %4057, %v3912
      %v4059 = vpop.permute.xlu0 %4058
      %4062 = vset.pattern.permute.xlu0 0
      %4063 = vperm.xlu0 %4062, %v3913
      %v4064 = vpop.permute.xlu0 %4063
      %4067 = vset.pattern.permute.xlu0 0
      %4068 = vperm.xlu0 %4067, %v3914
      %v4069 = vpop.permute.xlu0 %4068
      %4072 = vset.pattern.permute.xlu0 0
      %4073 = vperm.xlu0 %4072, %v3915
      %v4074 = vpop.permute.xlu0 %4073
      %4077 = vset.pattern.permute.xlu0 0
      %4078 = vperm.xlu0 %4077, %v3916
      %v4079 = vpop.permute.xlu0 %4078
      %4082 = vset.pattern.permute.xlu0 0
      %4083 = vperm.xlu0 %4082, %v3917
      %v4084 = vpop.permute.xlu0 %4083
      %4087 = vset.pattern.permute.xlu0 0
      %4088 = vperm.xlu0 %4087, %v3918
      %v4089 = vpop.permute.xlu0 %4088
      %4092 = vset.pattern.permute.xlu0 0
      %4093 = vperm.xlu0 %4092, %v3919
      %v4094 = vpop.permute.xlu0 %4093
      %4097 = vset.pattern.permute.xlu0 0
      %4098 = vperm.xlu0 %4097, %v3920
      %v4099 = vpop.permute.xlu0 %4098
      %4102 = vset.pattern.permute.xlu0 0
      %4103 = vperm.xlu0 %4102, %v3921
      %v4104 = vpop.permute.xlu0 %4103
      %4107 = vset.pattern.permute.xlu0 0
      %4108 = vperm.xlu0 %4107, %v3922
      %v4109 = vpop.permute.xlu0 %4108
      %4112 = vset.pattern.permute.xlu0 0
      %4113 = vperm.xlu0 %4112, %v3923
      %v4114 = vpop.permute.xlu0 %4113
      %4117 = vset.pattern.permute.xlu0 0
      %4118 = vperm.xlu0 %4117, %v3924
      %v4119 = vpop.permute.xlu0 %4118
      %4122 = vset.pattern.permute.xlu0 0
      %4123 = vperm.xlu0 %4122, %v3925
      %v4124 = vpop.permute.xlu0 %4123
      %4127 = vset.pattern.permute.xlu0 0
      %4128 = vperm.xlu0 %4127, %v3926
      %v4129 = vpop.permute.xlu0 %4128
      %4132 = vset.pattern.permute.xlu0 0
      %4133 = vperm.xlu0 %4132, %v3927
      %v4134 = vpop.permute.xlu0 %4133
      %4137 = vset.pattern.permute.xlu0 0
      %4138 = vperm.xlu0 %4137, %v3928
      %v4139 = vpop.permute.xlu0 %4138
      %4142 = vset.pattern.permute.xlu0 0
      %4143 = vperm.xlu0 %4142, %v3929
      %v4144 = vpop.permute.xlu0 %4143
      %4147 = vset.pattern.permute.xlu0 0
      %4148 = vperm.xlu0 %4147, %v3930
      %v4149 = vpop.permute.xlu0 %4148
      %4152 = vset.pattern.permute.xlu0 0
      %4153 = vperm.xlu0 %4152, %v3931
      %v4154 = vpop.permute.xlu0 %4153
      %4157 = vset.pattern.permute.xlu0 0
      %4158 = vperm.xlu0 %4157, %v3932
      %v4159 = vpop.permute.xlu0 %4158
      %4162 = vset.pattern.permute.xlu0 0
      %4163 = vperm.xlu0 %4162, %v3933
      %v4164 = vpop.permute.xlu0 %4163
      %4167 = vset.pattern.permute.xlu0 0
      %4168 = vperm.xlu0 %4167, %v3934
      %v4169 = vpop.permute.xlu0 %4168
      %4172 = vset.pattern.permute.xlu0 0
      %4173 = vperm.xlu0 %4172, %v3935
      %v4174 = vpop.permute.xlu0 %4173
      %4177 = vset.pattern.permute.xlu0 0
      %4178 = vperm.xlu0 %4177, %v3936
      %v4179 = vpop.permute.xlu0 %4178
      %4182 = vset.pattern.permute.xlu0 0
      %4183 = vperm.xlu0 %4182, %v3937
      %v4184 = vpop.permute.xlu0 %4183
      %4187 = vset.pattern.permute.xlu0 0
      %4188 = vperm.xlu0 %4187, %v3938
      %v4189 = vpop.permute.xlu0 %4188
      %4192 = vset.pattern.permute.xlu0 0
      %4193 = vperm.xlu0 %4192, %v3939
      %v4194 = vpop.permute.xlu0 %4193
      %4197 = vset.pattern.permute.xlu0 0
      %4198 = vperm.xlu0 %4197, %v3940
      %v4199 = vpop.permute.xlu0 %4198
      %4202 = vset.pattern.permute.xlu0 0
      %4203 = vperm.xlu0 %4202, %v3941
      %v4204 = vpop.permute.xlu0 %4203
      %4207 = vset.pattern.permute.xlu0 0
      %4208 = vperm.xlu0 %4207, %v3942
      %v4209 = vpop.permute.xlu0 %4208
      %4212 = vset.pattern.permute.xlu0 0
      %4213 = vperm.xlu0 %4212, %v3943
      %v4214 = vpop.permute.xlu0 %4213
      %4217 = vset.pattern.permute.xlu0 0
      %4218 = vperm.xlu0 %4217, %v3944
      %v4219 = vpop.permute.xlu0 %4218
      %4222 = vset.pattern.permute.xlu0 0
      %4223 = vperm.xlu0 %4222, %v3945
      %v4224 = vpop.permute.xlu0 %4223
      %4227 = vset.pattern.permute.xlu0 0
      %4228 = vperm.xlu0 %4227, %v3946
      %v4229 = vpop.permute.xlu0 %4228
      %4232 = vset.pattern.permute.xlu0 0
      %4233 = vperm.xlu0 %4232, %v3947
      %v4234 = vpop.permute.xlu0 %4233
      %4237 = vset.pattern.permute.xlu0 0
      %4238 = vperm.xlu0 %4237, %v3948
      %v4239 = vpop.permute.xlu0 %4238
      %4242 = vset.pattern.permute.xlu0 0
      %4243 = vperm.xlu0 %4242, %v3949
      %v4244 = vpop.permute.xlu0 %4243
      %4247 = vset.pattern.permute.xlu0 0
      %4248 = vperm.xlu0 %4247, %v3950
      %v4249 = vpop.permute.xlu0 %4248
      %4252 = vset.pattern.permute.xlu0 0
      %4253 = vperm.xlu0 %4252, %v3951
      %v4254 = vpop.permute.xlu0 %4253
      %4257 = vset.pattern.permute.xlu0 0
      %4258 = vperm.xlu0 %4257, %v3952
      %v4259 = vpop.permute.xlu0 %4258
      %4262 = vset.pattern.permute.xlu0 0
      %4263 = vperm.xlu0 %4262, %v3953
      %v4264 = vpop.permute.xlu0 %4263
      %4267 = vset.pattern.permute.xlu0 0
      %4268 = vperm.xlu0 %4267, %v3954
      %v4269 = vpop.permute.xlu0 %4268
      %4272 = vset.pattern.permute.xlu0 0
      %4273 = vperm.xlu0 %4272, %v3955
      %v4274 = vpop.permute.xlu0 %4273
      %4277 = vset.pattern.permute.xlu0 0
      %4278 = vperm.xlu0 %4277, %v3956
      %v4279 = vpop.permute.xlu0 %4278
      %4282 = vset.pattern.permute.xlu0 0
      %4283 = vperm.xlu0 %4282, %v3957
      %v4284 = vpop.permute.xlu0 %4283
      %4287 = vset.pattern.permute.xlu0 0
      %4288 = vperm.xlu0 %4287, %v3958
      %v4289 = vpop.permute.xlu0 %4288
      %4292 = vset.pattern.permute.xlu0 0
      %4293 = vperm.xlu0 %4292, %v3959
      %v4294 = vpop.permute.xlu0 %4293
      %4297 = vset.pattern.permute.xlu0 0
      %4298 = vperm.xlu0 %4297, %v3960
      %v4299 = vpop.permute.xlu0 %4298
      %4302 = vset.pattern.permute.xlu0 0
      %4303 = vperm.xlu0 %4302, %v3961
      %v4304 = vpop.permute.xlu0 %4303
      %4307 = vset.pattern.permute.xlu0 0
      %4308 = vperm.xlu0 %4307, %v3962
      %v4309 = vpop.permute.xlu0 %4308
      %4312 = vset.pattern.permute.xlu0 0
      %4313 = vperm.xlu0 %4312, %v3963
      %v4314 = vpop.permute.xlu0 %4313
      %4317 = vset.pattern.permute.xlu0 0
      %4318 = vperm.xlu0 %4317, %v3964
      %v4319 = vpop.permute.xlu0 %4318
      %4322 = vset.pattern.permute.xlu0 0
      %4323 = vperm.xlu0 %4322, %v3965
      %v4324 = vpop.permute.xlu0 %4323
      %4327 = vset.pattern.permute.xlu0 0
      %4328 = vperm.xlu0 %4327, %v3966
      %v4329 = vpop.permute.xlu0 %4328
      %4332 = vset.pattern.permute.xlu0 0
      %4333 = vperm.xlu0 %4332, %v3967
      %v4334 = vpop.permute.xlu0 %4333
      %4337 = vset.pattern.permute.xlu0 0
      %4338 = vperm.xlu0 %4337, %v3968
      %v4339 = vpop.permute.xlu0 %4338
      %4342 = vset.pattern.permute.xlu0 0
      %4343 = vperm.xlu0 %4342, %v3969
      %v4344 = vpop.permute.xlu0 %4343
      %4347 = vset.pattern.permute.xlu0 0
      %4348 = vperm.xlu0 %4347, %v3970
      %v4349 = vpop.permute.xlu0 %4348
      %4352 = vset.pattern.permute.xlu0 0
      %4353 = vperm.xlu0 %4352, %v3971
      %v4354 = vpop.permute.xlu0 %4353
      %4357 = vset.pattern.permute.xlu0 0
      %4358 = vperm.xlu0 %4357, %v3972
      %v4359 = vpop.permute.xlu0 %4358
      %4362 = vset.pattern.permute.xlu0 0
      %4363 = vperm.xlu0 %4362, %v3973
      %v4364 = vpop.permute.xlu0 %4363
      %4367 = vset.pattern.permute.xlu0 0
      %4368 = vperm.xlu0 %4367, %v3974
      %v4369 = vpop.permute.xlu0 %4368
      %4372 = vset.pattern.permute.xlu0 0
      %4373 = vperm.xlu0 %4372, %v3975
      %v4374 = vpop.permute.xlu0 %4373
      %4377 = vset.pattern.permute.xlu0 0
      %4378 = vperm.xlu0 %4377, %v3976
      %v4379 = vpop.permute.xlu0 %4378
      %4382 = vset.pattern.permute.xlu0 0
      %4383 = vperm.xlu0 %4382, %v3977
      %v4384 = vpop.permute.xlu0 %4383
      %4387 = vset.pattern.permute.xlu0 0
      %4388 = vperm.xlu0 %4387, %v3978
      %v4389 = vpop.permute.xlu0 %4388
      %4392 = vset.pattern.permute.xlu0 0
      %4393 = vperm.xlu0 %4392, %v3979
      %v4394 = vpop.permute.xlu0 %4393
      %4397 = vset.pattern.permute.xlu0 0
      %4398 = vperm.xlu0 %4397, %v3980
      %v4399 = vpop.permute.xlu0 %4398
      %4402 = vset.pattern.permute.xlu0 0
      %4403 = vperm.xlu0 %4402, %v3981
      %v4404 = vpop.permute.xlu0 %4403
      %4407 = vset.pattern.permute.xlu0 0
      %4408 = vperm.xlu0 %4407, %v3982
      %v4409 = vpop.permute.xlu0 %4408
      %4412 = vset.pattern.permute.xlu0 0
      %4413 = vperm.xlu0 %4412, %v3983
      %v4414 = vpop.permute.xlu0 %4413
      %4417 = vset.pattern.permute.xlu0 0
      %4418 = vperm.xlu0 %4417, %v3984
      %v4419 = vpop.permute.xlu0 %4418
      %4422 = vset.pattern.permute.xlu0 0
      %4423 = vperm.xlu0 %4422, %v3985
      %v4424 = vpop.permute.xlu0 %4423
      %4427 = vset.pattern.permute.xlu0 0
      %4428 = vperm.xlu0 %4427, %v3986
      %v4429 = vpop.permute.xlu0 %4428
      %4432 = vset.pattern.permute.xlu0 0
      %4433 = vperm.xlu0 %4432, %v3987
      %v4434 = vpop.permute.xlu0 %4433
      %4437 = vset.pattern.permute.xlu0 0
      %4438 = vperm.xlu0 %4437, %v3988
      %v4439 = vpop.permute.xlu0 %4438
      %4442 = vset.pattern.permute.xlu0 0
      %4443 = vperm.xlu0 %4442, %v3989
      %v4444 = vpop.permute.xlu0 %4443
      %4447 = vset.pattern.permute.xlu0 0
      %4448 = vperm.xlu0 %4447, %v3990
      %v4449 = vpop.permute.xlu0 %4448
      %4452 = vset.pattern.permute.xlu0 0
      %4453 = vperm.xlu0 %4452, %v3991
      %v4454 = vpop.permute.xlu0 %4453
      %4457 = vset.pattern.permute.xlu0 0
      %4458 = vperm.xlu0 %4457, %v3992
      %v4459 = vpop.permute.xlu0 %4458
      %4462 = vset.pattern.permute.xlu0 0
      %4463 = vperm.xlu0 %4462, %v3993
      %v4464 = vpop.permute.xlu0 %4463
      %4467 = vset.pattern.permute.xlu0 0
      %4468 = vperm.xlu0 %4467, %v3994
      %v4469 = vpop.permute.xlu0 %4468
      %4472 = vset.pattern.permute.xlu0 0
      %4473 = vperm.xlu0 %4472, %v3995
      %v4474 = vpop.permute.xlu0 %4473
      %4477 = vset.pattern.permute.xlu0 0
      %4478 = vperm.xlu0 %4477, %v3996
      %v4479 = vpop.permute.xlu0 %4478
      %4482 = vset.pattern.permute.xlu0 0
      %4483 = vperm.xlu0 %4482, %v3997
      %v4484 = vpop.permute.xlu0 %4483
      %4487 = vset.pattern.permute.xlu0 0
      %4488 = vperm.xlu0 %4487, %v3998
      %v4489 = vpop.permute.xlu0 %4488
      %4492 = vset.pattern.permute.xlu0 0
      %4493 = vperm.xlu0 %4492, %v3999
      %v4494 = vpop.permute.xlu0 %4493
      %4497 = vset.pattern.permute.xlu0 0
      %4498 = vperm.xlu0 %4497, %v4000
      %v4499 = vpop.permute.xlu0 %4498
      %4502 = vset.pattern.permute.xlu0 0
      %4503 = vperm.xlu0 %4502, %v4001
      %v4504 = vpop.permute.xlu0 %4503
      %4507 = vset.pattern.permute.xlu0 0
      %4508 = vperm.xlu0 %4507, %v4002
      %v4509 = vpop.permute.xlu0 %4508
      %4512 = vset.pattern.permute.xlu0 0
      %4513 = vperm.xlu0 %4512, %v4003
      %v4514 = vpop.permute.xlu0 %4513
      %4517 = vset.pattern.permute.xlu0 0
      %4518 = vperm.xlu0 %4517, %v4004
      %v4519 = vpop.permute.xlu0 %4518
      %4522 = vset.pattern.permute.xlu0 0
      %4523 = vperm.xlu0 %4522, %v4005
      %v4524 = vpop.permute.xlu0 %4523
      %4527 = vset.pattern.permute.xlu0 0
      %4528 = vperm.xlu0 %4527, %v4006
      %v4529 = vpop.permute.xlu0 %4528
      %4532 = vset.pattern.permute.xlu0 0
      %4533 = vperm.xlu0 %4532, %v4007
      %v4534 = vpop.permute.xlu0 %4533
      %4537 = vset.pattern.permute.xlu0 0
      %4538 = vperm.xlu0 %4537, %v4008
      %v4539 = vpop.permute.xlu0 %4538
      %4542 = vset.pattern.permute.xlu0 0
      %4543 = vperm.xlu0 %4542, %v4009
      %v4544 = vpop.permute.xlu0 %4543
      %4547 = vset.pattern.permute.xlu0 0
      %4548 = vperm.xlu0 %4547, %v4010
      %v4549 = vpop.permute.xlu0 %4548
      %4552 = vset.pattern.permute.xlu0 0
      %4553 = vperm.xlu0 %4552, %v4011
      %v4554 = vpop.permute.xlu0 %4553
      %4557 = vset.pattern.permute.xlu0 0
      %4558 = vperm.xlu0 %4557, %v4012
      %v4559 = vpop.permute.xlu0 %4558
      %4562 = vset.pattern.permute.xlu0 0
      %4563 = vperm.xlu0 %4562, %v4013
      %v4564 = vpop.permute.xlu0 %4563
      %4567 = vset.pattern.permute.xlu0 0
      %4568 = vperm.xlu0 %4567, %v4014
      %v4569 = vpop.permute.xlu0 %4568
      %4572 = vset.pattern.permute.xlu0 0
      %4573 = vperm.xlu0 %4572, %v4015
      %v4574 = vpop.permute.xlu0 %4573
      %v4576 = vadd.f32 %v3792, %v4019
      %v4577 = vadd.f32 %v3793, %v4024
      %v4578 = vadd.f32 %v3794, %v4029
      %v4579 = vadd.f32 %v3795, %v4034
      %v4580 = vadd.f32 %v3796, %v4039
      %v4581 = vadd.f32 %v3797, %v4044
      %v4582 = vadd.f32 %v3798, %v4049
      %v4583 = vadd.f32 %v3799, %v4054
      %v4584 = vadd.f32 %v3800, %v4059
      %v4585 = vadd.f32 %v3801, %v4064
      %v4586 = vadd.f32 %v3802, %v4069
      %v4587 = vadd.f32 %v3803, %v4074
      %v4588 = vadd.f32 %v3804, %v4079
      %v4589 = vadd.f32 %v3805, %v4084
      %v4590 = vadd.f32 %v3806, %v4089
      %v4591 = vadd.f32 %v3807, %v4094
      %v4592 = vadd.f32 %v3808, %v4099
      %v4593 = vadd.f32 %v3809, %v4104
      %v4594 = vadd.f32 %v3810, %v4109
      %v4595 = vadd.f32 %v3811, %v4114
      %v4596 = vadd.f32 %v3812, %v4119
      %v4597 = vadd.f32 %v3813, %v4124
      %v4598 = vadd.f32 %v3814, %v4129
      %v4599 = vadd.f32 %v3815, %v4134
      %v4600 = vadd.f32 %v3816, %v4139
      %v4601 = vadd.f32 %v3817, %v4144
      %v4602 = vadd.f32 %v3818, %v4149
      %v4603 = vadd.f32 %v3819, %v4154
      %v4604 = vadd.f32 %v3820, %v4159
      %v4605 = vadd.f32 %v3821, %v4164
      %v4606 = vadd.f32 %v3822, %v4169
      %v4607 = vadd.f32 %v3823, %v4174
      %v4608 = vadd.f32 %v3824, %v4179
      %v4609 = vadd.f32 %v3825, %v4184
      %v4610 = vadd.f32 %v3826, %v4189
      %v4611 = vadd.f32 %v3827, %v4194
      %v4612 = vadd.f32 %v3828, %v4199
      %v4613 = vadd.f32 %v3829, %v4204
      %v4614 = vadd.f32 %v3830, %v4209
      %v4615 = vadd.f32 %v3831, %v4214
      %v4616 = vadd.f32 %v3832, %v4219
      %v4617 = vadd.f32 %v3833, %v4224
      %v4618 = vadd.f32 %v3834, %v4229
      %v4619 = vadd.f32 %v3835, %v4234
      %v4620 = vadd.f32 %v3836, %v4239
      %v4621 = vadd.f32 %v3837, %v4244
      %v4622 = vadd.f32 %v3838, %v4249
      %v4623 = vadd.f32 %v3839, %v4254
      %v4624 = vadd.f32 %v3840, %v4259
      %v4625 = vadd.f32 %v3841, %v4264
      %v4626 = vadd.f32 %v3842, %v4269
      %v4627 = vadd.f32 %v3843, %v4274
      %v4628 = vadd.f32 %v3844, %v4279
      %v4629 = vadd.f32 %v3845, %v4284
      %v4630 = vadd.f32 %v3846, %v4289
      %v4631 = vadd.f32 %v3847, %v4294
      %v4632 = vadd.f32 %v3848, %v4299
      %v4633 = vadd.f32 %v3849, %v4304
      %v4634 = vadd.f32 %v3850, %v4309
      %v4635 = vadd.f32 %v3851, %v4314
      %v4636 = vadd.f32 %v3852, %v4319
      %v4637 = vadd.f32 %v3853, %v4324
      %v4638 = vadd.f32 %v3854, %v4329
      %v4639 = vadd.f32 %v3855, %v4334
      %v4640 = vadd.f32 %v3856, %v4339
      %v4641 = vadd.f32 %v3857, %v4344
      %v4642 = vadd.f32 %v3858, %v4349
      %v4643 = vadd.f32 %v3859, %v4354
      %v4644 = vadd.f32 %v3860, %v4359
      %v4645 = vadd.f32 %v3861, %v4364
      %v4646 = vadd.f32 %v3862, %v4369
      %v4647 = vadd.f32 %v3863, %v4374
      %v4648 = vadd.f32 %v3864, %v4379
      %v4649 = vadd.f32 %v3865, %v4384
      %v4650 = vadd.f32 %v3866, %v4389
      %v4651 = vadd.f32 %v3867, %v4394
      %v4652 = vadd.f32 %v3868, %v4399
      %v4653 = vadd.f32 %v3869, %v4404
      %v4654 = vadd.f32 %v3870, %v4409
      %v4655 = vadd.f32 %v3871, %v4414
      %v4656 = vadd.f32 %v3872, %v4419
      %v4657 = vadd.f32 %v3873, %v4424
      %v4658 = vadd.f32 %v3874, %v4429
      %v4659 = vadd.f32 %v3875, %v4434
      %v4660 = vadd.f32 %v3876, %v4439
      %v4661 = vadd.f32 %v3877, %v4444
      %v4662 = vadd.f32 %v3878, %v4449
      %v4663 = vadd.f32 %v3879, %v4454
      %v4664 = vadd.f32 %v3880, %v4459
      %v4665 = vadd.f32 %v3881, %v4464
      %v4666 = vadd.f32 %v3882, %v4469
      %v4667 = vadd.f32 %v3883, %v4474
      %v4668 = vadd.f32 %v3884, %v4479
      %v4669 = vadd.f32 %v3885, %v4484
      %v4670 = vadd.f32 %v3886, %v4489
      %v4671 = vadd.f32 %v3887, %v4494
      %v4672 = vadd.f32 %v3888, %v4499
      %v4673 = vadd.f32 %v3889, %v4504
      %v4674 = vadd.f32 %v3890, %v4509
      %v4675 = vadd.f32 %v3891, %v4514
      %v4676 = vadd.f32 %v3892, %v4519
      %v4677 = vadd.f32 %v3893, %v4524
      %v4678 = vadd.f32 %v3894, %v4529
      %v4679 = vadd.f32 %v3895, %v4534
      %v4680 = vadd.f32 %v3896, %v4539
      %v4681 = vadd.f32 %v3897, %v4544
      %v4682 = vadd.f32 %v3898, %v4549
      %v4683 = vadd.f32 %v3899, %v4554
      %v4684 = vadd.f32 %v3900, %v4559
      %v4685 = vadd.f32 %v3901, %v4564
      %v4686 = vadd.f32 %v3902, %v4569
      %v4687 = vadd.f32 %v3903, %v4574
      %v4688 = vmax.f32 %v4576, 0.0
      %v4689 = vmax.f32 %v4577, 0.0
      %v4690 = vmax.f32 %v4578, 0.0
      %v4691 = vmax.f32 %v4579, 0.0
      %v4692 = vmax.f32 %v4580, 0.0
      %v4693 = vmax.f32 %v4581, 0.0
      %v4694 = vmax.f32 %v4582, 0.0
      %v4695 = vmax.f32 %v4583, 0.0
      %v4696 = vmax.f32 %v4584, 0.0
      %v4697 = vmax.f32 %v4585, 0.0
      %v4698 = vmax.f32 %v4586, 0.0
      %v4699 = vmax.f32 %v4587, 0.0
      %v4700 = vmax.f32 %v4588, 0.0
      %v4701 = vmax.f32 %v4589, 0.0
      %v4702 = vmax.f32 %v4590, 0.0
      %v4703 = vmax.f32 %v4591, 0.0
      %v4704 = vmax.f32 %v4592, 0.0
      %v4705 = vmax.f32 %v4593, 0.0
      %v4706 = vmax.f32 %v4594, 0.0
      %v4707 = vmax.f32 %v4595, 0.0
      %v4708 = vmax.f32 %v4596, 0.0
      %v4709 = vmax.f32 %v4597, 0.0
      %v4710 = vmax.f32 %v4598, 0.0
      %v4711 = vmax.f32 %v4599, 0.0
      %v4712 = vmax.f32 %v4600, 0.0
      %v4713 = vmax.f32 %v4601, 0.0
      %v4714 = vmax.f32 %v4602, 0.0
      %v4715 = vmax.f32 %v4603, 0.0
      %v4716 = vmax.f32 %v4604, 0.0
      %v4717 = vmax.f32 %v4605, 0.0
      %v4718 = vmax.f32 %v4606, 0.0
      %v4719 = vmax.f32 %v4607, 0.0
      %v4720 = vmax.f32 %v4608, 0.0
      %v4721 = vmax.f32 %v4609, 0.0
      %v4722 = vmax.f32 %v4610, 0.0
      %v4723 = vmax.f32 %v4611, 0.0
      %v4724 = vmax.f32 %v4612, 0.0
      %v4725 = vmax.f32 %v4613, 0.0
      %v4726 = vmax.f32 %v4614, 0.0
      %v4727 = vmax.f32 %v4615, 0.0
      %v4728 = vmax.f32 %v4616, 0.0
      %v4729 = vmax.f32 %v4617, 0.0
      %v4730 = vmax.f32 %v4618, 0.0
      %v4731 = vmax.f32 %v4619, 0.0
      %v4732 = vmax.f32 %v4620, 0.0
      %v4733 = vmax.f32 %v4621, 0.0
      %v4734 = vmax.f32 %v4622, 0.0
      %v4735 = vmax.f32 %v4623, 0.0
      %v4736 = vmax.f32 %v4624, 0.0
      %v4737 = vmax.f32 %v4625, 0.0
      %v4738 = vmax.f32 %v4626, 0.0
      %v4739 = vmax.f32 %v4627, 0.0
      %v4740 = vmax.f32 %v4628, 0.0
      %v4741 = vmax.f32 %v4629, 0.0
      %v4742 = vmax.f32 %v4630, 0.0
      %v4743 = vmax.f32 %v4631, 0.0
      %v4744 = vmax.f32 %v4632, 0.0
      %v4745 = vmax.f32 %v4633, 0.0
      %v4746 = vmax.f32 %v4634, 0.0
      %v4747 = vmax.f32 %v4635, 0.0
      %v4748 = vmax.f32 %v4636, 0.0
      %v4749 = vmax.f32 %v4637, 0.0
      %v4750 = vmax.f32 %v4638, 0.0
      %v4751 = vmax.f32 %v4639, 0.0
      %v4752 = vmax.f32 %v4640, 0.0
      %v4753 = vmax.f32 %v4641, 0.0
      %v4754 = vmax.f32 %v4642, 0.0
      %v4755 = vmax.f32 %v4643, 0.0
      %v4756 = vmax.f32 %v4644, 0.0
      %v4757 = vmax.f32 %v4645, 0.0
      %v4758 = vmax.f32 %v4646, 0.0
      %v4759 = vmax.f32 %v4647, 0.0
      %v4760 = vmax.f32 %v4648, 0.0
      %v4761 = vmax.f32 %v4649, 0.0
      %v4762 = vmax.f32 %v4650, 0.0
      %v4763 = vmax.f32 %v4651, 0.0
      %v4764 = vmax.f32 %v4652, 0.0
      %v4765 = vmax.f32 %v4653, 0.0
      %v4766 = vmax.f32 %v4654, 0.0
      %v4767 = vmax.f32 %v4655, 0.0
      %v4768 = vmax.f32 %v4656, 0.0
      %v4769 = vmax.f32 %v4657, 0.0
      %v4770 = vmax.f32 %v4658, 0.0
      %v4771 = vmax.f32 %v4659, 0.0
      %v4772 = vmax.f32 %v4660, 0.0
      %v4773 = vmax.f32 %v4661, 0.0
      %v4774 = vmax.f32 %v4662, 0.0
      %v4775 = vmax.f32 %v4663, 0.0
      %v4776 = vmax.f32 %v4664, 0.0
      %v4777 = vmax.f32 %v4665, 0.0
      %v4778 = vmax.f32 %v4666, 0.0
      %v4779 = vmax.f32 %v4667, 0.0
      %v4780 = vmax.f32 %v4668, 0.0
      %v4781 = vmax.f32 %v4669, 0.0
      %v4782 = vmax.f32 %v4670, 0.0
      %v4783 = vmax.f32 %v4671, 0.0
      %v4784 = vmax.f32 %v4672, 0.0
      %v4785 = vmax.f32 %v4673, 0.0
      %v4786 = vmax.f32 %v4674, 0.0
      %v4787 = vmax.f32 %v4675, 0.0
      %v4788 = vmax.f32 %v4676, 0.0
      %v4789 = vmax.f32 %v4677, 0.0
      %v4790 = vmax.f32 %v4678, 0.0
      %v4791 = vmax.f32 %v4679, 0.0
      %v4792 = vmax.f32 %v4680, 0.0
      %v4793 = vmax.f32 %v4681, 0.0
      %v4794 = vmax.f32 %v4682, 0.0
      %v4795 = vmax.f32 %v4683, 0.0
      %v4796 = vmax.f32 %v4684, 0.0
      %v4797 = vmax.f32 %v4685, 0.0
      %v4798 = vmax.f32 %v4686, 0.0
      %v4799 = vmax.f32 %v4687, 0.0
      %v4800 = vld [vmem:[%s4] sm:$0xff]
      %v4801 = vld [vmem:[%s4 + $0x8] sm:$0x3f]
      %v4804 = vcombine.high %v4800, %v4800
      %v4806 = vunpack.c.l.s4 1983009808
      %v4807 = vunpack.c.0.s8 %v4806
      %v4808 = vlaneseq
      %v4809 = vshrl.u32 %v4808, 7
      %v4810 = vsub.s32 %v4807, %v4809
      %v4811 = vrot.slane %v4800, %v4810
      %v4813 = vunpack.c.l.s4 1983009808
      %v4814 = vunpack.c.0.s8 %v4813
      %v4815 = vlaneseq
      %v4816 = vshrl.u32 %v4815, 7
      %v4817 = vsub.s32 %v4814, %v4816
      %v4818 = vrot.slane %v4804, %v4817
      %v4819 = vcombine.high %v4811, %v4811
      %v4820 = vcombine.high %v4818, %v4818
      %v4821 = vcombine.high %v4801, %v4801
      %v4823 = vunpack.c.l.s4 1983009808
      %v4824 = vunpack.c.0.s8 %v4823
      %v4825 = vlaneseq
      %v4826 = vshrl.u32 %v4825, 7
      %v4827 = vsub.s32 %v4824, %v4826
      %v4828 = vrot.slane %v4801, %v4827
      %v4830 = vunpack.c.l.s4 1983009808
      %v4831 = vunpack.c.0.s8 %v4830
      %v4832 = vlaneseq
      %v4833 = vshrl.u32 %v4832, 7
      %v4834 = vsub.s32 %v4831, %v4833
      %v4835 = vrot.slane %v4821, %v4834
      %v4836 = vcombine.high %v4828, %v4828
      %4844 = vmatprep.subr.mxu0 0.0
      %4845 = vmatpush1.msra.mxu0 %v4688
      %4846 = vmatprep.subr.mxu0 0.0
      %4847 = vmatpush1.msra.mxu0 %v4689
      %4848 = vmatprep.subr.mxu0 0.0
      %4849 = vmatpush1.msra.mxu0 %v4690
      %4850 = vmatprep.subr.mxu0 0.0
      %4851 = vmatpush1.msra.mxu0 %v4691
      %4852 = vmatprep.subr.mxu0 0.0
      %4853 = vmatpush1.msra.mxu0 %v4692
      %4854 = vmatprep.subr.mxu0 0.0
      %4855 = vmatpush1.msra.mxu0 %v4693
      %4856 = vmatprep.subr.mxu0 0.0
      %4857 = vmatpush1.msra.mxu0 %v4694
      %4858 = vmatprep.subr.mxu0 0.0
      %4859 = vmatpush1.msra.mxu0 %v4695
      %4860 = vmatprep.subr.mxu0 0.0
      %4861 = vmatpush1.msra.mxu0 %v4696
      %4862 = vmatprep.subr.mxu0 0.0
      %4863 = vmatpush1.msra.mxu0 %v4697
      %4864 = vmatprep.subr.mxu0 0.0
      %4865 = vmatpush1.msra.mxu0 %v4698
      %4866 = vmatprep.subr.mxu0 0.0
      %4867 = vmatpush1.msra.mxu0 %v4699
      %4868 = vmatprep.subr.mxu0 0.0
      %4869 = vmatpush1.msra.mxu0 %v4700
      %4870 = vmatprep.subr.mxu0 0.0
      %4871 = vmatpush1.msra.mxu0 %v4701
      %4872 = vmatprep.subr.mxu0 0.0
      %4873 = vmatpush1.msra.mxu0 %v4702
      %4874 = vmatprep.subr.mxu0 0.0
      %4875 = vmatpush1.msra.mxu0 %v4703
      %4876 = vmatprep.subr.mxu0 0.0
      %4877 = vmatpush1.msra.mxu0 %v4704
      %4878 = vmatprep.subr.mxu0 0.0
      %4879 = vmatpush1.msra.mxu0 %v4705
      %4880 = vmatprep.subr.mxu0 0.0
      %4881 = vmatpush1.msra.mxu0 %v4706
      %4882 = vmatprep.subr.mxu0 0.0
      %4883 = vmatpush1.msra.mxu0 %v4707
      %4884 = vmatprep.subr.mxu0 0.0
      %4885 = vmatpush1.msra.mxu0 %v4708
      %4886 = vmatprep.subr.mxu0 0.0
      %4887 = vmatpush1.msra.mxu0 %v4709
      %4888 = vmatprep.subr.mxu0 0.0
      %4889 = vmatpush1.msra.mxu0 %v4710
      %4890 = vmatprep.subr.mxu0 0.0
      %4891 = vmatpush1.msra.mxu0 %v4711
      %4892 = vmatprep.subr.mxu0 0.0
      %4893 = vmatpush1.msra.mxu0 %v4712
      %4894 = vmatprep.subr.mxu0 0.0
      %4895 = vmatpush1.msra.mxu0 %v4713
      %4896 = vmatprep.subr.mxu0 0.0
      %4897 = vmatpush1.msra.mxu0 %v4714
      %4898 = vmatprep.subr.mxu0 0.0
      %4899 = vmatpush1.msra.mxu0 %v4715
      %4900 = vmatprep.subr.mxu0 0.0
      %4901 = vmatpush1.msra.mxu0 %v4716
      %4902 = vmatprep.subr.mxu0 0.0
      %4903 = vmatpush1.msra.mxu0 %v4717
      %4904 = vmatprep.subr.mxu0 0.0
      %4905 = vmatpush1.msra.mxu0 %v4718
      %4906 = vmatprep.subr.mxu0 0.0
      %4907 = vmatpush1.msra.mxu0 %v4719
      %4908 = vmatprep.mubr.f32.mxu0 %v4819
      %4909 = vmatmul.mubr.f32.gmra.mrb[0].mxu0 %v4811
      %v4910 = vpop.f32.mrb[0].mxu0
      %v4911 = vadd.f32 0.0, %v4910
      %v4912 = vpop.f32.mrb[0].mxu0
      %4913 = vdwg.mxu0
      %4914 = vmatprep.subr.mxu0 0.0
      %4915 = vmatpush1.msra.mxu0 %v4720
      %4916 = vmatprep.subr.mxu0 0.0
      %4917 = vmatpush1.msra.mxu0 %v4721
      %4918 = vmatprep.subr.mxu0 0.0
      %4919 = vmatpush1.msra.mxu0 %v4722
      %4920 = vmatprep.subr.mxu0 0.0
      %4921 = vmatpush1.msra.mxu0 %v4723
      %4922 = vmatprep.subr.mxu0 0.0
      %4923 = vmatpush1.msra.mxu0 %v4724
      %4924 = vmatprep.subr.mxu0 0.0
      %4925 = vmatpush1.msra.mxu0 %v4725
      %4926 = vmatprep.subr.mxu0 0.0
      %4927 = vmatpush1.msra.mxu0 %v4726
      %4928 = vmatprep.subr.mxu0 0.0
      %4929 = vmatpush1.msra.mxu0 %v4727
      %4930 = vmatprep.subr.mxu0 0.0
      %4931 = vmatpush1.msra.mxu0 %v4728
      %4932 = vmatprep.subr.mxu0 0.0
      %4933 = vmatpush1.msra.mxu0 %v4729
      %4934 = vmatprep.subr.mxu0 0.0
      %4935 = vmatpush1.msra.mxu0 %v4730
      %4936 = vmatprep.subr.mxu0 0.0
      %4937 = vmatpush1.msra.mxu0 %v4731
      %4938 = vmatprep.subr.mxu0 0.0
      %4939 = vmatpush1.msra.mxu0 %v4732
      %4940 = vmatprep.subr.mxu0 0.0
      %4941 = vmatpush1.msra.mxu0 %v4733
      %4942 = vmatprep.subr.mxu0 0.0
      %4943 = vmatpush1.msra.mxu0 %v4734
      %4944 = vmatprep.subr.mxu0 0.0
      %4945 = vmatpush1.msra.mxu0 %v4735
      %4946 = vmatprep.subr.mxu0 0.0
      %4947 = vmatpush1.msra.mxu0 %v4736
      %4948 = vmatprep.subr.mxu0 0.0
      %4949 = vmatpush1.msra.mxu0 %v4737
      %4950 = vmatprep.subr.mxu0 0.0
      %4951 = vmatpush1.msra.mxu0 %v4738
      %4952 = vmatprep.subr.mxu0 0.0
      %4953 = vmatpush1.msra.mxu0 %v4739
      %4954 = vmatprep.subr.mxu0 0.0
      %4955 = vmatpush1.msra.mxu0 %v4740
      %4956 = vmatprep.subr.mxu0 0.0
      %4957 = vmatpush1.msra.mxu0 %v4741
      %4958 = vmatprep.subr.mxu0 0.0
      %4959 = vmatpush1.msra.mxu0 %v4742
      %4960 = vmatprep.subr.mxu0 0.0
      %4961 = vmatpush1.msra.mxu0 %v4743
      %4962 = vmatprep.subr.mxu0 0.0
      %4963 = vmatpush1.msra.mxu0 %v4744
      %4964 = vmatprep.subr.mxu0 0.0
      %4965 = vmatpush1.msra.mxu0 %v4745
      %4966 = vmatprep.subr.mxu0 0.0
      %4967 = vmatpush1.msra.mxu0 %v4746
      %4968 = vmatprep.subr.mxu0 0.0
      %4969 = vmatpush1.msra.mxu0 %v4747
      %4970 = vmatprep.subr.mxu0 0.0
      %4971 = vmatpush1.msra.mxu0 %v4748
      %4972 = vmatprep.subr.mxu0 0.0
      %4973 = vmatpush1.msra.mxu0 %v4749
      %4974 = vmatprep.subr.mxu0 0.0
      %4975 = vmatpush1.msra.mxu0 %v4750
      %4976 = vmatprep.subr.mxu0 0.0
      %4977 = vmatpush1.msra.mxu0 %v4751
      %4978 = vmatprep.mubr.f32.mxu0 %v4820
      %4979 = vmatmul.mubr.f32.gmra.mrb[0].mxu0 %v4818
      %v4980 = vpop.f32.mrb[0].mxu0
      %v4981 = vadd.f32 %v4911, %v4980
      %v4982 = vpop.f32.mrb[0].mxu0
      %4983 = vdwg.mxu0
      %4984 = vmatprep.subr.mxu0 0.0
      %4985 = vmatpush1.msra.mxu0 %v4752
      %4986 = vmatprep.subr.mxu0 0.0
      %4987 = vmatpush1.msra.mxu0 %v4753
      %4988 = vmatprep.subr.mxu0 0.0
      %4989 = vmatpush1.msra.mxu0 %v4754
      %4990 = vmatprep.subr.mxu0 0.0
      %4991 = vmatpush1.msra.mxu0 %v4755
      %4992 = vmatprep.subr.mxu0 0.0
      %4993 = vmatpush1.msra.mxu0 %v4756
      %4994 = vmatprep.subr.mxu0 0.0
      %4995 = vmatpush1.msra.mxu0 %v4757
      %4996 = vmatprep.subr.mxu0 0.0
      %4997 = vmatpush1.msra.mxu0 %v4758
      %4998 = vmatprep.subr.mxu0 0.0
      %4999 = vmatpush1.msra.mxu0 %v4759
      %5000 = vmatprep.subr.mxu0 0.0
      %5001 = vmatpush1.msra.mxu0 %v4760
      %5002 = vmatprep.subr.mxu0 0.0
      %5003 = vmatpush1.msra.mxu0 %v4761
      %5004 = vmatprep.subr.mxu0 0.0
      %5005 = vmatpush1.msra.mxu0 %v4762
      %5006 = vmatprep.subr.mxu0 0.0
      %5007 = vmatpush1.msra.mxu0 %v4763
      %5008 = vmatprep.subr.mxu0 0.0
      %5009 = vmatpush1.msra.mxu0 %v4764
      %5010 = vmatprep.subr.mxu0 0.0
      %5011 = vmatpush1.msra.mxu0 %v4765
      %5012 = vmatprep.subr.mxu0 0.0
      %5013 = vmatpush1.msra.mxu0 %v4766
      %5014 = vmatprep.subr.mxu0 0.0
      %5015 = vmatpush1.msra.mxu0 %v4767
      %5016 = vmatprep.subr.mxu0 0.0
      %5017 = vmatpush1.msra.mxu0 %v4768
      %5018 = vmatprep.subr.mxu0 0.0
      %5019 = vmatpush1.msra.mxu0 %v4769
      %5020 = vmatprep.subr.mxu0 0.0
      %5021 = vmatpush1.msra.mxu0 %v4770
      %5022 = vmatprep.subr.mxu0 0.0
      %5023 = vmatpush1.msra.mxu0 %v4771
      %5024 = vmatprep.subr.mxu0 0.0
      %5025 = vmatpush1.msra.mxu0 %v4772
      %5026 = vmatprep.subr.mxu0 0.0
      %5027 = vmatpush1.msra.mxu0 %v4773
      %5028 = vmatprep.subr.mxu0 0.0
      %5029 = vmatpush1.msra.mxu0 %v4774
      %5030 = vmatprep.subr.mxu0 0.0
      %5031 = vmatpush1.msra.mxu0 %v4775
      %5032 = vmatprep.subr.mxu0 0.0
      %5033 = vmatpush1.msra.mxu0 %v4776
      %5034 = vmatprep.subr.mxu0 0.0
      %5035 = vmatpush1.msra.mxu0 %v4777
      %5036 = vmatprep.subr.mxu0 0.0
      %5037 = vmatpush1.msra.mxu0 %v4778
      %5038 = vmatprep.subr.mxu0 0.0
      %5039 = vmatpush1.msra.mxu0 %v4779
      %5040 = vmatprep.subr.mxu0 0.0
      %5041 = vmatpush1.msra.mxu0 %v4780
      %5042 = vmatprep.subr.mxu0 0.0
      %5043 = vmatpush1.msra.mxu0 %v4781
      %5044 = vmatprep.subr.mxu0 0.0
      %5045 = vmatpush1.msra.mxu0 %v4782
      %5046 = vmatprep.subr.mxu0 0.0
      %5047 = vmatpush1.msra.mxu0 %v4783
      %5048 = vmatprep.mubr.f32.mxu0 %v4836
      %5049 = vmatmul.mubr.f32.gmra.mrb[0].mxu0 %v4828
      %v5050 = vpop.f32.mrb[0].mxu0
      %v5051 = vadd.f32 %v4981, %v5050
      %v5052 = vpop.f32.mrb[0].mxu0
      %5053 = vdwg.mxu0
      %5054 = vmatprep.subr.mxu0 0.0
      %5055 = vmatpush1.msra.mxu0 %v4784
      %5056 = vmatprep.subr.mxu0 0.0
      %5057 = vmatpush1.msra.mxu0 %v4785
      %5058 = vmatprep.subr.mxu0 0.0
      %5059 = vmatpush1.msra.mxu0 %v4786
      %5060 = vmatprep.subr.mxu0 0.0
      %5061 = vmatpush1.msra.mxu0 %v4787
      %5062 = vmatprep.subr.mxu0 0.0
      %5063 = vmatpush1.msra.mxu0 %v4788
      %5064 = vmatprep.subr.mxu0 0.0
      %5065 = vmatpush1.msra.mxu0 %v4789
      %5066 = vmatprep.subr.mxu0 0.0
      %5067 = vmatpush1.msra.mxu0 %v4790
      %5068 = vmatprep.subr.mxu0 0.0
      %5069 = vmatpush1.msra.mxu0 %v4791
      %5070 = vmatprep.subr.mxu0 0.0
      %5071 = vmatpush1.msra.mxu0 %v4792
      %5072 = vmatprep.subr.mxu0 0.0
      %5073 = vmatpush1.msra.mxu0 %v4793
      %5074 = vmatprep.subr.mxu0 0.0
      %5075 = vmatpush1.msra.mxu0 %v4794
      %5076 = vmatprep.subr.mxu0 0.0
      %5077 = vmatpush1.msra.mxu0 %v4795
      %5078 = vmatprep.subr.mxu0 0.0
      %5079 = vmatpush1.msra.mxu0 %v4796
      %5080 = vmatprep.subr.mxu0 0.0
      %5081 = vmatpush1.msra.mxu0 %v4797
      %5082 = vmatprep.subr.mxu0 0.0
      %5083 = vmatpush1.msra.mxu0 %v4798
      %5084 = vmatprep.subr.mxu0 0.0
      %5085 = vmatpush1.msra.mxu0 %v4799
      %5086 = vmatprep.subr.mxu0 0.0
      %5087 = vmatpush1.msra.mxu0 0.0
      %5088 = vmatprep.subr.mxu0 0.0
      %5089 = vmatpush1.msra.mxu0 0.0
      %5090 = vmatprep.subr.mxu0 0.0
      %5091 = vmatpush1.msra.mxu0 0.0
      %5092 = vmatprep.subr.mxu0 0.0
      %5093 = vmatpush1.msra.mxu0 0.0
      %5094 = vmatprep.subr.mxu0 0.0
      %5095 = vmatpush1.msra.mxu0 0.0
      %5096 = vmatprep.subr.mxu0 0.0
      %5097 = vmatpush1.msra.mxu0 0.0
      %5098 = vmatprep.subr.mxu0 0.0
      %5099 = vmatpush1.msra.mxu0 0.0
      %5100 = vmatprep.subr.mxu0 0.0
      %5101 = vmatpush1.msra.mxu0 0.0
      %5102 = vmatprep.subr.mxu0 0.0
      %5103 = vmatpush1.msra.mxu0 0.0
      %5104 = vmatprep.subr.mxu0 0.0
      %5105 = vmatpush1.msra.mxu0 0.0
      %5106 = vmatprep.subr.mxu0 0.0
      %5107 = vmatpush1.msra.mxu0 0.0
      %5108 = vmatprep.subr.mxu0 0.0
      %5109 = vmatpush1.msra.mxu0 0.0
      %5110 = vmatprep.subr.mxu0 0.0
      %5111 = vmatpush1.msra.mxu0 0.0
      %5112 = vmatprep.subr.mxu0 0.0
      %5113 = vmatpush1.msra.mxu0 0.0
      %5114 = vmatprep.subr.mxu0 0.0
      %5115 = vmatpush1.msra.mxu0 0.0
      %5116 = vmatprep.subr.mxu0 0.0
      %5117 = vmatpush1.msra.mxu0 0.0
      %5118 = vmatprep.mubr.f32.mxu0 0.0
      %5119 = vmatmul.mubr.f32.gmra.mrb[0].mxu0 %v4835
      %v5120 = vpop.f32.mrb[0].mxu0
      %v5121 = vadd.f32 %v5051, %v5120
      %v5122 = vpop.f32.mrb[0].mxu0
      %5123 = vdwg.mxu0
      %vm5124 = vcmask 910336
      %v5125 = vsel %vm5124, %v5121, 0.0
      %5126 = vadd.xlane.f32.xlu0 %v5125
      %v5127 = vpop.xlane.xlu0 %5126
      %v5128 = vld [vmem:[%s5] sm:$0x3]
      %v5129 = vadd.f32 %v5127, %v5128
      %vm5130 = vcmask 1024
      %5131 = vst.msk [vmem:[%s251] sm:$0x3] %vm5130, %v5129
      %p5132 = scmp.lt.s32.totalorder %s17, 1
      %s5133 = scalar_select %p5132, %s17, 1
      %s5134 = smul.addr %s5133, 2
      %s5135 = scalar_lea.vmem %s6, %s5134
      // Predicated region
      $region45: #{forward.1} parent=43 // pred_check
        %p5136 = pneg %p166
      $region46: #{forward.1} parent=43 // pred_check_branch
        %5138 = sbr.rel (%p5136) target = $region48
      $region47: #{forward.1} parent=43 // pred_region
        _
      $region48: #{forward.1} parent=43 // pred_fallthru
        _
    $region44: #{forward.1} parent=5 // pred_fallthru
      _
    %p5139 = scmp.le.s32.totalorder 2, %s12
    // Predicated region
    $region49: #{forward.1} parent=5 // pred_check
      %p5140 = pneg %p5139
    $region50: #{forward.1} parent=5 // pred_check_branch
      %5142 = sbr.rel (%p5140) target = $region52
    $region51: #{forward.1} parent=5 // pred_region
      %s5143 = ssub.s32 %s12, 2
      // Predicated region
      $region53: #{forward.1} parent=51 // pred_check
        %p5144 = pneg %p172
      $region54: #{forward.1} parent=51 // pred_check_branch
        %5146 = sbr.rel (%p5144) target = $region56
      $region55: #{forward.1} parent=51 // pred_region
        %p5147 = scmp.lt.s32.totalorder %s18, 1
        %s5148 = scalar_select %p5147, %s18, 1
        %s5149 = smul.addr %s5148, 2
        %s5150 = scalar_lea.vmem %s6, %s5149
      $region56: #{forward.1} parent=51 // pred_fallthru
        _
    $region52: #{forward.1} parent=5 // pred_fallthru
      _
  $region6: #{forward.1} parent=0 // loop_footer
    %s16 = sadd.s32 1, %s12
  $region7: #{forward.1} parent=0 // loop_footer_branch
    %11 = sbr.rel target = $region3
  $region8: #{forward.1} parent=0 // loop_exit
    _

</llo_original>
